<compile_context>
chip_gen: v6e
topology: v6e:2x2x1
jax: 0.10.0
libtpu: 0.0.40
codegen_flags: <defaults>
</compile_context>

<pallas_src>
import functools

import jax
import jax.numpy as jnp
from jax import lax
from jax.experimental import pallas as pl
from jax.experimental.pallas import tpu as pltpu


def _silu(a):
    # SiLU via EUP exp + approximate reciprocal (keeps the divide off the VALU).
    # The exp argument is clamped so large-negative inputs never produce inf.
    e = jnp.exp(jnp.minimum(-a, 60.0))
    return a * pl.reciprocal(1.0 + e, approx=True)


# ----------------------------------------------------------------------------
# Pallas kernel: one fused Mamba residual block, one (batch, seq-chunk) tile.
# ----------------------------------------------------------------------------
def mamba_block_kernel(
    x_ref,        # (1, TL, d_model) f32   input tokens for this chunk
    rmsw_ref,     # (1, d_model)     f32   RMSNorm weight
    win_ref,      # (d_model, 2*d_inner) bf16  in_proj [x | z]
    convw_ref,    # (d_conv, d_inner) f32  depthwise conv taps
    convb_ref,    # (1, d_inner)     f32   conv bias
    wx_ref,       # (d_inner, nx_pad) bf16 x_proj [dt | B | C] (zero padded)
    wdt_ref,      # (dt_rank, d_inner) bf16 dt_proj weight
    bdt_ref,      # (1, d_inner)     f32   dt_proj bias
    at_ref,       # (d_state, d_inner) f32 A transposed (negative)
    d_ref,        # (1, d_inner)     f32   D (skip)
    wout_ref,     # (d_inner, d_model) bf16 out_proj
    out_ref,      # (1, TL, d_model) f32
    # --- VMEM scratch (persists across the sequence-chunk grid axis) ---
    conv_ref,     # (TL + hist, d_inner) conv input + carried history
    dlt_ref,      # (TL, d_inner)  delta
    dxc_ref,      # (TL, d_inner)  delta * xc
    bm_ref,       # (TL, d_state)  B
    cm_ref,       # (TL, d_state)  C
    ys_ref,       # (TL, d_inner)  scan output y (incl. D skip)
    h_ref,        # (d_state, d_inner) carried SSM state
    *, d_inner, d_state, dt_rank, d_conv, hist, sub,
):
    TL = x_ref.shape[1]
    n_sub = TL // sub
    l = pl.program_id(1)

    # New batch element: reset SSM state and causal-conv history (zero pad).
    @pl.when(l == 0)
    def _():
        h_ref[...] = jnp.zeros_like(h_ref)
        conv_ref[0:hist, :] = jnp.zeros((hist, d_inner), jnp.float32)

    x = x_ref[0]                                           # (TL, d_model) f32

    # ---- RMSNorm ------------------------------------------------------------
    ms = jnp.mean(x * x, axis=-1, keepdims=True)
    xn = x * lax.rsqrt(ms + 1e-5) * rmsw_ref[...]

    # ---- fused in_proj (x branch | z gate): bf16 operands, f32 accumulate ---
    xz = jnp.dot(xn.astype(jnp.bfloat16), win_ref[...],
                 preferred_element_type=jnp.float32)       # (TL, 2*d_inner)
    xb = xz[:, 0:d_inner]
    z = xz[:, d_inner:2 * d_inner]

    # ---- causal depthwise conv1d (history lives in rows [base, hist)) -------
    base = hist - (d_conv - 1)
    conv_ref[hist:hist + TL, :] = xb                       # sublane-aligned store
    acc = conv_ref[base:base + TL, :] * convw_ref[0:1, :]
    for k in range(1, d_conv):
        acc = acc + conv_ref[base + k:base + k + TL, :] * convw_ref[k:k + 1, :]
    acc = acc + convb_ref[...]
    # carry the last (d_conv - 1) pre-conv timesteps to the next chunk
    conv_ref[base:hist, :] = conv_ref[base + TL:hist + TL, :]
    xc = _silu(acc)

    # ---- fused x_proj -> (dt | B | C), bf16 operands ------------------------
    xp = jnp.dot(xc.astype(jnp.bfloat16), wx_ref[...],
                 preferred_element_type=jnp.float32)       # (TL, nx_pad)
    dt_in = xp[:, 0:dt_rank]
    Bm = xp[:, dt_rank:dt_rank + d_state]
    Cm = xp[:, dt_rank + d_state:dt_rank + 2 * d_state]

    if dt_rank == 1:   # rank-1: plain broadcast, no degenerate-K matmul
        dl = dt_in * wdt_ref[...].astype(jnp.float32) + bdt_ref[...]
    else:
        dl = jnp.dot(dt_in.astype(jnp.bfloat16), wdt_ref[...],
                     preferred_element_type=jnp.float32) + bdt_ref[...]
    # stable softplus
    delta = jnp.maximum(dl, 0.0) + jnp.log(1.0 + jnp.exp(-jnp.abs(dl)))

    # ---- stage scan inputs in VMEM (all O(TL*d_inner), no (TL,S,I) buffers) -
    dlt_ref[...] = delta
    dxc_ref[...] = delta * xc
    bm_ref[...] = Bm
    cm_ref[...] = Cm
    ys_ref[...] = xc * d_ref[...]                          # D-skip term

    a_t = at_ref[...]                                      # (d_state, d_inner)

    # ---- recurrence in 8-step sub-blocks; C contraction folded into the step,
    #      so h states are never stored; static unroll gives the scheduler ILP.
    def sub_block(sb, h):
        t0 = pl.multiple_of(sb * sub, sub)
        d_blk = dlt_ref[pl.ds(t0, sub), :]                 # (sub, d_inner)
        dx_blk = dxc_ref[pl.ds(t0, sub), :]
        b_blk = bm_ref[pl.ds(t0, sub), :]                  # (sub, d_state)
        c_blk = cm_ref[pl.ds(t0, sub), :]
        da_blk = jnp.exp(d_blk[:, None, :] * a_t[None, :, :])   # (sub,S,I)
        dbx_blk = dx_blk[:, None, :] * b_blk[:, :, None]         # (sub,S,I)
        cb = c_blk[:, :, None]                                   # (sub,S,1)
        y_rows = []
        for k in range(sub):                               # static unroll
            h = da_blk[k] * h + dbx_blk[k]
            y_rows.append(jnp.sum(h * cb[k], axis=0, keepdims=True))
        y_blk = jnp.concatenate(y_rows, axis=0)            # (sub, d_inner)
        ys_ref[pl.ds(t0, sub), :] = ys_ref[pl.ds(t0, sub), :] + y_blk
        return h

    h_ref[...] = lax.fori_loop(0, n_sub, sub_block, h_ref[...])

    # ---- gate, out_proj, residual -------------------------------------------
    y = ys_ref[...] * _silu(z)
    out = jnp.dot(y.astype(jnp.bfloat16), wout_ref[...],
                  preferred_element_type=jnp.float32)
    out_ref[0] = x + out


# ----------------------------------------------------------------------------
# pallas_call wrapper: one Mamba residual block over (B, L, d_model)
# ----------------------------------------------------------------------------
def mamba_residual_block(x_seq, p, *, tl=128, sub=8):
    B, L, d_model = x_seq.shape
    d_inner = p["W_in_x"].shape[1]
    d_state = p["A_T"].shape[0]
    d_conv = p["conv_w"].shape[0]
    dt_rank = p["W_dt"].shape[0]

    tl = min(tl, L)
    assert L % tl == 0 and tl % sub == 0, (L, tl, sub)
    hist = max(8, -(-(d_conv - 1) // 8) * 8)   # pad history region to sublane tile
    assert 2 <= d_conv <= hist + 1, d_conv

    bf16 = jnp.bfloat16
    # merged + bf16 weights (halves weight VMEM/HBM traffic, feeds the MXU at
    # its native rate; lane-dense GEMM N instead of three 16-wide GEMMs)
    w_in = jnp.concatenate([p["W_in_x"], p["W_in_z"]], axis=1).astype(bf16)
    w_x = jnp.concatenate([p["W_x_dt"], p["W_x_B"], p["W_x_C"]], axis=1)
    n_x = w_x.shape[1]
    n_x_pad = -(-n_x // 128) * 128
    if n_x_pad != n_x:
        w_x = jnp.pad(w_x, ((0, 0), (0, n_x_pad - n_x)))
    w_x = w_x.astype(bf16)
    w_dt = p["W_dt"].astype(bf16)
    w_out = p["W_out"].astype(bf16)

    weight_args = (p["rms_w"], w_in, p["conv_w"], p["conv_b"], w_x, w_dt,
                   p["b_dt"], p["A_T"], p["D"], w_out)

    grid = (B, L // tl)

    def const_idx(ndim):
        return lambda b, l: (0,) * ndim

    in_specs = [pl.BlockSpec((1, tl, d_model), lambda b, l: (b, l, 0))]
    for wa in weight_args:
        # constant index map -> single-buffer the resident weights
        in_specs.append(pl.BlockSpec(wa.shape, const_idx(wa.ndim),
                                     pipeline_mode=pl.Buffered(1)))
    # NOTE: with d_model < 128 the output is lane-sparse; real models should
    # use C >= 128 (or pack chunks) for fully dense stores.
    out_specs = pl.BlockSpec((1, tl, d_model), lambda b, l: (b, l, 0))

    scratch_shapes = [
        pltpu.VMEM((tl + hist, d_inner), jnp.float32),   # conv input + history
        pltpu.VMEM((tl, d_inner), jnp.float32),          # delta
        pltpu.VMEM((tl, d_inner), jnp.float32),          # delta * xc
        pltpu.VMEM((tl, d_state), jnp.float32),          # B
        pltpu.VMEM((tl, d_state), jnp.float32),          # C
        pltpu.VMEM((tl, d_inner), jnp.float32),          # y
        pltpu.VMEM((d_state, d_inner), jnp.float32),     # carried h
    ]

    # vmem limit sized from actual scratch + single-buffered weights + I/O
    # tiles + headroom for compiler-managed live values.
    f32b = 4
    scratch_bytes = ((tl + hist) * d_inner + 3 * tl * d_inner
                     + 2 * tl * d_state + d_state * d_inner) * f32b
    weight_bytes = sum(int(wa.size) * wa.dtype.itemsize for wa in weight_args)
    io_bytes = 2 * 2 * tl * d_model * f32b
    live_bytes = (6 * tl * d_inner + 2 * tl * d_model + tl * n_x_pad) * f32b
    vmem_limit = int(1.5 * (scratch_bytes + weight_bytes + io_bytes
                            + live_bytes)) + (4 << 20)
    vmem_limit = min(max(vmem_limit, 32 << 20), 100 << 20)

    kernel = functools.partial(
        mamba_block_kernel, d_inner=d_inner, d_state=d_state, dt_rank=dt_rank,
        d_conv=d_conv, hist=hist, sub=sub)

    return pl.pallas_call(
        kernel,
        out_shape=jax.ShapeDtypeStruct((B, L, d_model), jnp.float32),
        grid_spec=pltpu.PrefetchScalarGridSpec(
            num_scalar_prefetch=0,
            grid=grid,
            in_specs=in_specs,
            out_specs=out_specs,
            scratch_shapes=scratch_shapes,
        ),
        compiler_params=pltpu.CompilerParams(
            dimension_semantics=("parallel", "arbitrary"),
            vmem_limit_bytes=vmem_limit),
        input_output_aliases={0: 0},
    )(x_seq, *weight_args)


def mamba_layers_forward(x_nchw, layer_params, *, tl=128):
    """MambaLayers.forward: (B, C, H, W) -> (B, C, H, W), d_model = C."""
    bs, c, h, w = x_nchw.shape
    x = jnp.transpose(x_nchw.reshape(bs, c, h * w), (0, 2, 1))  # (B, L, d_model)
    for p in layer_params:
        x = mamba_residual_block(x, p, tl=tl)
    return jnp.transpose(x, (0, 2, 1)).reshape(bs, c, h, w)


# ----------------------------------------------------------------------------
# Pure-JAX reference (same math; mirrors the kernel's bf16 GEMM operands with
# f32 accumulation so the comparison isolates kernel logic; scan/conv/gate f32)
# ----------------------------------------------------------------------------
def _bf(a):
    return a.astype(jnp.bfloat16)


def _ref_rmsnorm(x, w, eps=1e-5):
    ms = jnp.mean(x * x, axis=-1, keepdims=True)
    return x * lax.rsqrt(ms + eps) * w


def _ref_mamba_block(xn, p):
    Bsz, L, _ = xn.shape
    d_conv = p["conv_w"].shape[0]
    dt_rank = p["W_dt"].shape[0]
    f32 = jnp.float32

    xb = jnp.einsum("bld,di->bli", _bf(xn), _bf(p["W_in_x"]),
                    preferred_element_type=f32)
    z = jnp.einsum("bld,di->bli", _bf(xn), _bf(p["W_in_z"]),
                   preferred_element_type=f32)

    xpad = jnp.pad(xb, ((0, 0), (d_conv - 1, 0), (0, 0)))
    conv = jnp.zeros_like(xb) + p["conv_b"]
    for k in range(d_conv):
        conv = conv + xpad[:, k:k + L, :] * p["conv_w"][k]
    xc = conv * jax.nn.sigmoid(conv)

    dt_in = jnp.einsum("bli,ir->blr", _bf(xc), _bf(p["W_x_dt"]),
                       preferred_element_type=f32)
    Bm = jnp.einsum("bli,is->bls", _bf(xc), _bf(p["W_x_B"]),
                    preferred_element_type=f32)
    Cm = jnp.einsum("bli,is->bls", _bf(xc), _bf(p["W_x_C"]),
                    preferred_element_type=f32)
    if dt_rank == 1:
        dl = dt_in * _bf(p["W_dt"]).astype(f32) + p["b_dt"]
    else:
        dl = jnp.einsum("blr,ri->bli", _bf(dt_in), _bf(p["W_dt"]),
                        preferred_element_type=f32) + p["b_dt"]
    delta = jax.nn.softplus(dl)

    A = jnp.transpose(p["A_T"])                       # (d_inner, d_state)

    def step(hprev, inp):
        d_t, x_t, B_t, C_t = inp
        dA = jnp.exp(d_t[..., None] * A[None, :, :])
        dBx = d_t[..., None] * x_t[..., None] * B_t[:, None, :]
        hnew = dA * hprev + dBx
        y_t = jnp.sum(hnew * C_t[:, None, :], axis=-1)
        return hnew, y_t

    d_inner, d_state = A.shape
    h0 = jnp.zeros((Bsz, d_inner, d_state), f32)
    xs = (jnp.transpose(delta, (1, 0, 2)), jnp.transpose(xc, (1, 0, 2)),
          jnp.transpose(Bm, (1, 0, 2)), jnp.transpose(Cm, (1, 0, 2)))
    _, ys = lax.scan(step, h0, xs)
    y = jnp.transpose(ys, (1, 0, 2))

    y = y + xc * p["D"]
    y = y * (z * jax.nn.sigmoid(z))
    return jnp.einsum("bli,id->bld", _bf(y), _bf(p["W_out"]),
                      preferred_element_type=f32)


def ref_mamba_layers(x_nchw, layer_params):
    bs, c, h, w = x_nchw.shape
    x = jnp.transpose(x_nchw.reshape(bs, c, h * w), (0, 2, 1))
    for p in layer_params:
        x = x + _ref_mamba_block(_ref_rmsnorm(x, p["rms_w"]), p)
    return jnp.transpose(x, (0, 2, 1)).reshape(bs, c, h, w)


# ----------------------------------------------------------------------------
if __name__ == "__main__":
    # Small shapes: x is (B, C, H, W); d_model = C, L = H*W.
    bs, c, h, w = 2, 8, 16, 16
    n_layers = 2

    d_model = c
    d_state = 16
    d_conv = 4
    expand = 2
    d_inner = expand * d_model
    dt_rank = max(1, -(-d_model // 16))   # ceil(d_model / 16)

    key = jax.random.PRNGKey(0)
    key, kx = jax.random.split(key)
    x = jax.random.normal(kx, (bs, c, h, w), jnp.float32)

    # A[i, s] = -(s + 1)  (standard Mamba S4D-real init), stored transposed.
    A_T = -jnp.broadcast_to(
        jnp.arange(1, d_state + 1, dtype=jnp.float32)[:, None],
        (d_state, d_inner))

    layer_params = []
    for _ in range(n_layers):
        key, *ks = jax.random.split(key, 12)
        p = dict(
            rms_w=(1.0 + 0.1 * jax.random.normal(ks[0], (1, d_model))).astype(jnp.float32),
            W_in_x=(0.3 * jax.random.normal(ks[1], (d_model, d_inner))).astype(jnp.float32),
            W_in_z=(0.3 * jax.random.normal(ks[2], (d_model, d_inner))).astype(jnp.float32),
            conv_w=(0.3 * jax.random.normal(ks[3], (d_conv, d_inner))).astype(jnp.float32),
            conv_b=(0.1 * jax.random.normal(ks[4], (1, d_inner))).astype(jnp.float32),
            W_x_dt=(0.3 * jax.random.normal(ks[5], (d_inner, dt_rank))).astype(jnp.float32),
            W_x_B=(0.3 * jax.random.normal(ks[6], (d_inner, d_state))).astype(jnp.float32),
            W_x_C=(0.3 * jax.random.normal(ks[7], (d_inner, d_state))).astype(jnp.float32),
            W_dt=(0.3 * jax.random.normal(ks[8], (dt_rank, d_inner))).astype(jnp.float32),
            b_dt=(0.1 * jax.random.normal(ks[9], (1, d_inner))).astype(jnp.float32),
            A_T=jnp.asarray(A_T, jnp.float32),
            D=jnp.ones((1, d_inner), jnp.float32),
            W_out=(0.3 * jax.random.normal(ks[10], (d_inner, d_model))).astype(jnp.float32),
        )
        layer_params.append(p)

    fwd = jax.jit(functools.partial(mamba_layers_forward, tl=128))
    out = jax.block_until_ready(fwd(x, layer_params))
    ref = jax.block_until_ready(jax.jit(ref_mamba_layers)(x, layer_params))

    assert out.shape == (bs, c, h, w), out.shape
    max_err = float(jnp.max(jnp.abs(out - ref)))
    # bf16 GEMM operands + approx reciprocal in the SiLUs => slightly looser
    # tolerance than a pure-f32 comparison.
    assert jnp.allclose(out, ref, atol=2.5e-2, rtol=2.5e-2), max_err
    print("KERNEL_OK")
</pallas_src>

<mosaic_0001>
module attributes {stable_mosaic.version = 11 : i64} {
  func.func @mamba_block_kernel(%arg0: i32, %arg1: i32, %arg2: memref<1x128x8xf32, #tpu.memory_space<vmem>>, %arg3: memref<1x8xf32, #tpu.memory_space<vmem>>, %arg4: memref<8x32xbf16, #tpu.memory_space<vmem>>, %arg5: memref<4x16xf32, #tpu.memory_space<vmem>>, %arg6: memref<1x16xf32, #tpu.memory_space<vmem>>, %arg7: memref<16x128xbf16, #tpu.memory_space<vmem>>, %arg8: memref<1x16xbf16, #tpu.memory_space<vmem>>, %arg9: memref<1x16xf32, #tpu.memory_space<vmem>>, %arg10: memref<16x16xf32, #tpu.memory_space<vmem>>, %arg11: memref<1x16xf32, #tpu.memory_space<vmem>>, %arg12: memref<16x8xbf16, #tpu.memory_space<vmem>>, %arg13: memref<1x128x8xf32, #tpu.memory_space<vmem>>, %arg14: memref<136x16xf32, #tpu.memory_space<vmem>>, %arg15: memref<128x16xf32, #tpu.memory_space<vmem>>, %arg16: memref<128x16xf32, #tpu.memory_space<vmem>>, %arg17: memref<128x16xf32, #tpu.memory_space<vmem>>, %arg18: memref<128x16xf32, #tpu.memory_space<vmem>>, %arg19: memref<128x16xf32, #tpu.memory_space<vmem>>, %arg20: memref<16x16xf32, #tpu.memory_space<vmem>>) attributes {dimension_semantics = [#tpu.dimension_semantics<parallel>, #tpu.dimension_semantics<arbitrary>], iteration_bounds = array<i64: 2, 2>, scalar_prefetch = 0 : i64, scratch_operands = 7 : i64, tpu.core_type = #tpu.core_type<tc>, window_params = [{transform_indices = @transform_0, window_bounds = array<i64: 1, 128, 8>}, {pipeline_mode = #tpu.pipeline_mode<synchronous>, transform_indices = @transform_1, window_bounds = array<i64: 1, 8>}, {pipeline_mode = #tpu.pipeline_mode<synchronous>, transform_indices = @transform_2, window_bounds = array<i64: 8, 32>}, {pipeline_mode = #tpu.pipeline_mode<synchronous>, transform_indices = @transform_3, window_bounds = array<i64: 4, 16>}, {pipeline_mode = #tpu.pipeline_mode<synchronous>, transform_indices = @transform_4, window_bounds = array<i64: 1, 16>}, {pipeline_mode = #tpu.pipeline_mode<synchronous>, transform_indices = @transform_5, window_bounds = array<i64: 16, 128>}, {pipeline_mode = #tpu.pipeline_mode<synchronous>, transform_indices = @transform_6, window_bounds = array<i64: 1, 16>}, {pipeline_mode = #tpu.pipeline_mode<synchronous>, transform_indices = @transform_7, window_bounds = array<i64: 1, 16>}, {pipeline_mode = #tpu.pipeline_mode<synchronous>, transform_indices = @transform_8, window_bounds = array<i64: 16, 16>}, {pipeline_mode = #tpu.pipeline_mode<synchronous>, transform_indices = @transform_9, window_bounds = array<i64: 1, 16>}, {pipeline_mode = #tpu.pipeline_mode<synchronous>, transform_indices = @transform_10, window_bounds = array<i64: 16, 8>}, {transform_indices = @transform_11, window_bounds = array<i64: 1, 128, 8>}]} {
    %c0_i32 = arith.constant 0 : i32
    %0 = arith.cmpi eq, %arg1, %c0_i32 : i32
    %1 = arith.extui %0 : i1 to i32
    %c0_i32_0 = arith.constant 0 : i32
    %2 = arith.cmpi ne, %1, %c0_i32_0 : i32
    scf.if %2 {
      %cst_70 = arith.constant 0.000000e+00 : f32
      %113 = vector.broadcast %cst_70 : f32 to vector<16x16xf32>
      %c0_71 = arith.constant 0 : index
      %c0_72 = arith.constant 0 : index
      %114 = vector.load %arg20[%c0_71, %c0_72] : memref<16x16xf32, #tpu.memory_space<vmem>>, vector<16x16xf32>
      tpu.vector_store %arg20[%c0_71, %c0_72], %113 {strides = array<i32>} : memref<16x16xf32, #tpu.memory_space<vmem>>, vector<16x16xf32>,
      %cst_73 = arith.constant 0.000000e+00 : f32
      %115 = vector.broadcast %cst_73 : f32 to vector<8x16xf32>
      %c0_74 = arith.constant 0 : index
      %c0_75 = arith.constant 0 : index
      %116 = vector.load %arg14[%c0_74, %c0_75] : memref<136x16xf32, #tpu.memory_space<vmem>>, vector<8x16xf32>
      tpu.vector_store %arg14[%c0_74, %c0_75], %115 {strides = array<i32>} : memref<136x16xf32, #tpu.memory_space<vmem>>, vector<8x16xf32>,
    } else {
    }
    %c0 = arith.constant 0 : index
    %c0_1 = arith.constant 0 : index
    %c0_2 = arith.constant 0 : index
    %3 = vector.load %arg2[%c0, %c0_1, %c0_2] : memref<1x128x8xf32, #tpu.memory_space<vmem>>, vector<1x128x8xf32>
    %4 = vector.shape_cast %3 : vector<1x128x8xf32> to vector<128x8xf32>
    %5 = arith.mulf %4, %4 : vector<128x8xf32>
    %cst = arith.constant dense<0.000000e+00> : vector<128xf32>
    %6 = vector.multi_reduction <add>, %5, %cst [1] : vector<128x8xf32> to vector<128xf32>
    %7 = vector.shape_cast %6 : vector<128xf32> to vector<128x1xf32>
    %cst_3 = arith.constant 8.000000e+00 : f32
    %8 = vector.broadcast %cst_3 : f32 to vector<128x1xf32>
    %9 = arith.divf %7, %8 : vector<128x1xf32>
    %cst_4 = arith.constant 9.99999974E-6 : f32
    %10 = vector.broadcast %cst_4 : f32 to vector<128x1xf32>
    %11 = arith.addf %9, %10 : vector<128x1xf32>
    %12 = math.rsqrt %11 : vector<128x1xf32>
    %13 = vector.broadcast %12 : vector<128x1xf32> to vector<128x8xf32>
    %14 = arith.mulf %4, %13 : vector<128x8xf32>
    %c0_5 = arith.constant 0 : index
    %c0_6 = arith.constant 0 : index
    %15 = vector.load %arg3[%c0_5, %c0_6] : memref<1x8xf32, #tpu.memory_space<vmem>>, vector<1x8xf32>
    %16 = vector.broadcast %15 : vector<1x8xf32> to vector<128x8xf32>
    %17 = arith.mulf %14, %16 : vector<128x8xf32>
    %18 = arith.truncf %17 : vector<128x8xf32> to vector<128x8xbf16>
    %c0_7 = arith.constant 0 : index
    %c0_8 = arith.constant 0 : index
    %19 = vector.load %arg4[%c0_7, %c0_8] : memref<8x32xbf16, #tpu.memory_space<vmem>>, vector<8x32xbf16>
    %cst_9 = arith.constant dense<0.000000e+00> : vector<128x32xf32>
    %20 = tpu.matmul %18, %19, %cst_9 {dimension_numbers = #tpu.dot_dimension_numbers<[1], [0], [0], [1], [0, 0, 1, 1], [], []>} : vector<128x8xbf16>, vector<8x32xbf16>, vector<128x32xf32> -> vector<128x32xf32>
    %21 = vector.extract_strided_slice %20 {offsets = [0, 0], sizes = [128, 16], strides = [1, 1]} : vector<128x32xf32> to vector<128x16xf32>
    %22 = vector.extract_strided_slice %20 {offsets = [0, 16], sizes = [128, 16], strides = [1, 1]} : vector<128x32xf32> to vector<128x16xf32>
    %c8 = arith.constant 8 : index
    %c0_10 = arith.constant 0 : index
    %23 = vector.load %arg14[%c8, %c0_10] : memref<136x16xf32, #tpu.memory_space<vmem>>, vector<128x16xf32>
    tpu.vector_store %arg14[%c8, %c0_10], %21 {strides = array<i32>} : memref<136x16xf32, #tpu.memory_space<vmem>>, vector<128x16xf32>,
    %c5 = arith.constant 5 : index
    %c0_11 = arith.constant 0 : index
    %24 = vector.load %arg14[%c5, %c0_11] : memref<136x16xf32, #tpu.memory_space<vmem>>, vector<128x16xf32>
    %c0_12 = arith.constant 0 : index
    %c0_13 = arith.constant 0 : index
    %25 = vector.load %arg5[%c0_12, %c0_13] : memref<4x16xf32, #tpu.memory_space<vmem>>, vector<1x16xf32>
    %26 = vector.broadcast %25 : vector<1x16xf32> to vector<128x16xf32>
    %27 = arith.mulf %24, %26 : vector<128x16xf32>
    %c6 = arith.constant 6 : index
    %c0_14 = arith.constant 0 : index
    %28 = vector.load %arg14[%c6, %c0_14] : memref<136x16xf32, #tpu.memory_space<vmem>>, vector<128x16xf32>
    %c1 = arith.constant 1 : index
    %c0_15 = arith.constant 0 : index
    %29 = vector.load %arg5[%c1, %c0_15] : memref<4x16xf32, #tpu.memory_space<vmem>>, vector<1x16xf32>
    %30 = vector.broadcast %29 : vector<1x16xf32> to vector<128x16xf32>
    %31 = arith.mulf %28, %30 : vector<128x16xf32>
    %32 = arith.addf %27, %31 : vector<128x16xf32>
    %c7 = arith.constant 7 : index
    %c0_16 = arith.constant 0 : index
    %33 = vector.load %arg14[%c7, %c0_16] : memref<136x16xf32, #tpu.memory_space<vmem>>, vector<128x16xf32>
    %c2 = arith.constant 2 : index
    %c0_17 = arith.constant 0 : index
    %34 = vector.load %arg5[%c2, %c0_17] : memref<4x16xf32, #tpu.memory_space<vmem>>, vector<1x16xf32>
    %35 = vector.broadcast %34 : vector<1x16xf32> to vector<128x16xf32>
    %36 = arith.mulf %33, %35 : vector<128x16xf32>
    %37 = arith.addf %32, %36 : vector<128x16xf32>
    %c8_18 = arith.constant 8 : index
    %c0_19 = arith.constant 0 : index
    %38 = vector.load %arg14[%c8_18, %c0_19] : memref<136x16xf32, #tpu.memory_space<vmem>>, vector<128x16xf32>
    %c3 = arith.constant 3 : index
    %c0_20 = arith.constant 0 : index
    %39 = vector.load %arg5[%c3, %c0_20] : memref<4x16xf32, #tpu.memory_space<vmem>>, vector<1x16xf32>
    %40 = vector.broadcast %39 : vector<1x16xf32> to vector<128x16xf32>
    %41 = arith.mulf %38, %40 : vector<128x16xf32>
    %42 = arith.addf %37, %41 : vector<128x16xf32>
    %c0_21 = arith.constant 0 : index
    %c0_22 = arith.constant 0 : index
    %43 = vector.load %arg6[%c0_21, %c0_22] : memref<1x16xf32, #tpu.memory_space<vmem>>, vector<1x16xf32>
    %44 = vector.broadcast %43 : vector<1x16xf32> to vector<128x16xf32>
    %45 = arith.addf %42, %44 : vector<128x16xf32>
    %c133 = arith.constant 133 : index
    %c0_23 = arith.constant 0 : index
    %46 = vector.load %arg14[%c133, %c0_23] : memref<136x16xf32, #tpu.memory_space<vmem>>, vector<3x16xf32>
    %c5_24 = arith.constant 5 : index
    %c0_25 = arith.constant 0 : index
    %47 = vector.load %arg14[%c5_24, %c0_25] : memref<136x16xf32, #tpu.memory_space<vmem>>, vector<3x16xf32>
    tpu.vector_store %arg14[%c5_24, %c0_25], %46 {strides = array<i32>} : memref<136x16xf32, #tpu.memory_space<vmem>>, vector<3x16xf32>,
    %cst_26 = arith.constant 0.000000e+00 : f32
    %48 = vector.broadcast %cst_26 : f32 to vector<128x16xf32>
    %49 = arith.subf %48, %45 : vector<128x16xf32>
    %cst_27 = arith.constant 6.000000e+01 : f32
    %50 = vector.broadcast %cst_27 : f32 to vector<128x16xf32>
    %51 = arith.minimumf %49, %50 : vector<128x16xf32>
    %52 = math.exp %51 : vector<128x16xf32>
    %cst_28 = arith.constant 1.000000e+00 : f32
    %53 = vector.broadcast %cst_28 : f32 to vector<128x16xf32>
    %54 = arith.addf %53, %52 : vector<128x16xf32>
    %55 = tpu.reciprocal %54 {approx = true} : vector<128x16xf32> -> vector<128x16xf32>
    %56 = arith.mulf %45, %55 : vector<128x16xf32>
    %57 = arith.truncf %56 : vector<128x16xf32> to vector<128x16xbf16>
    %c0_29 = arith.constant 0 : index
    %c0_30 = arith.constant 0 : index
    %58 = vector.load %arg7[%c0_29, %c0_30] : memref<16x128xbf16, #tpu.memory_space<vmem>>, vector<16x128xbf16>
    %cst_31 = arith.constant dense<0.000000e+00> : vector<128x128xf32>
    %59 = tpu.matmul %57, %58, %cst_31 {dimension_numbers = #tpu.dot_dimension_numbers<[1], [0], [0], [1], [0, 0, 1, 1], [], []>} : vector<128x16xbf16>, vector<16x128xbf16>, vector<128x128xf32> -> vector<128x128xf32>
    %60 = vector.extract_strided_slice %59 {offsets = [0, 0], sizes = [128, 1], strides = [1, 1]} : vector<128x128xf32> to vector<128x1xf32>
    %61 = vector.extract_strided_slice %59 {offsets = [0, 1], sizes = [128, 16], strides = [1, 1]} : vector<128x128xf32> to vector<128x16xf32>
    %62 = vector.extract_strided_slice %59 {offsets = [0, 17], sizes = [128, 16], strides = [1, 1]} : vector<128x128xf32> to vector<128x16xf32>
    %c0_32 = arith.constant 0 : index
    %c0_33 = arith.constant 0 : index
    %63 = vector.load %arg8[%c0_32, %c0_33] : memref<1x16xbf16, #tpu.memory_space<vmem>>, vector<1x16xbf16>
    %64 = arith.extf %63 : vector<1x16xbf16> to vector<1x16xf32>
    %65 = vector.broadcast %60 : vector<128x1xf32> to vector<128x16xf32>
    %66 = vector.broadcast %64 : vector<1x16xf32> to vector<128x16xf32>
    %67 = arith.mulf %65, %66 : vector<128x16xf32>
    %c0_34 = arith.constant 0 : index
    %c0_35 = arith.constant 0 : index
    %68 = vector.load %arg9[%c0_34, %c0_35] : memref<1x16xf32, #tpu.memory_space<vmem>>, vector<1x16xf32>
    %69 = vector.broadcast %68 : vector<1x16xf32> to vector<128x16xf32>
    %70 = arith.addf %67, %69 : vector<128x16xf32>
    %cst_36 = arith.constant 0.000000e+00 : f32
    %71 = vector.broadcast %cst_36 : f32 to vector<128x16xf32>
    %72 = arith.maximumf %70, %71 : vector<128x16xf32>
    %73 = math.absf %70 : vector<128x16xf32>
    %cst_37 = arith.constant 0.000000e+00 : f32
    %74 = vector.broadcast %cst_37 : f32 to vector<128x16xf32>
    %75 = arith.subf %74, %73 : vector<128x16xf32>
    %76 = math.exp %75 : vector<128x16xf32>
    %cst_38 = arith.constant 1.000000e+00 : f32
    %77 = vector.broadcast %cst_38 : f32 to vector<128x16xf32>
    %78 = arith.addf %77, %76 : vector<128x16xf32>
    %79 = math.log %78 : vector<128x16xf32>
    %80 = arith.addf %72, %79 : vector<128x16xf32>
    %c0_39 = arith.constant 0 : index
    %c0_40 = arith.constant 0 : index
    %81 = vector.load %arg15[%c0_39, %c0_40] : memref<128x16xf32, #tpu.memory_space<vmem>>, vector<128x16xf32>
    tpu.vector_store %arg15[%c0_39, %c0_40], %80 {strides = array<i32>} : memref<128x16xf32, #tpu.memory_space<vmem>>, vector<128x16xf32>,
    %82 = arith.mulf %80, %56 : vector<128x16xf32>
    %c0_41 = arith.constant 0 : index
    %c0_42 = arith.constant 0 : index
    %83 = vector.load %arg16[%c0_41, %c0_42] : memref<128x16xf32, #tpu.memory_space<vmem>>, vector<128x16xf32>
    tpu.vector_store %arg16[%c0_41, %c0_42], %82 {strides = array<i32>} : memref<128x16xf32, #tpu.memory_space<vmem>>, vector<128x16xf32>,
    %c0_43 = arith.constant 0 : index
    %c0_44 = arith.constant 0 : index
    %84 = vector.load %arg17[%c0_43, %c0_44] : memref<128x16xf32, #tpu.memory_space<vmem>>, vector<128x16xf32>
    tpu.vector_store %arg17[%c0_43, %c0_44], %61 {strides = array<i32>} : memref<128x16xf32, #tpu.memory_space<vmem>>, vector<128x16xf32>,
    %c0_45 = arith.constant 0 : index
    %c0_46 = arith.constant 0 : index
    %85 = vector.load %arg18[%c0_45, %c0_46] : memref<128x16xf32, #tpu.memory_space<vmem>>, vector<128x16xf32>
    tpu.vector_store %arg18[%c0_45, %c0_46], %62 {strides = array<i32>} : memref<128x16xf32, #tpu.memory_space<vmem>>, vector<128x16xf32>,
    %c0_47 = arith.constant 0 : index
    %c0_48 = arith.constant 0 : index
    %86 = vector.load %arg11[%c0_47, %c0_48] : memref<1x16xf32, #tpu.memory_space<vmem>>, vector<1x16xf32>
    %87 = vector.broadcast %86 : vector<1x16xf32> to vector<128x16xf32>
    %88 = arith.mulf %56, %87 : vector<128x16xf32>
    %c0_49 = arith.constant 0 : index
    %c0_50 = arith.constant 0 : index
    %89 = vector.load %arg19[%c0_49, %c0_50] : memref<128x16xf32, #tpu.memory_space<vmem>>, vector<128x16xf32>
    tpu.vector_store %arg19[%c0_49, %c0_50], %88 {strides = array<i32>} : memref<128x16xf32, #tpu.memory_space<vmem>>, vector<128x16xf32>,
    %c0_51 = arith.constant 0 : index
    %c0_52 = arith.constant 0 : index
    %90 = vector.load %arg10[%c0_51, %c0_52] : memref<16x16xf32, #tpu.memory_space<vmem>>, vector<16x16xf32>
    %c0_53 = arith.constant 0 : index
    %c0_54 = arith.constant 0 : index
    %91 = vector.load %arg20[%c0_53, %c0_54] : memref<16x16xf32, #tpu.memory_space<vmem>>, vector<16x16xf32>
    %c0_i32_55 = arith.constant 0 : i32
    %c16_i32 = arith.constant 16 : i32
    %92 = arith.addi %c0_i32_55, %c16_i32 : i32
    %c1_i32 = arith.constant 1 : i32
    %93 = scf.for %arg21 = %c0_i32_55 to %92 step %c1_i32 iter_args(%arg22 = %91) -> (vector<16x16xf32>)  : i32 {
      %c8_i32 = arith.constant 8 : i32
      %113 = arith.muli %arg21, %c8_i32 : i32
      %114 = tpu.assume_multiple %113, 8 : i32
      %115 = arith.index_cast %114 : i32 to index
      %c0_70 = arith.constant 0 : index
      %116 = vector.load %arg15[%115, %c0_70] : memref<128x16xf32, #tpu.memory_space<vmem>>, vector<8x16xf32>
      %117 = arith.index_cast %114 : i32 to index
      %c0_71 = arith.constant 0 : index
      %118 = vector.load %arg16[%117, %c0_71] : memref<128x16xf32, #tpu.memory_space<vmem>>, vector<8x16xf32>
      %119 = arith.index_cast %114 : i32 to index
      %c0_72 = arith.constant 0 : index
      %120 = vector.load %arg17[%119, %c0_72] : memref<128x16xf32, #tpu.memory_space<vmem>>, vector<8x16xf32>
      %121 = arith.index_cast %114 : i32 to index
      %c0_73 = arith.constant 0 : index
      %122 = vector.load %arg18[%121, %c0_73] : memref<128x16xf32, #tpu.memory_space<vmem>>, vector<8x16xf32>
      %123 = vector.shape_cast %116 : vector<8x16xf32> to vector<8x1x16xf32>
      %124 = vector.shape_cast %90 : vector<16x16xf32> to vector<1x16x16xf32>
      %125 = vector.broadcast %123 : vector<8x1x16xf32> to vector<8x16x16xf32>
      %126 = vector.broadcast %124 : vector<1x16x16xf32> to vector<8x16x16xf32>
      %127 = arith.mulf %125, %126 : vector<8x16x16xf32>
      %128 = math.exp %127 : vector<8x16x16xf32>
      %129 = vector.shape_cast %118 : vector<8x16xf32> to vector<8x1x16xf32>
      %130 = vector.shape_cast %120 : vector<8x16xf32> to vector<8x16x1xf32>
      %131 = vector.broadcast %129 : vector<8x1x16xf32> to vector<8x16x16xf32>
      %132 = vector.broadcast %130 : vector<8x16x1xf32> to vector<8x16x16xf32>
      %133 = arith.mulf %131, %132 : vector<8x16x16xf32>
      %134 = vector.shape_cast %122 : vector<8x16xf32> to vector<8x16x1xf32>
      %135 = vector.extract_strided_slice %128 {offsets = [0, 0, 0], sizes = [1, 16, 16], strides = [1, 1, 1]} : vector<8x16x16xf32> to vector<1x16x16xf32>
      %136 = vector.shape_cast %135 : vector<1x16x16xf32> to vector<16x16xf32>
      %137 = arith.mulf %136, %arg22 : vector<16x16xf32>
      %138 = vector.extract_strided_slice %133 {offsets = [0, 0, 0], sizes = [1, 16, 16], strides = [1, 1, 1]} : vector<8x16x16xf32> to vector<1x16x16xf32>
      %139 = vector.shape_cast %138 : vector<1x16x16xf32> to vector<16x16xf32>
      %140 = arith.addf %137, %139 : vector<16x16xf32>
      %141 = vector.extract_strided_slice %134 {offsets = [0, 0, 0], sizes = [1, 16, 1], strides = [1, 1, 1]} : vector<8x16x1xf32> to vector<1x16x1xf32>
      %142 = vector.shape_cast %141 : vector<1x16x1xf32> to vector<16x1xf32>
      %143 = vector.broadcast %142 : vector<16x1xf32> to vector<16x16xf32>
      %144 = arith.mulf %140, %143 : vector<16x16xf32>
      %cst_74 = arith.constant dense<0.000000e+00> : vector<16xf32>
      %145 = vector.multi_reduction <add>, %144, %cst_74 [0] : vector<16x16xf32> to vector<16xf32>
      %146 = vector.shape_cast %145 : vector<16xf32> to vector<1x16xf32>
      %147 = vector.extract_strided_slice %128 {offsets = [1, 0, 0], sizes = [1, 16, 16], strides = [1, 1, 1]} : vector<8x16x16xf32> to vector<1x16x16xf32>
      %148 = vector.shape_cast %147 : vector<1x16x16xf32> to vector<16x16xf32>
      %149 = arith.mulf %148, %140 : vector<16x16xf32>
      %150 = vector.extract_strided_slice %133 {offsets = [1, 0, 0], sizes = [1, 16, 16], strides = [1, 1, 1]} : vector<8x16x16xf32> to vector<1x16x16xf32>
      %151 = vector.shape_cast %150 : vector<1x16x16xf32> to vector<16x16xf32>
      %152 = arith.addf %149, %151 : vector<16x16xf32>
      %153 = vector.extract_strided_slice %134 {offsets = [1, 0, 0], sizes = [1, 16, 1], strides = [1, 1, 1]} : vector<8x16x1xf32> to vector<1x16x1xf32>
      %154 = vector.shape_cast %153 : vector<1x16x1xf32> to vector<16x1xf32>
      %155 = vector.broadcast %154 : vector<16x1xf32> to vector<16x16xf32>
      %156 = arith.mulf %152, %155 : vector<16x16xf32>
      %cst_75 = arith.constant dense<0.000000e+00> : vector<16xf32>
      %157 = vector.multi_reduction <add>, %156, %cst_75 [0] : vector<16x16xf32> to vector<16xf32>
      %158 = vector.shape_cast %157 : vector<16xf32> to vector<1x16xf32>
      %159 = vector.extract_strided_slice %128 {offsets = [2, 0, 0], sizes = [1, 16, 16], strides = [1, 1, 1]} : vector<8x16x16xf32> to vector<1x16x16xf32>
      %160 = vector.shape_cast %159 : vector<1x16x16xf32> to vector<16x16xf32>
      %161 = arith.mulf %160, %152 : vector<16x16xf32>
      %162 = vector.extract_strided_slice %133 {offsets = [2, 0, 0], sizes = [1, 16, 16], strides = [1, 1, 1]} : vector<8x16x16xf32> to vector<1x16x16xf32>
      %163 = vector.shape_cast %162 : vector<1x16x16xf32> to vector<16x16xf32>
      %164 = arith.addf %161, %163 : vector<16x16xf32>
      %165 = vector.extract_strided_slice %134 {offsets = [2, 0, 0], sizes = [1, 16, 1], strides = [1, 1, 1]} : vector<8x16x1xf32> to vector<1x16x1xf32>
      %166 = vector.shape_cast %165 : vector<1x16x1xf32> to vector<16x1xf32>
      %167 = vector.broadcast %166 : vector<16x1xf32> to vector<16x16xf32>
      %168 = arith.mulf %164, %167 : vector<16x16xf32>
      %cst_76 = arith.constant dense<0.000000e+00> : vector<16xf32>
      %169 = vector.multi_reduction <add>, %168, %cst_76 [0] : vector<16x16xf32> to vector<16xf32>
      %170 = vector.shape_cast %169 : vector<16xf32> to vector<1x16xf32>
      %171 = vector.extract_strided_slice %128 {offsets = [3, 0, 0], sizes = [1, 16, 16], strides = [1, 1, 1]} : vector<8x16x16xf32> to vector<1x16x16xf32>
      %172 = vector.shape_cast %171 : vector<1x16x16xf32> to vector<16x16xf32>
      %173 = arith.mulf %172, %164 : vector<16x16xf32>
      %174 = vector.extract_strided_slice %133 {offsets = [3, 0, 0], sizes = [1, 16, 16], strides = [1, 1, 1]} : vector<8x16x16xf32> to vector<1x16x16xf32>
      %175 = vector.shape_cast %174 : vector<1x16x16xf32> to vector<16x16xf32>
      %176 = arith.addf %173, %175 : vector<16x16xf32>
      %177 = vector.extract_strided_slice %134 {offsets = [3, 0, 0], sizes = [1, 16, 1], strides = [1, 1, 1]} : vector<8x16x1xf32> to vector<1x16x1xf32>
      %178 = vector.shape_cast %177 : vector<1x16x1xf32> to vector<16x1xf32>
      %179 = vector.broadcast %178 : vector<16x1xf32> to vector<16x16xf32>
      %180 = arith.mulf %176, %179 : vector<16x16xf32>
      %cst_77 = arith.constant dense<0.000000e+00> : vector<16xf32>
      %181 = vector.multi_reduction <add>, %180, %cst_77 [0] : vector<16x16xf32> to vector<16xf32>
      %182 = vector.shape_cast %181 : vector<16xf32> to vector<1x16xf32>
      %183 = vector.extract_strided_slice %128 {offsets = [4, 0, 0], sizes = [1, 16, 16], strides = [1, 1, 1]} : vector<8x16x16xf32> to vector<1x16x16xf32>
      %184 = vector.shape_cast %183 : vector<1x16x16xf32> to vector<16x16xf32>
      %185 = arith.mulf %184, %176 : vector<16x16xf32>
      %186 = vector.extract_strided_slice %133 {offsets = [4, 0, 0], sizes = [1, 16, 16], strides = [1, 1, 1]} : vector<8x16x16xf32> to vector<1x16x16xf32>
      %187 = vector.shape_cast %186 : vector<1x16x16xf32> to vector<16x16xf32>
      %188 = arith.addf %185, %187 : vector<16x16xf32>
      %189 = vector.extract_strided_slice %134 {offsets = [4, 0, 0], sizes = [1, 16, 1], strides = [1, 1, 1]} : vector<8x16x1xf32> to vector<1x16x1xf32>
      %190 = vector.shape_cast %189 : vector<1x16x1xf32> to vector<16x1xf32>
      %191 = vector.broadcast %190 : vector<16x1xf32> to vector<16x16xf32>
      %192 = arith.mulf %188, %191 : vector<16x16xf32>
      %cst_78 = arith.constant dense<0.000000e+00> : vector<16xf32>
      %193 = vector.multi_reduction <add>, %192, %cst_78 [0] : vector<16x16xf32> to vector<16xf32>
      %194 = vector.shape_cast %193 : vector<16xf32> to vector<1x16xf32>
      %195 = vector.extract_strided_slice %128 {offsets = [5, 0, 0], sizes = [1, 16, 16], strides = [1, 1, 1]} : vector<8x16x16xf32> to vector<1x16x16xf32>
      %196 = vector.shape_cast %195 : vector<1x16x16xf32> to vector<16x16xf32>
      %197 = arith.mulf %196, %188 : vector<16x16xf32>
      %198 = vector.extract_strided_slice %133 {offsets = [5, 0, 0], sizes = [1, 16, 16], strides = [1, 1, 1]} : vector<8x16x16xf32> to vector<1x16x16xf32>
      %199 = vector.shape_cast %198 : vector<1x16x16xf32> to vector<16x16xf32>
      %200 = arith.addf %197, %199 : vector<16x16xf32>
      %201 = vector.extract_strided_slice %134 {offsets = [5, 0, 0], sizes = [1, 16, 1], strides = [1, 1, 1]} : vector<8x16x1xf32> to vector<1x16x1xf32>
      %202 = vector.shape_cast %201 : vector<1x16x1xf32> to vector<16x1xf32>
      %203 = vector.broadcast %202 : vector<16x1xf32> to vector<16x16xf32>
      %204 = arith.mulf %200, %203 : vector<16x16xf32>
      %cst_79 = arith.constant dense<0.000000e+00> : vector<16xf32>
      %205 = vector.multi_reduction <add>, %204, %cst_79 [0] : vector<16x16xf32> to vector<16xf32>
      %206 = vector.shape_cast %205 : vector<16xf32> to vector<1x16xf32>
      %207 = vector.extract_strided_slice %128 {offsets = [6, 0, 0], sizes = [1, 16, 16], strides = [1, 1, 1]} : vector<8x16x16xf32> to vector<1x16x16xf32>
      %208 = vector.shape_cast %207 : vector<1x16x16xf32> to vector<16x16xf32>
      %209 = arith.mulf %208, %200 : vector<16x16xf32>
      %210 = vector.extract_strided_slice %133 {offsets = [6, 0, 0], sizes = [1, 16, 16], strides = [1, 1, 1]} : vector<8x16x16xf32> to vector<1x16x16xf32>
      %211 = vector.shape_cast %210 : vector<1x16x16xf32> to vector<16x16xf32>
      %212 = arith.addf %209, %211 : vector<16x16xf32>
      %213 = vector.extract_strided_slice %134 {offsets = [6, 0, 0], sizes = [1, 16, 1], strides = [1, 1, 1]} : vector<8x16x1xf32> to vector<1x16x1xf32>
      %214 = vector.shape_cast %213 : vector<1x16x1xf32> to vector<16x1xf32>
      %215 = vector.broadcast %214 : vector<16x1xf32> to vector<16x16xf32>
      %216 = arith.mulf %212, %215 : vector<16x16xf32>
      %cst_80 = arith.constant dense<0.000000e+00> : vector<16xf32>
      %217 = vector.multi_reduction <add>, %216, %cst_80 [0] : vector<16x16xf32> to vector<16xf32>
      %218 = vector.shape_cast %217 : vector<16xf32> to vector<1x16xf32>
      %219 = vector.extract_strided_slice %128 {offsets = [7, 0, 0], sizes = [1, 16, 16], strides = [1, 1, 1]} : vector<8x16x16xf32> to vector<1x16x16xf32>
      %220 = vector.shape_cast %219 : vector<1x16x16xf32> to vector<16x16xf32>
      %221 = arith.mulf %220, %212 : vector<16x16xf32>
      %222 = vector.extract_strided_slice %133 {offsets = [7, 0, 0], sizes = [1, 16, 16], strides = [1, 1, 1]} : vector<8x16x16xf32> to vector<1x16x16xf32>
      %223 = vector.shape_cast %222 : vector<1x16x16xf32> to vector<16x16xf32>
      %224 = arith.addf %221, %223 : vector<16x16xf32>
      %225 = vector.extract_strided_slice %134 {offsets = [7, 0, 0], sizes = [1, 16, 1], strides = [1, 1, 1]} : vector<8x16x1xf32> to vector<1x16x1xf32>
      %226 = vector.shape_cast %225 : vector<1x16x1xf32> to vector<16x1xf32>
      %227 = vector.broadcast %226 : vector<16x1xf32> to vector<16x16xf32>
      %228 = arith.mulf %224, %227 : vector<16x16xf32>
      %cst_81 = arith.constant dense<0.000000e+00> : vector<16xf32>
      %229 = vector.multi_reduction <add>, %228, %cst_81 [0] : vector<16x16xf32> to vector<16xf32>
      %230 = vector.shape_cast %229 : vector<16xf32> to vector<1x16xf32>
      %231 = tpu.concatenate %146, %158, %170, %182, %194, %206, %218, %230 in 0 : vector<1x16xf32>, vector<1x16xf32>, vector<1x16xf32>, vector<1x16xf32>, vector<1x16xf32>, vector<1x16xf32>, vector<1x16xf32>, vector<1x16xf32> -> vector<8x16xf32>
      %232 = arith.index_cast %114 : i32 to index
      %c0_82 = arith.constant 0 : index
      %233 = vector.load %arg19[%232, %c0_82] : memref<128x16xf32, #tpu.memory_space<vmem>>, vector<8x16xf32>
      %234 = arith.addf %233, %231 : vector<8x16xf32>
      %235 = arith.index_cast %114 : i32 to index
      %c0_83 = arith.constant 0 : index
      %236 = vector.load %arg19[%235, %c0_83] : memref<128x16xf32, #tpu.memory_space<vmem>>, vector<8x16xf32>
      tpu.vector_store %arg19[%235, %c0_83], %234 {strides = array<i32>} : memref<128x16xf32, #tpu.memory_space<vmem>>, vector<8x16xf32>,
      scf.yield %224 : vector<16x16xf32>
    }
    %c16_i32_56 = arith.constant 16 : i32
    %c0_57 = arith.constant 0 : index
    %c0_58 = arith.constant 0 : index
    %94 = vector.load %arg20[%c0_57, %c0_58] : memref<16x16xf32, #tpu.memory_space<vmem>>, vector<16x16xf32>
    tpu.vector_store %arg20[%c0_57, %c0_58], %93 {strides = array<i32>} : memref<16x16xf32, #tpu.memory_space<vmem>>, vector<16x16xf32>,
    %c0_59 = arith.constant 0 : index
    %c0_60 = arith.constant 0 : index
    %95 = vector.load %arg19[%c0_59, %c0_60] : memref<128x16xf32, #tpu.memory_space<vmem>>, vector<128x16xf32>
    %cst_61 = arith.constant 0.000000e+00 : f32
    %96 = vector.broadcast %cst_61 : f32 to vector<128x16xf32>
    %97 = arith.subf %96, %22 : vector<128x16xf32>
    %cst_62 = arith.constant 6.000000e+01 : f32
    %98 = vector.broadcast %cst_62 : f32 to vector<128x16xf32>
    %99 = arith.minimumf %97, %98 : vector<128x16xf32>
    %100 = math.exp %99 : vector<128x16xf32>
    %cst_63 = arith.constant 1.000000e+00 : f32
    %101 = vector.broadcast %cst_63 : f32 to vector<128x16xf32>
    %102 = arith.addf %101, %100 : vector<128x16xf32>
    %103 = tpu.reciprocal %102 {approx = true} : vector<128x16xf32> -> vector<128x16xf32>
    %104 = arith.mulf %22, %103 : vector<128x16xf32>
    %105 = arith.mulf %95, %104 : vector<128x16xf32>
    %106 = arith.truncf %105 : vector<128x16xf32> to vector<128x16xbf16>
    %c0_64 = arith.constant 0 : index
    %c0_65 = arith.constant 0 : index
    %107 = vector.load %arg12[%c0_64, %c0_65] : memref<16x8xbf16, #tpu.memory_space<vmem>>, vector<16x8xbf16>
    %cst_66 = arith.constant dense<0.000000e+00> : vector<128x8xf32>
    %108 = tpu.matmul %106, %107, %cst_66 {dimension_numbers = #tpu.dot_dimension_numbers<[1], [0], [0], [1], [0, 0, 1, 1], [], []>} : vector<128x16xbf16>, vector<16x8xbf16>, vector<128x8xf32> -> vector<128x8xf32>
    %109 = arith.addf %4, %108 : vector<128x8xf32>
    %c0_67 = arith.constant 0 : index
    %c0_68 = arith.constant 0 : index
    %c0_69 = arith.constant 0 : index
    %110 = vector.load %arg13[%c0_67, %c0_68, %c0_69] : memref<1x128x8xf32, #tpu.memory_space<vmem>>, vector<1x128x8xf32>
    %111 = vector.shape_cast %110 : vector<1x128x8xf32> to vector<128x8xf32>
    %112 = vector.shape_cast %109 : vector<128x8xf32> to vector<1x128x8xf32>
    tpu.vector_store %arg13[%c0_67, %c0_68, %c0_69], %112 {strides = array<i32>} : memref<1x128x8xf32, #tpu.memory_space<vmem>>, vector<1x128x8xf32>,
    return
  }
  func.func @transform_0(%arg0: i32, %arg1: i32) -> (i32, i32, i32) {
    %c0_i32 = arith.constant 0 : i32
    %c0_i32_0 = arith.constant 0 : i32
    return %arg0, %arg1, %c0_i32 : i32, i32, i32
  }
  func.func @transform_1(%arg0: i32, %arg1: i32) -> (i32, i32) {
    %c0_i32 = arith.constant 0 : i32
    %c0_i32_0 = arith.constant 0 : i32
    %c0_i32_1 = arith.constant 0 : i32
    return %c0_i32, %c0_i32_0 : i32, i32
  }
  func.func @transform_2(%arg0: i32, %arg1: i32) -> (i32, i32) {
    %c0_i32 = arith.constant 0 : i32
    %c0_i32_0 = arith.constant 0 : i32
    %c0_i32_1 = arith.constant 0 : i32
    return %c0_i32, %c0_i32_0 : i32, i32
  }
  func.func @transform_3(%arg0: i32, %arg1: i32) -> (i32, i32) {
    %c0_i32 = arith.constant 0 : i32
    %c0_i32_0 = arith.constant 0 : i32
    %c0_i32_1 = arith.constant 0 : i32
    return %c0_i32, %c0_i32_0 : i32, i32
  }
  func.func @transform_4(%arg0: i32, %arg1: i32) -> (i32, i32) {
    %c0_i32 = arith.constant 0 : i32
    %c0_i32_0 = arith.constant 0 : i32
    %c0_i32_1 = arith.constant 0 : i32
    return %c0_i32, %c0_i32_0 : i32, i32
  }
  func.func @transform_5(%arg0: i32, %arg1: i32) -> (i32, i32) {
    %c0_i32 = arith.constant 0 : i32
    %c0_i32_0 = arith.constant 0 : i32
    %c0_i32_1 = arith.constant 0 : i32
    return %c0_i32, %c0_i32_0 : i32, i32
  }
  func.func @transform_6(%arg0: i32, %arg1: i32) -> (i32, i32) {
    %c0_i32 = arith.constant 0 : i32
    %c0_i32_0 = arith.constant 0 : i32
    %c0_i32_1 = arith.constant 0 : i32
    return %c0_i32, %c0_i32_0 : i32, i32
  }
  func.func @transform_7(%arg0: i32, %arg1: i32) -> (i32, i32) {
    %c0_i32 = arith.constant 0 : i32
    %c0_i32_0 = arith.constant 0 : i32
    %c0_i32_1 = arith.constant 0 : i32
    return %c0_i32, %c0_i32_0 : i32, i32
  }
  func.func @transform_8(%arg0: i32, %arg1: i32) -> (i32, i32) {
    %c0_i32 = arith.constant 0 : i32
    %c0_i32_0 = arith.constant 0 : i32
    %c0_i32_1 = arith.constant 0 : i32
    return %c0_i32, %c0_i32_0 : i32, i32
  }
  func.func @transform_9(%arg0: i32, %arg1: i32) -> (i32, i32) {
    %c0_i32 = arith.constant 0 : i32
    %c0_i32_0 = arith.constant 0 : i32
    %c0_i32_1 = arith.constant 0 : i32
    return %c0_i32, %c0_i32_0 : i32, i32
  }
  func.func @transform_10(%arg0: i32, %arg1: i32) -> (i32, i32) {
    %c0_i32 = arith.constant 0 : i32
    %c0_i32_0 = arith.constant 0 : i32
    %c0_i32_1 = arith.constant 0 : i32
    return %c0_i32, %c0_i32_0 : i32, i32
  }
  func.func @transform_11(%arg0: i32, %arg1: i32) -> (i32, i32, i32) {
    %c0_i32 = arith.constant 0 : i32
    %c0_i32_0 = arith.constant 0 : i32
    return %arg0, %arg1, %c0_i32 : i32, i32, i32
  }
}

</mosaic_0001>

<llo_original>
// kernel: mamba_layers_forward.2
$region0: #{mamba_layers_forward.2}
  #allocation0 [shape = 'u32[]', space=smem, size = 0x4, offset = 0x4, fixed_abs, tag = 'smem constant byte address 0x4 - core index']
  #allocation1 [shape = 'u32[144,128]{1,0:T(1,128)}', space=vmem, size = 0x12000, scoped, tag = 'internal scratch']
  #allocation2 [shape = 'f32[136,16]{1,0:T(8,128)}', space=vmem, size = 0x11000, scoped, tag = 'scratch operand']
  #allocation3 [shape = 'f32[128,16]{1,0:T(8,128)}', space=vmem, size = 0x10000, scoped, tag = 'scratch operand']
  #allocation4 [shape = 'f32[128,16]{1,0:T(8,128)}', space=vmem, size = 0x10000, scoped, tag = 'scratch operand']
  #allocation5 [shape = 'f32[128,16]{1,0:T(8,128)}', space=vmem, size = 0x10000, scoped, tag = 'scratch operand']
  #allocation6 [shape = 'f32[128,16]{1,0:T(8,128)}', space=vmem, size = 0x10000, scoped, tag = 'scratch operand']
  #allocation7 [shape = 'f32[128,16]{1,0:T(8,128)}', space=vmem, size = 0x10000, scoped, tag = 'scratch operand']
  #allocation8 [shape = 'f32[16,16]{1,0:T(8,128)}', space=vmem, size = 0x2000, scoped, tag = 'scratch operand']
  %s0 = inlined_call_operand.vmem [shape: f32[2,256,8], index: 0, kind: input, shape index: {}, may-alias: {0,11}]
  %s1 = inlined_call_operand.vmem [shape: f32[1,8], index: 1, kind: input, shape index: {}]
  %s2 = inlined_call_operand.vmem [shape: bf16[8,32], index: 2, kind: input, shape index: {}]
  %s3 = inlined_call_operand.vmem [shape: f32[4,16], index: 3, kind: input, shape index: {}]
  %s4 = inlined_call_operand.vmem [shape: f32[1,16], index: 4, kind: input, shape index: {}]
  %s5 = inlined_call_operand.vmem [shape: bf16[16,128], index: 5, kind: input, shape index: {}]
  %s6 = inlined_call_operand.vmem [shape: bf16[1,16], index: 6, kind: input, shape index: {}]
  %s7 = inlined_call_operand.vmem [shape: f32[1,16], index: 7, kind: input, shape index: {}]
  %s8 = inlined_call_operand.vmem [shape: f32[16,16], index: 8, kind: input, shape index: {}]
  %s9 = inlined_call_operand.vmem [shape: f32[1,16], index: 9, kind: input, shape index: {}]
  %s10 = inlined_call_operand.vmem [shape: bf16[16,8], index: 10, kind: input, shape index: {}]
  %s11 = inlined_call_operand.vmem [shape: f32[2,256,8], index: 11, kind: output, shape index: {}, may-alias: {0,11}]
  %s12 = sld [smem:[#allocation0]]
  $region88: #{mamba_layers_forward.2} parent=0
    _
  %s14 = ssub.s32 1, %s12
  %s15 = scalar_select 0, %s14, %s12
  loop: start=0, step=1, limit=6
  $region2: #{mamba_layers_forward.2} parent=0 // loop_pre_header
    _
  $region3: #{mamba_layers_forward.2} parent=0 // loop_header
    %s17 = sphi 0, %s21
    %p18 = scmp.ge.s32.totalorder %s17, 6
    %s24 = sphi 0, %s36
    %s25 = sphi 0, %s32
    %s26 = sphi 0, %s24
    %s27 = sphi 0, %s25
    %s28 = sphi 0, %s26
    %s29 = sphi 0, %s27
    %s41 = sphi 0, %s43
    %s44 = sphi 0, %s41
    %s45 = sphi 0, %s44
    %s61 = sphi 0, %s45
    %s65 = sphi 0, %s65
    %s67 = sphi 0, %s65
    %s68 = sphi 0, %s67
    %s82 = sphi 0, %s68
    %s86 = sphi 0, %s86
    %s88 = sphi 0, %s86
    %s89 = sphi 0, %s88
    %s103 = sphi 0, %s89
    %s107 = sphi 0, %s107
    %s109 = sphi 0, %s107
    %s110 = sphi 0, %s109
    %s124 = sphi 0, %s110
    %s128 = sphi 0, %s128
    %s130 = sphi 0, %s128
    %s131 = sphi 0, %s130
    %s145 = sphi 0, %s131
    %s149 = sphi 0, %s149
    %s151 = sphi 0, %s149
    %s152 = sphi 0, %s151
    %s166 = sphi 0, %s152
    %s170 = sphi 0, %s170
    %s172 = sphi 0, %s170
    %s173 = sphi 0, %s172
    %s187 = sphi 0, %s173
    %s191 = sphi 0, %s191
    %s193 = sphi 0, %s191
    %s194 = sphi 0, %s193
    %s208 = sphi 0, %s194
    %s212 = sphi 0, %s212
    %s214 = sphi 0, %s212
    %s215 = sphi 0, %s214
    %s229 = sphi 0, %s215
    %s233 = sphi 0, %s233
    %s235 = sphi 0, %s233
    %s236 = sphi 0, %s235
    %s250 = sphi 0, %s236
    %s254 = sphi 0, %s254
    %s256 = sphi 0, %s254
    %s257 = sphi 0, %s256
    %s271 = sphi 0, %s257
    %s279 = sphi 0, %s281
    %s282 = sphi 0, %s279
    %s283 = sphi 0, %s282
    %s299 = sphi 0, %s283
  $region4: #{mamba_layers_forward.2} parent=0 // loop_header_branch
    %20 = sbr.rel (%p18) target = $region8
  $region5: #{mamba_layers_forward.2} parent=0 // loop_body
    %s22 = ssub.s32 %s17, 1
    %s23 = ssub.s32 %s17, 2
    %s30 = sadd.s32 1, %s25
    %p31 = scmp.ge.s32.totalorder %s30, 2
    %s32 = scalar_select %p31, 0, %s30
    %s33 = sadd.s32 1, %s24
    %s34 = scalar_select %p31, %s33, %s24
    %p35 = scmp.ge.s32.totalorder %s34, 2
    %s36 = scalar_select %p35, 0, %s34
    %s37 = ssub.s32 %s24, %s36
    %s38 = ssub.s32 %s25, %s32
    %s39 = sor.u32 %s37, %s38
    %p40 = scmp.eq.s32.totalorder %s39, 0
    %s42 = sadd.s32 %s41, 1
    %s43 = scalar_select %p40, %s41, %s42
    %p46 = pneg %p40
    %p47 = scmp.eq.s32.totalorder %s17, 3
    %p48 = por %p46, %p47
    %p49 = scmp.ne.s32.totalorder %s41, %s44
    %p50 = scmp.eq.s32.totalorder %s17, 0
    %p51 = por %p49, %p50
    %p52 = scmp.ne.s32.totalorder %s41, %s44
    %p53 = scmp.eq.s32.totalorder %s22, 3
    %p54 = por %p52, %p53
    %p55 = scmp.ne.s32.totalorder %s44, %s45
    %p56 = scmp.eq.s32.totalorder %s22, 0
    %p57 = por %p55, %p56
    %p58 = scmp.ne.s32.totalorder %s44, %s45
    %p59 = scmp.eq.s32.totalorder %s23, 3
    %p60 = por %p58, %p59
    %p62 = scmp.ne.s32.totalorder %s45, %s61
    %p63 = scmp.eq.s32.totalorder %s23, 0
    %p64 = por %p62, %p63
    %s66 = sadd.s32 %s65, 1
    %p69 = scmp.eq.s32.totalorder %s17, 3
    %p70 = scmp.ne.s32.totalorder %s65, %s67
    %p71 = scmp.eq.s32.totalorder %s17, 0
    %p72 = por %p70, %p71
    %p73 = scmp.ne.s32.totalorder %s65, %s67
    %p74 = scmp.eq.s32.totalorder %s22, 3
    %p75 = por %p73, %p74
    %p76 = scmp.ne.s32.totalorder %s67, %s68
    %p77 = scmp.eq.s32.totalorder %s22, 0
    %p78 = por %p76, %p77
    %p79 = scmp.ne.s32.totalorder %s67, %s68
    %p80 = scmp.eq.s32.totalorder %s23, 3
    %p81 = por %p79, %p80
    %p83 = scmp.ne.s32.totalorder %s68, %s82
    %p84 = scmp.eq.s32.totalorder %s23, 0
    %p85 = por %p83, %p84
    %s87 = sadd.s32 %s86, 1
    %p90 = scmp.eq.s32.totalorder %s17, 3
    %p91 = scmp.ne.s32.totalorder %s86, %s88
    %p92 = scmp.eq.s32.totalorder %s17, 0
    %p93 = por %p91, %p92
    %p94 = scmp.ne.s32.totalorder %s86, %s88
    %p95 = scmp.eq.s32.totalorder %s22, 3
    %p96 = por %p94, %p95
    %p97 = scmp.ne.s32.totalorder %s88, %s89
    %p98 = scmp.eq.s32.totalorder %s22, 0
    %p99 = por %p97, %p98
    %p100 = scmp.ne.s32.totalorder %s88, %s89
    %p101 = scmp.eq.s32.totalorder %s23, 3
    %p102 = por %p100, %p101
    %p104 = scmp.ne.s32.totalorder %s89, %s103
    %p105 = scmp.eq.s32.totalorder %s23, 0
    %p106 = por %p104, %p105
    %s108 = sadd.s32 %s107, 1
    %p111 = scmp.eq.s32.totalorder %s17, 3
    %p112 = scmp.ne.s32.totalorder %s107, %s109
    %p113 = scmp.eq.s32.totalorder %s17, 0
    %p114 = por %p112, %p113
    %p115 = scmp.ne.s32.totalorder %s107, %s109
    %p116 = scmp.eq.s32.totalorder %s22, 3
    %p117 = por %p115, %p116
    %p118 = scmp.ne.s32.totalorder %s109, %s110
    %p119 = scmp.eq.s32.totalorder %s22, 0
    %p120 = por %p118, %p119
    %p121 = scmp.ne.s32.totalorder %s109, %s110
    %p122 = scmp.eq.s32.totalorder %s23, 3
    %p123 = por %p121, %p122
    %p125 = scmp.ne.s32.totalorder %s110, %s124
    %p126 = scmp.eq.s32.totalorder %s23, 0
    %p127 = por %p125, %p126
    %s129 = sadd.s32 %s128, 1
    %p132 = scmp.eq.s32.totalorder %s17, 3
    %p133 = scmp.ne.s32.totalorder %s128, %s130
    %p134 = scmp.eq.s32.totalorder %s17, 0
    %p135 = por %p133, %p134
    %p136 = scmp.ne.s32.totalorder %s128, %s130
    %p137 = scmp.eq.s32.totalorder %s22, 3
    %p138 = por %p136, %p137
    %p139 = scmp.ne.s32.totalorder %s130, %s131
    %p140 = scmp.eq.s32.totalorder %s22, 0
    %p141 = por %p139, %p140
    %p142 = scmp.ne.s32.totalorder %s130, %s131
    %p143 = scmp.eq.s32.totalorder %s23, 3
    %p144 = por %p142, %p143
    %p146 = scmp.ne.s32.totalorder %s131, %s145
    %p147 = scmp.eq.s32.totalorder %s23, 0
    %p148 = por %p146, %p147
    %s150 = sadd.s32 %s149, 1
    %p153 = scmp.eq.s32.totalorder %s17, 3
    %p154 = scmp.ne.s32.totalorder %s149, %s151
    %p155 = scmp.eq.s32.totalorder %s17, 0
    %p156 = por %p154, %p155
    %p157 = scmp.ne.s32.totalorder %s149, %s151
    %p158 = scmp.eq.s32.totalorder %s22, 3
    %p159 = por %p157, %p158
    %p160 = scmp.ne.s32.totalorder %s151, %s152
    %p161 = scmp.eq.s32.totalorder %s22, 0
    %p162 = por %p160, %p161
    %p163 = scmp.ne.s32.totalorder %s151, %s152
    %p164 = scmp.eq.s32.totalorder %s23, 3
    %p165 = por %p163, %p164
    %p167 = scmp.ne.s32.totalorder %s152, %s166
    %p168 = scmp.eq.s32.totalorder %s23, 0
    %p169 = por %p167, %p168
    %s171 = sadd.s32 %s170, 1
    %p174 = scmp.eq.s32.totalorder %s17, 3
    %p175 = scmp.ne.s32.totalorder %s170, %s172
    %p176 = scmp.eq.s32.totalorder %s17, 0
    %p177 = por %p175, %p176
    %p178 = scmp.ne.s32.totalorder %s170, %s172
    %p179 = scmp.eq.s32.totalorder %s22, 3
    %p180 = por %p178, %p179
    %p181 = scmp.ne.s32.totalorder %s172, %s173
    %p182 = scmp.eq.s32.totalorder %s22, 0
    %p183 = por %p181, %p182
    %p184 = scmp.ne.s32.totalorder %s172, %s173
    %p185 = scmp.eq.s32.totalorder %s23, 3
    %p186 = por %p184, %p185
    %p188 = scmp.ne.s32.totalorder %s173, %s187
    %p189 = scmp.eq.s32.totalorder %s23, 0
    %p190 = por %p188, %p189
    %s192 = sadd.s32 %s191, 1
    %p195 = scmp.eq.s32.totalorder %s17, 3
    %p196 = scmp.ne.s32.totalorder %s191, %s193
    %p197 = scmp.eq.s32.totalorder %s17, 0
    %p198 = por %p196, %p197
    %p199 = scmp.ne.s32.totalorder %s191, %s193
    %p200 = scmp.eq.s32.totalorder %s22, 3
    %p201 = por %p199, %p200
    %p202 = scmp.ne.s32.totalorder %s193, %s194
    %p203 = scmp.eq.s32.totalorder %s22, 0
    %p204 = por %p202, %p203
    %p205 = scmp.ne.s32.totalorder %s193, %s194
    %p206 = scmp.eq.s32.totalorder %s23, 3
    %p207 = por %p205, %p206
    %p209 = scmp.ne.s32.totalorder %s194, %s208
    %p210 = scmp.eq.s32.totalorder %s23, 0
    %p211 = por %p209, %p210
    %s213 = sadd.s32 %s212, 1
    %p216 = scmp.eq.s32.totalorder %s17, 3
    %p217 = scmp.ne.s32.totalorder %s212, %s214
    %p218 = scmp.eq.s32.totalorder %s17, 0
    %p219 = por %p217, %p218
    %p220 = scmp.ne.s32.totalorder %s212, %s214
    %p221 = scmp.eq.s32.totalorder %s22, 3
    %p222 = por %p220, %p221
    %p223 = scmp.ne.s32.totalorder %s214, %s215
    %p224 = scmp.eq.s32.totalorder %s22, 0
    %p225 = por %p223, %p224
    %p226 = scmp.ne.s32.totalorder %s214, %s215
    %p227 = scmp.eq.s32.totalorder %s23, 3
    %p228 = por %p226, %p227
    %p230 = scmp.ne.s32.totalorder %s215, %s229
    %p231 = scmp.eq.s32.totalorder %s23, 0
    %p232 = por %p230, %p231
    %s234 = sadd.s32 %s233, 1
    %p237 = scmp.eq.s32.totalorder %s17, 3
    %p238 = scmp.ne.s32.totalorder %s233, %s235
    %p239 = scmp.eq.s32.totalorder %s17, 0
    %p240 = por %p238, %p239
    %p241 = scmp.ne.s32.totalorder %s233, %s235
    %p242 = scmp.eq.s32.totalorder %s22, 3
    %p243 = por %p241, %p242
    %p244 = scmp.ne.s32.totalorder %s235, %s236
    %p245 = scmp.eq.s32.totalorder %s22, 0
    %p246 = por %p244, %p245
    %p247 = scmp.ne.s32.totalorder %s235, %s236
    %p248 = scmp.eq.s32.totalorder %s23, 3
    %p249 = por %p247, %p248
    %p251 = scmp.ne.s32.totalorder %s236, %s250
    %p252 = scmp.eq.s32.totalorder %s23, 0
    %p253 = por %p251, %p252
    %s255 = sadd.s32 %s254, 1
    %p258 = scmp.eq.s32.totalorder %s17, 3
    %p259 = scmp.ne.s32.totalorder %s254, %s256
    %p260 = scmp.eq.s32.totalorder %s17, 0
    %p261 = por %p259, %p260
    %p262 = scmp.ne.s32.totalorder %s254, %s256
    %p263 = scmp.eq.s32.totalorder %s22, 3
    %p264 = por %p262, %p263
    %p265 = scmp.ne.s32.totalorder %s256, %s257
    %p266 = scmp.eq.s32.totalorder %s22, 0
    %p267 = por %p265, %p266
    %p268 = scmp.ne.s32.totalorder %s256, %s257
    %p269 = scmp.eq.s32.totalorder %s23, 3
    %p270 = por %p268, %p269
    %p272 = scmp.ne.s32.totalorder %s257, %s271
    %p273 = scmp.eq.s32.totalorder %s23, 0
    %p274 = por %p272, %p273
    %s275 = ssub.s32 %s24, %s36
    %s276 = ssub.s32 %s25, %s32
    %s277 = sor.u32 %s275, %s276
    %p278 = scmp.eq.s32.totalorder %s277, 0
    %s280 = sadd.s32 %s279, 1
    %s281 = scalar_select %p278, %s279, %s280
    %p284 = pneg %p278
    %p285 = scmp.eq.s32.totalorder %s17, 3
    %p286 = por %p284, %p285
    %p287 = scmp.ne.s32.totalorder %s279, %s282
    %p288 = scmp.eq.s32.totalorder %s17, 0
    %p289 = por %p287, %p288
    %p290 = scmp.ne.s32.totalorder %s279, %s282
    %p291 = scmp.eq.s32.totalorder %s22, 3
    %p292 = por %p290, %p291
    %p293 = scmp.ne.s32.totalorder %s282, %s283
    %p294 = scmp.eq.s32.totalorder %s22, 0
    %p295 = por %p293, %p294
    %p296 = scmp.ne.s32.totalorder %s282, %s283
    %p297 = scmp.eq.s32.totalorder %s23, 3
    %p298 = por %p296, %p297
    %p300 = scmp.ne.s32.totalorder %s283, %s299
    %p301 = scmp.eq.s32.totalorder %s23, 0
    %p302 = por %p300, %p301
    %p303 = scmp.le.s32.totalorder 1, %s17
    %p304 = scmp.lt.s32.totalorder %s17, 5
    %p305 = pnand %p303, %p304
    %p306 = pneg %p305
    // Predicated region
    $region9: #{mamba_layers_forward.2} parent=5 // pred_check
      _
    $region10: #{mamba_layers_forward.2} parent=5 // pred_check_branch
      %308 = sbr.rel (%p305) target = $region12
    $region11: #{mamba_layers_forward.2} parent=5 // pred_region
      %s309 = ssub.s32 %s17, 1
      // Predicated region
      $region13: #{mamba_layers_forward.2} parent=11 // pred_check
        %p310 = pneg %p78
      $region14: #{mamba_layers_forward.2} parent=11 // pred_check_branch
        %312 = sbr.rel (%p310) target = $region16
      $region15: #{mamba_layers_forward.2} parent=11 // pred_region
        _
      $region16: #{mamba_layers_forward.2} parent=11 // pred_fallthru
        _
      // Predicated region
      $region17: #{mamba_layers_forward.2} parent=11 // pred_check
        %p313 = pneg %p99
      $region18: #{mamba_layers_forward.2} parent=11 // pred_check_branch
        %315 = sbr.rel (%p313) target = $region20
      $region19: #{mamba_layers_forward.2} parent=11 // pred_region
        _
      $region20: #{mamba_layers_forward.2} parent=11 // pred_fallthru
        _
      // Predicated region
      $region21: #{mamba_layers_forward.2} parent=11 // pred_check
        %p316 = pneg %p120
      $region22: #{mamba_layers_forward.2} parent=11 // pred_check_branch
        %318 = sbr.rel (%p316) target = $region24
      $region23: #{mamba_layers_forward.2} parent=11 // pred_region
        _
      $region24: #{mamba_layers_forward.2} parent=11 // pred_fallthru
        _
      // Predicated region
      $region25: #{mamba_layers_forward.2} parent=11 // pred_check
        %p319 = pneg %p141
      $region26: #{mamba_layers_forward.2} parent=11 // pred_check_branch
        %321 = sbr.rel (%p319) target = $region28
      $region27: #{mamba_layers_forward.2} parent=11 // pred_region
        _
      $region28: #{mamba_layers_forward.2} parent=11 // pred_fallthru
        _
      // Predicated region
      $region29: #{mamba_layers_forward.2} parent=11 // pred_check
        %p322 = pneg %p162
      $region30: #{mamba_layers_forward.2} parent=11 // pred_check_branch
        %324 = sbr.rel (%p322) target = $region32
      $region31: #{mamba_layers_forward.2} parent=11 // pred_region
        _
      $region32: #{mamba_layers_forward.2} parent=11 // pred_fallthru
        _
      // Predicated region
      $region33: #{mamba_layers_forward.2} parent=11 // pred_check
        %p325 = pneg %p183
      $region34: #{mamba_layers_forward.2} parent=11 // pred_check_branch
        %327 = sbr.rel (%p325) target = $region36
      $region35: #{mamba_layers_forward.2} parent=11 // pred_region
        _
      $region36: #{mamba_layers_forward.2} parent=11 // pred_fallthru
        _
      // Predicated region
      $region37: #{mamba_layers_forward.2} parent=11 // pred_check
        %p328 = pneg %p204
      $region38: #{mamba_layers_forward.2} parent=11 // pred_check_branch
        %330 = sbr.rel (%p328) target = $region40
      $region39: #{mamba_layers_forward.2} parent=11 // pred_region
        _
      $region40: #{mamba_layers_forward.2} parent=11 // pred_fallthru
        _
      // Predicated region
      $region41: #{mamba_layers_forward.2} parent=11 // pred_check
        %p331 = pneg %p225
      $region42: #{mamba_layers_forward.2} parent=11 // pred_check_branch
        %333 = sbr.rel (%p331) target = $region44
      $region43: #{mamba_layers_forward.2} parent=11 // pred_region
        _
      $region44: #{mamba_layers_forward.2} parent=11 // pred_fallthru
        _
      // Predicated region
      $region45: #{mamba_layers_forward.2} parent=11 // pred_check
        %p334 = pneg %p246
      $region46: #{mamba_layers_forward.2} parent=11 // pred_check_branch
        %336 = sbr.rel (%p334) target = $region48
      $region47: #{mamba_layers_forward.2} parent=11 // pred_region
        _
      $region48: #{mamba_layers_forward.2} parent=11 // pred_fallthru
        _
      // Predicated region
      $region49: #{mamba_layers_forward.2} parent=11 // pred_check
        %p337 = pneg %p267
      $region50: #{mamba_layers_forward.2} parent=11 // pred_check_branch
        %339 = sbr.rel (%p337) target = $region52
      $region51: #{mamba_layers_forward.2} parent=11 // pred_region
        _
      $region52: #{mamba_layers_forward.2} parent=11 // pred_fallthru
        _
    $region12: #{mamba_layers_forward.2} parent=5 // pred_fallthru
      _
    %p340 = scmp.lt.s32.totalorder %s17, 4
    // Predicated region
    $region53: #{mamba_layers_forward.2} parent=5 // pred_check
      %p341 = pneg %p340
    $region54: #{mamba_layers_forward.2} parent=5 // pred_check_branch
      %343 = sbr.rel (%p341) target = $region56
    $region55: #{mamba_layers_forward.2} parent=5 // pred_region
      // Predicated region
      $region57: #{mamba_layers_forward.2} parent=55 // pred_check
        %p344 = pneg %p51
      $region58: #{mamba_layers_forward.2} parent=55 // pred_check_branch
        %346 = sbr.rel (%p344) target = $region60
      $region59: #{mamba_layers_forward.2} parent=55 // pred_region
        %s347 = smul.u32 16, %s25
        %p348 = scmp.lt.s32.totalorder %s24, 1
        %s349 = scalar_select %p348, %s24, 1
        %p350 = scmp.lt.s32.totalorder %s347, 31
        %s351 = scalar_select %p350, %s347, 31
        %s352 = smul.addr %s349, 32
        %s353 = sadd.s32 %s351, %s352
        %s354 = smul.addr %s353, 8
        %s355 = scalar_lea.vmem %s0, %s354
        %s356 = smul.u32 16, %s25
      $region60: #{mamba_layers_forward.2} parent=55 // pred_fallthru
        _
    $region56: #{mamba_layers_forward.2} parent=5 // pred_fallthru
      _
    %p357 = scmp.le.s32.totalorder 1, %s17
    %p358 = scmp.lt.s32.totalorder %s17, 5
    %p359 = pnand %p357, %p358
    %p360 = pneg %p359
    // Predicated region
    $region61: #{mamba_layers_forward.2} parent=5 // pred_check
      _
    $region62: #{mamba_layers_forward.2} parent=5 // pred_check_branch
      %362 = sbr.rel (%p359) target = $region64
    $region63: #{mamba_layers_forward.2} parent=5 // pred_region
      %s363 = ssub.s32 %s17, 1
      %s364 = smul.u32 16, %s27
      %p365 = scmp.lt.s32.totalorder %s26, 1
      %s366 = scalar_select %p365, %s26, 1
      %p367 = scmp.lt.s32.totalorder %s364, 31
      %s368 = scalar_select %p367, %s364, 31
      %s369 = smul.addr %s366, 32
      %s370 = sadd.s32 %s368, %s369
      %s371 = smul.addr %s370, 8
      %s372 = scalar_lea.vmem %s0, %s371
      %p373 = pneg %p57
      %p374 = pneg %p54
      %p375 = pneg %p78
      %p376 = pneg %p75
      %p377 = pneg %p99
      %p378 = pneg %p96
      %p379 = pneg %p120
      %p380 = pneg %p117
      %p381 = pneg %p141
      %p382 = pneg %p138
      %p383 = pneg %p162
      %p384 = pneg %p159
      %p385 = pneg %p183
      %p386 = pneg %p180
      %p387 = pneg %p204
      %p388 = pneg %p201
      %p389 = pneg %p225
      %p390 = pneg %p222
      %p391 = pneg %p246
      %p392 = pneg %p243
      %p393 = pneg %p267
      %p394 = pneg %p264
      %p395 = pneg %p295
      %p396 = pneg %p292
      %s397 = smul.u32 16, %s27
      %p398 = scmp.lt.s32.totalorder %s26, 1
      %s399 = scalar_select %p398, %s26, 1
      %p400 = scmp.lt.s32.totalorder %s397, 31
      %s401 = scalar_select %p400, %s397, 31
      %s402 = smul.addr %s399, 32
      %s403 = sadd.s32 %s401, %s402
      %s404 = smul.addr %s403, 8
      %s405 = scalar_lea.vmem %s11, %s404
      %s406 = smul.u32 16, %s27
      %p407 = scmp.lt.s32.totalorder %s26, 1
      %s408 = scalar_select %p407, %s26, 1
      %p409 = scmp.lt.s32.totalorder %s406, 31
      %s410 = scalar_select %p409, %s406, 31
      %s411 = smul.addr %s408, 32
      %s412 = sadd.s32 %s410, %s411
      %s413 = smul.addr %s412, 8
      %s414 = scalar_lea.vmem %s0, %s413
      %s415 = smul.u32 16, %s27
      %s416 = smul.u32 16, %s27
      %p417 = scmp.lt.s32.totalorder %s26, 1
      %s418 = scalar_select %p417, %s26, 1
      %p419 = scmp.lt.s32.totalorder %s416, 31
      %s420 = scalar_select %p419, %s416, 31
      %s421 = smul.addr %s418, 32
      %s422 = sadd.s32 %s420, %s421
      %s423 = smul.addr %s422, 8
      %s424 = scalar_lea.vmem %s11, %s423
      %s425 = smul.u32 16, %s27
      %p427 = scmp.eq.s32.totalorder %s27, 0
      // Predicated region
      $region65: #{mamba_layers_forward.2} parent=63 // pred_check
        %p428 = pneg %p427
      $region66: #{mamba_layers_forward.2} parent=63 // pred_check_branch
        %430 = sbr.rel (%p428) target = $region68
      $region67: #{mamba_layers_forward.2} parent=63 // pred_region
        %vm431 = vcmask 130048
        %432 = vst.msk [vmem:[#allocation8] sm:$0xff] %vm431, 0.0
        %433 = vst.msk [vmem:[#allocation8 + $0x8] sm:$0xff] %vm431, 0.0
        %434 = vst.msk [vmem:[#allocation2] sm:$0xff] %vm431, 0.0
      $region68: #{mamba_layers_forward.2} parent=63 // pred_fallthru
        _
      %v435 = vld [vmem:[%s414] sm:$0xff]
      %v436 = vld [vmem:[%s414 + $0x8] sm:$0xff]
      %v437 = vld [vmem:[%s414 + $0x10] sm:$0xff]
      %v438 = vld [vmem:[%s414 + $0x18] sm:$0xff]
      %v439 = vld [vmem:[%s414 + $0x20] sm:$0xff]
      %v440 = vld [vmem:[%s414 + $0x28] sm:$0xff]
      %v441 = vld [vmem:[%s414 + $0x30] sm:$0xff]
      %v442 = vld [vmem:[%s414 + $0x38] sm:$0xff]
      %v443 = vld [vmem:[%s414 + $0x40] sm:$0xff]
      %v444 = vld [vmem:[%s414 + $0x48] sm:$0xff]
      %v445 = vld [vmem:[%s414 + $0x50] sm:$0xff]
      %v446 = vld [vmem:[%s414 + $0x58] sm:$0xff]
      %v447 = vld [vmem:[%s414 + $0x60] sm:$0xff]
      %v448 = vld [vmem:[%s414 + $0x68] sm:$0xff]
      %v449 = vld [vmem:[%s414 + $0x70] sm:$0xff]
      %v450 = vld [vmem:[%s414 + $0x78] sm:$0xff]
      %v451 = vmul.f32 %v435, %v435
      %v452 = vmul.f32 %v436, %v436
      %v453 = vmul.f32 %v437, %v437
      %v454 = vmul.f32 %v438, %v438
      %v455 = vmul.f32 %v439, %v439
      %v456 = vmul.f32 %v440, %v440
      %v457 = vmul.f32 %v441, %v441
      %v458 = vmul.f32 %v442, %v442
      %v459 = vmul.f32 %v443, %v443
      %v460 = vmul.f32 %v444, %v444
      %v461 = vmul.f32 %v445, %v445
      %v462 = vmul.f32 %v446, %v446
      %v463 = vmul.f32 %v447, %v447
      %v464 = vmul.f32 %v448, %v448
      %v465 = vmul.f32 %v449, %v449
      %v466 = vmul.f32 %v450, %v450
      %vm467 = vcmask 64512
      %v468 = vsel %vm467, %v451, 0.0
      %469 = vadd.xlane.f32.xlu0 %v468
      %v470 = vpop.xlane.xlu0 %469
      %v471 = vsel %vm467, %v452, 0.0
      %472 = vadd.xlane.f32.xlu0 %v471
      %v473 = vpop.xlane.xlu0 %472
      %v474 = vsel %vm467, %v453, 0.0
      %475 = vadd.xlane.f32.xlu0 %v474
      %v476 = vpop.xlane.xlu0 %475
      %v477 = vsel %vm467, %v454, 0.0
      %478 = vadd.xlane.f32.xlu0 %v477
      %v479 = vpop.xlane.xlu0 %478
      %v480 = vsel %vm467, %v455, 0.0
      %481 = vadd.xlane.f32.xlu0 %v480
      %v482 = vpop.xlane.xlu0 %481
      %v483 = vsel %vm467, %v456, 0.0
      %484 = vadd.xlane.f32.xlu0 %v483
      %v485 = vpop.xlane.xlu0 %484
      %v486 = vsel %vm467, %v457, 0.0
      %487 = vadd.xlane.f32.xlu0 %v486
      %v488 = vpop.xlane.xlu0 %487
      %v489 = vsel %vm467, %v458, 0.0
      %490 = vadd.xlane.f32.xlu0 %v489
      %v491 = vpop.xlane.xlu0 %490
      %v492 = vsel %vm467, %v459, 0.0
      %493 = vadd.xlane.f32.xlu0 %v492
      %v494 = vpop.xlane.xlu0 %493
      %v495 = vsel %vm467, %v460, 0.0
      %496 = vadd.xlane.f32.xlu0 %v495
      %v497 = vpop.xlane.xlu0 %496
      %v498 = vsel %vm467, %v461, 0.0
      %499 = vadd.xlane.f32.xlu0 %v498
      %v500 = vpop.xlane.xlu0 %499
      %v501 = vsel %vm467, %v462, 0.0
      %502 = vadd.xlane.f32.xlu0 %v501
      %v503 = vpop.xlane.xlu0 %502
      %v504 = vsel %vm467, %v463, 0.0
      %505 = vadd.xlane.f32.xlu0 %v504
      %v506 = vpop.xlane.xlu0 %505
      %v507 = vsel %vm467, %v464, 0.0
      %508 = vadd.xlane.f32.xlu0 %v507
      %v509 = vpop.xlane.xlu0 %508
      %v510 = vsel %vm467, %v465, 0.0
      %511 = vadd.xlane.f32.xlu0 %v510
      %v512 = vpop.xlane.xlu0 %511
      %v513 = vsel %vm467, %v466, 0.0
      %514 = vadd.xlane.f32.xlu0 %v513
      %v515 = vpop.xlane.xlu0 %514
      %v516 = vrcp.pop 8.0
      %v517 = vmul.f32 %v470, %v516
      %v518 = vmul.f32 %v473, %v516
      %v519 = vmul.f32 %v476, %v516
      %v520 = vmul.f32 %v479, %v516
      %v521 = vmul.f32 %v482, %v516
      %v522 = vmul.f32 %v485, %v516
      %v523 = vmul.f32 %v488, %v516
      %v524 = vmul.f32 %v491, %v516
      %v525 = vmul.f32 %v494, %v516
      %v526 = vmul.f32 %v497, %v516
      %v527 = vmul.f32 %v500, %v516
      %v528 = vmul.f32 %v503, %v516
      %v529 = vmul.f32 %v506, %v516
      %v530 = vmul.f32 %v509, %v516
      %v531 = vmul.f32 %v512, %v516
      %v532 = vmul.f32 %v515, %v516
      %v533 = vadd.f32 %v517, 1e-05
      %v534 = vadd.f32 %v518, 1e-05
      %v535 = vadd.f32 %v519, 1e-05
      %v536 = vadd.f32 %v520, 1e-05
      %v537 = vadd.f32 %v521, 1e-05
      %v538 = vadd.f32 %v522, 1e-05
      %v539 = vadd.f32 %v523, 1e-05
      %v540 = vadd.f32 %v524, 1e-05
      %v541 = vadd.f32 %v525, 1e-05
      %v542 = vadd.f32 %v526, 1e-05
      %v543 = vadd.f32 %v527, 1e-05
      %v544 = vadd.f32 %v528, 1e-05
      %v545 = vadd.f32 %v529, 1e-05
      %v546 = vadd.f32 %v530, 1e-05
      %v547 = vadd.f32 %v531, 1e-05
      %v548 = vadd.f32 %v532, 1e-05
      %v549 = vrsqrt.pop %v533
      %v550 = vrsqrt.pop %v534
      %v551 = vrsqrt.pop %v535
      %v552 = vrsqrt.pop %v536
      %v553 = vrsqrt.pop %v537
      %v554 = vrsqrt.pop %v538
      %v555 = vrsqrt.pop %v539
      %v556 = vrsqrt.pop %v540
      %v557 = vrsqrt.pop %v541
      %v558 = vrsqrt.pop %v542
      %v559 = vrsqrt.pop %v543
      %v560 = vrsqrt.pop %v544
      %v561 = vrsqrt.pop %v545
      %v562 = vrsqrt.pop %v546
      %v563 = vrsqrt.pop %v547
      %v564 = vrsqrt.pop %v548
      %v565 = vmul.f32 %v435, %v549
      %v566 = vmul.f32 %v436, %v550
      %v567 = vmul.f32 %v437, %v551
      %v568 = vmul.f32 %v438, %v552
      %v569 = vmul.f32 %v439, %v553
      %v570 = vmul.f32 %v440, %v554
      %v571 = vmul.f32 %v441, %v555
      %v572 = vmul.f32 %v442, %v556
      %v573 = vmul.f32 %v443, %v557
      %v574 = vmul.f32 %v444, %v558
      %v575 = vmul.f32 %v445, %v559
      %v576 = vmul.f32 %v446, %v560
      %v577 = vmul.f32 %v447, %v561
      %v578 = vmul.f32 %v448, %v562
      %v579 = vmul.f32 %v449, %v563
      %v580 = vmul.f32 %v450, %v564
      %v581 = vld [vmem:[%s1] sm:$0x1]
      %v583 = vlaneseq
      %v584 = vshrl.u32 %v583, 7
      %v585 = vsub.s32 0, %v584
      %v586 = vrot.slane %v581, %v585
      %v588 = vmul.f32 %v565, %v586
      %v589 = vmul.f32 %v566, %v586
      %v590 = vmul.f32 %v567, %v586
      %v591 = vmul.f32 %v568, %v586
      %v592 = vmul.f32 %v569, %v586
      %v593 = vmul.f32 %v570, %v586
      %v594 = vmul.f32 %v571, %v586
      %v595 = vmul.f32 %v572, %v586
      %v596 = vmul.f32 %v573, %v586
      %v597 = vmul.f32 %v574, %v586
      %v598 = vmul.f32 %v575, %v586
      %v599 = vmul.f32 %v576, %v586
      %v600 = vmul.f32 %v577, %v586
      %v601 = vmul.f32 %v578, %v586
      %v602 = vmul.f32 %v579, %v586
      %v603 = vmul.f32 %v580, %v586
      %v604 = vpack.c.bf16 %v589, %v588
      %v605 = vpack.c.bf16 %v591, %v590
      %v606 = vpack.c.bf16 %v593, %v592
      %v607 = vpack.c.bf16 %v595, %v594
      %v608 = vpack.c.bf16 %v597, %v596
      %v609 = vpack.c.bf16 %v599, %v598
      %v610 = vpack.c.bf16 %v601, %v600
      %v611 = vpack.c.bf16 %v603, %v602
      %v612 = vld [vmem:[%s2] sm:$0xf]
      %v614 = vsel %vm467, %v604, 0
      %v617 = vsel %vm467, %v605, 0
      %v620 = vsel %vm467, %v606, 0
      %v623 = vsel %vm467, %v607, 0
      %v626 = vsel %vm467, %v608, 0
      %v629 = vsel %vm467, %v609, 0
      %v632 = vsel %vm467, %v610, 0
      %v635 = vsel %vm467, %v611, 0
      %vm637 = vcmask 1043456
      %v639 = vsel %vm637, %v612, 0
      %641 = vmatprep.subr.bf16.mxu0 0
      %642 = vmatpush1.bf16.msra.mxu0 0
      %643 = vmatprep.subr.bf16.mxu0 0
      %644 = vmatpush1.bf16.msra.mxu0 0
      %645 = vmatprep.subr.bf16.mxu0 0
      %646 = vmatpush1.bf16.msra.mxu0 0
      %647 = vmatprep.subr.bf16.mxu0 0
      %648 = vmatpush1.bf16.msra.mxu0 0
      %649 = vmatprep.subr.bf16.mxu0 0
      %650 = vmatpush1.bf16.msra.mxu0 0
      %651 = vmatprep.subr.bf16.mxu0 0
      %652 = vmatpush1.bf16.msra.mxu0 0
      %653 = vmatprep.subr.bf16.mxu0 0
      %654 = vmatpush1.bf16.msra.mxu0 0
      %655 = vmatprep.subr.bf16.mxu0 0
      %656 = vmatpush1.bf16.msra.mxu0 %v639
      %657 = vmatprep.subr.bf16.mxu0 0
      %658 = vmatpush2.bf16.msra.mxu0 0
      %659 = vmatprep.subr.bf16.mxu0 0
      %660 = vmatpush2.bf16.msra.mxu0 0
      %661 = vmatprep.subr.bf16.mxu0 0
      %662 = vmatpush2.bf16.msra.mxu0 0
      %663 = vmatprep.subr.bf16.mxu0 0
      %664 = vmatpush2.bf16.msra.mxu0 0
      %665 = vmatprep.subr.bf16.mxu0 0
      %666 = vmatpush2.bf16.msra.mxu0 0
      %667 = vmatprep.subr.bf16.mxu0 0
      %668 = vmatpush2.bf16.msra.mxu0 0
      %669 = vmatprep.subr.bf16.mxu0 0
      %670 = vmatpush2.bf16.msra.mxu0 0
      %671 = vmatprep.subr.bf16.mxu0 0
      %672 = vmatpush2.bf16.msra.mxu0 0
      %673 = vmatprep.mubr.bf16.mxu0 0
      %674 = vmatmul.mubr.bf16.gmra.mxu0 %v614
      %v675 = vpop.f32.mrf.mxu0
      %v676 = vadd.f32 0.0, %v675
      %v677 = vpop.f32.mrf.mxu0
      %v678 = vpop.f32.mrf.mxu0
      %v679 = vadd.f32 0.0, %v678
      %v680 = vpop.f32.mrf.mxu0
      %681 = vmatprep.mubr.bf16.mxu0 0
      %682 = vmatmul.mubr.bf16.gmra.mxu0 %v617
      %v683 = vpop.f32.mrf.mxu0
      %v684 = vadd.f32 0.0, %v683
      %v685 = vpop.f32.mrf.mxu0
      %v686 = vpop.f32.mrf.mxu0
      %v687 = vadd.f32 0.0, %v686
      %v688 = vpop.f32.mrf.mxu0
      %689 = vmatprep.mubr.bf16.mxu0 0
      %690 = vmatmul.mubr.bf16.gmra.mxu0 %v620
      %v691 = vpop.f32.mrf.mxu0
      %v692 = vadd.f32 0.0, %v691
      %v693 = vpop.f32.mrf.mxu0
      %v694 = vpop.f32.mrf.mxu0
      %v695 = vadd.f32 0.0, %v694
      %v696 = vpop.f32.mrf.mxu0
      %697 = vmatprep.mubr.bf16.mxu0 0
      %698 = vmatmul.mubr.bf16.gmra.mxu0 %v623
      %v699 = vpop.f32.mrf.mxu0
      %v700 = vadd.f32 0.0, %v699
      %v701 = vpop.f32.mrf.mxu0
      %v702 = vpop.f32.mrf.mxu0
      %v703 = vadd.f32 0.0, %v702
      %v704 = vpop.f32.mrf.mxu0
      %705 = vmatprep.mubr.bf16.mxu0 0
      %706 = vmatmul.mubr.bf16.gmra.mxu0 %v626
      %v707 = vpop.f32.mrf.mxu0
      %v708 = vadd.f32 0.0, %v707
      %v709 = vpop.f32.mrf.mxu0
      %v710 = vpop.f32.mrf.mxu0
      %v711 = vadd.f32 0.0, %v710
      %v712 = vpop.f32.mrf.mxu0
      %713 = vmatprep.mubr.bf16.mxu0 0
      %714 = vmatmul.mubr.bf16.gmra.mxu0 %v629
      %v715 = vpop.f32.mrf.mxu0
      %v716 = vadd.f32 0.0, %v715
      %v717 = vpop.f32.mrf.mxu0
      %v718 = vpop.f32.mrf.mxu0
      %v719 = vadd.f32 0.0, %v718
      %v720 = vpop.f32.mrf.mxu0
      %721 = vmatprep.mubr.bf16.mxu0 0
      %722 = vmatmul.mubr.bf16.gmra.mxu0 %v632
      %v723 = vpop.f32.mrf.mxu0
      %v724 = vadd.f32 0.0, %v723
      %v725 = vpop.f32.mrf.mxu0
      %v726 = vpop.f32.mrf.mxu0
      %v727 = vadd.f32 0.0, %v726
      %v728 = vpop.f32.mrf.mxu0
      %729 = vmatprep.mubr.bf16.mxu0 0
      %730 = vmatmul.mubr.bf16.gmra.mxu0 %v635
      %v731 = vpop.f32.mrf.mxu0
      %v732 = vadd.f32 0.0, %v731
      %v733 = vpop.f32.mrf.mxu0
      %v734 = vpop.f32.mrf.mxu0
      %v735 = vadd.f32 0.0, %v734
      %v736 = vpop.f32.mrf.mxu0
      %737 = vdwg.mxu0
      %vm738 = vcmask 130048
      %739 = vst.msk [vmem:[#allocation2 + $0x8] sm:$0xff] %vm738, %v676
      %740 = vst.msk [vmem:[#allocation2 + $0x10] sm:$0xff] %vm738, %v679
      %741 = vst.msk [vmem:[#allocation2 + $0x18] sm:$0xff] %vm738, %v684
      %742 = vst.msk [vmem:[#allocation2 + $0x20] sm:$0xff] %vm738, %v687
      %743 = vst.msk [vmem:[#allocation2 + $0x28] sm:$0xff] %vm738, %v692
      %744 = vst.msk [vmem:[#allocation2 + $0x30] sm:$0xff] %vm738, %v695
      %745 = vst.msk [vmem:[#allocation2 + $0x38] sm:$0xff] %vm738, %v700
      %746 = vst.msk [vmem:[#allocation2 + $0x40] sm:$0xff] %vm738, %v703
      %747 = vst.msk [vmem:[#allocation2 + $0x48] sm:$0xff] %vm738, %v708
      %748 = vst.msk [vmem:[#allocation2 + $0x50] sm:$0xff] %vm738, %v711
      %749 = vst.msk [vmem:[#allocation2 + $0x58] sm:$0xff] %vm738, %v716
      %750 = vst.msk [vmem:[#allocation2 + $0x60] sm:$0xff] %vm738, %v719
      %751 = vst.msk [vmem:[#allocation2 + $0x68] sm:$0xff] %vm738, %v724
      %752 = vst.msk [vmem:[#allocation2 + $0x70] sm:$0xff] %vm738, %v727
      %753 = vst.msk [vmem:[#allocation2 + $0x78] sm:$0xff] %vm738, %v732
      %754 = vst.msk [vmem:[#allocation2 + $0x80] sm:$0xff] %vm738, %v735
      %v755 = vld [vmem:[#allocation2 + $0x5] sm:$0xff]
      %v756 = vld [vmem:[#allocation2 + $0xd] sm:$0xff]
      %v757 = vld [vmem:[#allocation2 + $0x15] sm:$0xff]
      %v758 = vld [vmem:[#allocation2 + $0x1d] sm:$0xff]
      %v759 = vld [vmem:[#allocation2 + $0x25] sm:$0xff]
      %v760 = vld [vmem:[#allocation2 + $0x2d] sm:$0xff]
      %v761 = vld [vmem:[#allocation2 + $0x35] sm:$0xff]
      %v762 = vld [vmem:[#allocation2 + $0x3d] sm:$0xff]
      %v763 = vld [vmem:[#allocation2 + $0x45] sm:$0xff]
      %v764 = vld [vmem:[#allocation2 + $0x4d] sm:$0xff]
      %v765 = vld [vmem:[#allocation2 + $0x55] sm:$0xff]
      %v766 = vld [vmem:[#allocation2 + $0x5d] sm:$0xff]
      %v767 = vld [vmem:[#allocation2 + $0x65] sm:$0xff]
      %v768 = vld [vmem:[#allocation2 + $0x6d] sm:$0xff]
      %v769 = vld [vmem:[#allocation2 + $0x75] sm:$0xff]
      %v770 = vld [vmem:[#allocation2 + $0x7d] sm:$0xff]
      %v771 = vld [vmem:[%s3] sm:$0x1]
      %v772 = vlaneseq
      %v773 = vshrl.u32 %v772, 7
      %v774 = vsub.s32 0, %v773
      %v775 = vrot.slane %v771, %v774
      %v776 = vmul.f32 %v755, %v775
      %v777 = vmul.f32 %v756, %v775
      %v778 = vmul.f32 %v757, %v775
      %v779 = vmul.f32 %v758, %v775
      %v780 = vmul.f32 %v759, %v775
      %v781 = vmul.f32 %v760, %v775
      %v782 = vmul.f32 %v761, %v775
      %v783 = vmul.f32 %v762, %v775
      %v784 = vmul.f32 %v763, %v775
      %v785 = vmul.f32 %v764, %v775
      %v786 = vmul.f32 %v765, %v775
      %v787 = vmul.f32 %v766, %v775
      %v788 = vmul.f32 %v767, %v775
      %v789 = vmul.f32 %v768, %v775
      %v790 = vmul.f32 %v769, %v775
      %v791 = vmul.f32 %v770, %v775
      %v792 = vld [vmem:[#allocation2 + $0x6] sm:$0xff]
      %v793 = vld [vmem:[#allocation2 + $0xe] sm:$0xff]
      %v794 = vld [vmem:[#allocation2 + $0x16] sm:$0xff]
      %v795 = vld [vmem:[#allocation2 + $0x1e] sm:$0xff]
      %v796 = vld [vmem:[#allocation2 + $0x26] sm:$0xff]
      %v797 = vld [vmem:[#allocation2 + $0x2e] sm:$0xff]
      %v798 = vld [vmem:[#allocation2 + $0x36] sm:$0xff]
      %v799 = vld [vmem:[#allocation2 + $0x3e] sm:$0xff]
      %v800 = vld [vmem:[#allocation2 + $0x46] sm:$0xff]
      %v801 = vld [vmem:[#allocation2 + $0x4e] sm:$0xff]
      %v802 = vld [vmem:[#allocation2 + $0x56] sm:$0xff]
      %v803 = vld [vmem:[#allocation2 + $0x5e] sm:$0xff]
      %v804 = vld [vmem:[#allocation2 + $0x66] sm:$0xff]
      %v805 = vld [vmem:[#allocation2 + $0x6e] sm:$0xff]
      %v806 = vld [vmem:[#allocation2 + $0x76] sm:$0xff]
      %v807 = vld [vmem:[#allocation2 + $0x7e] sm:$0xff]
      %v808 = vld [vmem:[%s3 + $0x1] sm:$0x1]
      %v809 = vlaneseq
      %v810 = vshrl.u32 %v809, 7
      %v811 = vsub.s32 0, %v810
      %v812 = vrot.slane %v808, %v811
      %v813 = vmul.f32 %v792, %v812
      %v814 = vmul.f32 %v793, %v812
      %v815 = vmul.f32 %v794, %v812
      %v816 = vmul.f32 %v795, %v812
      %v817 = vmul.f32 %v796, %v812
      %v818 = vmul.f32 %v797, %v812
      %v819 = vmul.f32 %v798, %v812
      %v820 = vmul.f32 %v799, %v812
      %v821 = vmul.f32 %v800, %v812
      %v822 = vmul.f32 %v801, %v812
      %v823 = vmul.f32 %v802, %v812
      %v824 = vmul.f32 %v803, %v812
      %v825 = vmul.f32 %v804, %v812
      %v826 = vmul.f32 %v805, %v812
      %v827 = vmul.f32 %v806, %v812
      %v828 = vmul.f32 %v807, %v812
      %v829 = vadd.f32 %v776, %v813
      %v830 = vadd.f32 %v777, %v814
      %v831 = vadd.f32 %v778, %v815
      %v832 = vadd.f32 %v779, %v816
      %v833 = vadd.f32 %v780, %v817
      %v834 = vadd.f32 %v781, %v818
      %v835 = vadd.f32 %v782, %v819
      %v836 = vadd.f32 %v783, %v820
      %v837 = vadd.f32 %v784, %v821
      %v838 = vadd.f32 %v785, %v822
      %v839 = vadd.f32 %v786, %v823
      %v840 = vadd.f32 %v787, %v824
      %v841 = vadd.f32 %v788, %v825
      %v842 = vadd.f32 %v789, %v826
      %v843 = vadd.f32 %v790, %v827
      %v844 = vadd.f32 %v791, %v828
      %v845 = vld [vmem:[#allocation2 + $0x7] sm:$0xff]
      %v846 = vld [vmem:[#allocation2 + $0xf] sm:$0xff]
      %v847 = vld [vmem:[#allocation2 + $0x17] sm:$0xff]
      %v848 = vld [vmem:[#allocation2 + $0x1f] sm:$0xff]
      %v849 = vld [vmem:[#allocation2 + $0x27] sm:$0xff]
      %v850 = vld [vmem:[#allocation2 + $0x2f] sm:$0xff]
      %v851 = vld [vmem:[#allocation2 + $0x37] sm:$0xff]
      %v852 = vld [vmem:[#allocation2 + $0x3f] sm:$0xff]
      %v853 = vld [vmem:[#allocation2 + $0x47] sm:$0xff]
      %v854 = vld [vmem:[#allocation2 + $0x4f] sm:$0xff]
      %v855 = vld [vmem:[#allocation2 + $0x57] sm:$0xff]
      %v856 = vld [vmem:[#allocation2 + $0x5f] sm:$0xff]
      %v857 = vld [vmem:[#allocation2 + $0x67] sm:$0xff]
      %v858 = vld [vmem:[#allocation2 + $0x6f] sm:$0xff]
      %v859 = vld [vmem:[#allocation2 + $0x77] sm:$0xff]
      %v860 = vld [vmem:[#allocation2 + $0x7f] sm:$0xff]
      %v861 = vld [vmem:[%s3 + $0x2] sm:$0x1]
      %v862 = vlaneseq
      %v863 = vshrl.u32 %v862, 7
      %v864 = vsub.s32 0, %v863
      %v865 = vrot.slane %v861, %v864
      %v866 = vmul.f32 %v845, %v865
      %v867 = vmul.f32 %v846, %v865
      %v868 = vmul.f32 %v847, %v865
      %v869 = vmul.f32 %v848, %v865
      %v870 = vmul.f32 %v849, %v865
      %v871 = vmul.f32 %v850, %v865
      %v872 = vmul.f32 %v851, %v865
      %v873 = vmul.f32 %v852, %v865
      %v874 = vmul.f32 %v853, %v865
      %v875 = vmul.f32 %v854, %v865
      %v876 = vmul.f32 %v855, %v865
      %v877 = vmul.f32 %v856, %v865
      %v878 = vmul.f32 %v857, %v865
      %v879 = vmul.f32 %v858, %v865
      %v880 = vmul.f32 %v859, %v865
      %v881 = vmul.f32 %v860, %v865
      %v882 = vadd.f32 %v829, %v866
      %v883 = vadd.f32 %v830, %v867
      %v884 = vadd.f32 %v831, %v868
      %v885 = vadd.f32 %v832, %v869
      %v886 = vadd.f32 %v833, %v870
      %v887 = vadd.f32 %v834, %v871
      %v888 = vadd.f32 %v835, %v872
      %v889 = vadd.f32 %v836, %v873
      %v890 = vadd.f32 %v837, %v874
      %v891 = vadd.f32 %v838, %v875
      %v892 = vadd.f32 %v839, %v876
      %v893 = vadd.f32 %v840, %v877
      %v894 = vadd.f32 %v841, %v878
      %v895 = vadd.f32 %v842, %v879
      %v896 = vadd.f32 %v843, %v880
      %v897 = vadd.f32 %v844, %v881
      %v898 = vld [vmem:[#allocation2 + $0x8] sm:$0xff]
      %v899 = vld [vmem:[#allocation2 + $0x10] sm:$0xff]
      %v900 = vld [vmem:[#allocation2 + $0x18] sm:$0xff]
      %v901 = vld [vmem:[#allocation2 + $0x20] sm:$0xff]
      %v902 = vld [vmem:[#allocation2 + $0x28] sm:$0xff]
      %v903 = vld [vmem:[#allocation2 + $0x30] sm:$0xff]
      %v904 = vld [vmem:[#allocation2 + $0x38] sm:$0xff]
      %v905 = vld [vmem:[#allocation2 + $0x40] sm:$0xff]
      %v906 = vld [vmem:[#allocation2 + $0x48] sm:$0xff]
      %v907 = vld [vmem:[#allocation2 + $0x50] sm:$0xff]
      %v908 = vld [vmem:[#allocation2 + $0x58] sm:$0xff]
      %v909 = vld [vmem:[#allocation2 + $0x60] sm:$0xff]
      %v910 = vld [vmem:[#allocation2 + $0x68] sm:$0xff]
      %v911 = vld [vmem:[#allocation2 + $0x70] sm:$0xff]
      %v912 = vld [vmem:[#allocation2 + $0x78] sm:$0xff]
      %v913 = vld [vmem:[#allocation2 + $0x80] sm:$0xff]
      %v914 = vld [vmem:[%s3 + $0x3] sm:$0x1]
      %v915 = vlaneseq
      %v916 = vshrl.u32 %v915, 7
      %v917 = vsub.s32 0, %v916
      %v918 = vrot.slane %v914, %v917
      %v919 = vmul.f32 %v898, %v918
      %v920 = vmul.f32 %v899, %v918
      %v921 = vmul.f32 %v900, %v918
      %v922 = vmul.f32 %v901, %v918
      %v923 = vmul.f32 %v902, %v918
      %v924 = vmul.f32 %v903, %v918
      %v925 = vmul.f32 %v904, %v918
      %v926 = vmul.f32 %v905, %v918
      %v927 = vmul.f32 %v906, %v918
      %v928 = vmul.f32 %v907, %v918
      %v929 = vmul.f32 %v908, %v918
      %v930 = vmul.f32 %v909, %v918
      %v931 = vmul.f32 %v910, %v918
      %v932 = vmul.f32 %v911, %v918
      %v933 = vmul.f32 %v912, %v918
      %v934 = vmul.f32 %v913, %v918
      %v935 = vadd.f32 %v882, %v919
      %v936 = vadd.f32 %v883, %v920
      %v937 = vadd.f32 %v884, %v921
      %v938 = vadd.f32 %v885, %v922
      %v939 = vadd.f32 %v886, %v923
      %v940 = vadd.f32 %v887, %v924
      %v941 = vadd.f32 %v888, %v925
      %v942 = vadd.f32 %v889, %v926
      %v943 = vadd.f32 %v890, %v927
      %v944 = vadd.f32 %v891, %v928
      %v945 = vadd.f32 %v892, %v929
      %v946 = vadd.f32 %v893, %v930
      %v947 = vadd.f32 %v894, %v931
      %v948 = vadd.f32 %v895, %v932
      %v949 = vadd.f32 %v896, %v933
      %v950 = vadd.f32 %v897, %v934
      %v951 = vld [vmem:[%s4] sm:$0x1]
      %v953 = vlaneseq
      %v954 = vshrl.u32 %v953, 7
      %v955 = vsub.s32 0, %v954
      %v956 = vrot.slane %v951, %v955
      %v958 = vadd.f32 %v935, %v956
      %v959 = vadd.f32 %v936, %v956
      %v960 = vadd.f32 %v937, %v956
      %v961 = vadd.f32 %v938, %v956
      %v962 = vadd.f32 %v939, %v956
      %v963 = vadd.f32 %v940, %v956
      %v964 = vadd.f32 %v941, %v956
      %v965 = vadd.f32 %v942, %v956
      %v966 = vadd.f32 %v943, %v956
      %v967 = vadd.f32 %v944, %v956
      %v968 = vadd.f32 %v945, %v956
      %v969 = vadd.f32 %v946, %v956
      %v970 = vadd.f32 %v947, %v956
      %v971 = vadd.f32 %v948, %v956
      %v972 = vadd.f32 %v949, %v956
      %v973 = vadd.f32 %v950, %v956
      %v974 = vld [vmem:[#allocation2 + $0x85] sm:$0x7]
      %vm975 = vcmask 124928
      %976 = vst.msk [vmem:[#allocation2 + $0x5] sm:$0x7] %vm975, %v974
      %v977 = vsub.f32 0.0, %v958
      %v978 = vsub.f32 0.0, %v959
      %v979 = vsub.f32 0.0, %v960
      %v980 = vsub.f32 0.0, %v961
      %v981 = vsub.f32 0.0, %v962
      %v982 = vsub.f32 0.0, %v963
      %v983 = vsub.f32 0.0, %v964
      %v984 = vsub.f32 0.0, %v965
      %v985 = vsub.f32 0.0, %v966
      %v986 = vsub.f32 0.0, %v967
      %v987 = vsub.f32 0.0, %v968
      %v988 = vsub.f32 0.0, %v969
      %v989 = vsub.f32 0.0, %v970
      %v990 = vsub.f32 0.0, %v971
      %v991 = vsub.f32 0.0, %v972
      %v992 = vsub.f32 0.0, %v973
      %v993 = vmin.f32 %v977, 60.0
      %v994 = vmin.f32 %v978, 60.0
      %v995 = vmin.f32 %v979, 60.0
      %v996 = vmin.f32 %v980, 60.0
      %v997 = vmin.f32 %v981, 60.0
      %v998 = vmin.f32 %v982, 60.0
      %v999 = vmin.f32 %v983, 60.0
      %v1000 = vmin.f32 %v984, 60.0
      %v1001 = vmin.f32 %v985, 60.0
      %v1002 = vmin.f32 %v986, 60.0
      %v1003 = vmin.f32 %v987, 60.0
      %v1004 = vmin.f32 %v988, 60.0
      %v1005 = vmin.f32 %v989, 60.0
      %v1006 = vmin.f32 %v990, 60.0
      %v1007 = vmin.f32 %v991, 60.0
      %v1008 = vmin.f32 %v992, 60.0
      %v1009 = vmul.f32 %v993, 1.442695
      %v1010 = vpow.pop %v1009
      %v1011 = vmul.f32 %v994, 1.442695
      %v1012 = vpow.pop %v1011
      %v1013 = vmul.f32 %v995, 1.442695
      %v1014 = vpow.pop %v1013
      %v1015 = vmul.f32 %v996, 1.442695
      %v1016 = vpow.pop %v1015
      %v1017 = vmul.f32 %v997, 1.442695
      %v1018 = vpow.pop %v1017
      %v1019 = vmul.f32 %v998, 1.442695
      %v1020 = vpow.pop %v1019
      %v1021 = vmul.f32 %v999, 1.442695
      %v1022 = vpow.pop %v1021
      %v1023 = vmul.f32 %v1000, 1.442695
      %v1024 = vpow.pop %v1023
      %v1025 = vmul.f32 %v1001, 1.442695
      %v1026 = vpow.pop %v1025
      %v1027 = vmul.f32 %v1002, 1.442695
      %v1028 = vpow.pop %v1027
      %v1029 = vmul.f32 %v1003, 1.442695
      %v1030 = vpow.pop %v1029
      %v1031 = vmul.f32 %v1004, 1.442695
      %v1032 = vpow.pop %v1031
      %v1033 = vmul.f32 %v1005, 1.442695
      %v1034 = vpow.pop %v1033
      %v1035 = vmul.f32 %v1006, 1.442695
      %v1036 = vpow.pop %v1035
      %v1037 = vmul.f32 %v1007, 1.442695
      %v1038 = vpow.pop %v1037
      %v1039 = vmul.f32 %v1008, 1.442695
      %v1040 = vpow.pop %v1039
      %v1041 = vadd.f32 %v1010, 1.0
      %v1042 = vadd.f32 %v1012, 1.0
      %v1043 = vadd.f32 %v1014, 1.0
      %v1044 = vadd.f32 %v1016, 1.0
      %v1045 = vadd.f32 %v1018, 1.0
      %v1046 = vadd.f32 %v1020, 1.0
      %v1047 = vadd.f32 %v1022, 1.0
      %v1048 = vadd.f32 %v1024, 1.0
      %v1049 = vadd.f32 %v1026, 1.0
      %v1050 = vadd.f32 %v1028, 1.0
      %v1051 = vadd.f32 %v1030, 1.0
      %v1052 = vadd.f32 %v1032, 1.0
      %v1053 = vadd.f32 %v1034, 1.0
      %v1054 = vadd.f32 %v1036, 1.0
      %v1055 = vadd.f32 %v1038, 1.0
      %v1056 = vadd.f32 %v1040, 1.0
      %v1057 = vrcp.pop %v1041
      %v1058 = vrcp.pop %v1042
      %v1059 = vrcp.pop %v1043
      %v1060 = vrcp.pop %v1044
      %v1061 = vrcp.pop %v1045
      %v1062 = vrcp.pop %v1046
      %v1063 = vrcp.pop %v1047
      %v1064 = vrcp.pop %v1048
      %v1065 = vrcp.pop %v1049
      %v1066 = vrcp.pop %v1050
      %v1067 = vrcp.pop %v1051
      %v1068 = vrcp.pop %v1052
      %v1069 = vrcp.pop %v1053
      %v1070 = vrcp.pop %v1054
      %v1071 = vrcp.pop %v1055
      %v1072 = vrcp.pop %v1056
      %v1073 = vmul.f32 %v958, %v1057
      %v1074 = vmul.f32 %v959, %v1058
      %v1075 = vmul.f32 %v960, %v1059
      %v1076 = vmul.f32 %v961, %v1060
      %v1077 = vmul.f32 %v962, %v1061
      %v1078 = vmul.f32 %v963, %v1062
      %v1079 = vmul.f32 %v964, %v1063
      %v1080 = vmul.f32 %v965, %v1064
      %v1081 = vmul.f32 %v966, %v1065
      %v1082 = vmul.f32 %v967, %v1066
      %v1083 = vmul.f32 %v968, %v1067
      %v1084 = vmul.f32 %v969, %v1068
      %v1085 = vmul.f32 %v970, %v1069
      %v1086 = vmul.f32 %v971, %v1070
      %v1087 = vmul.f32 %v972, %v1071
      %v1088 = vmul.f32 %v973, %v1072
      %v1089 = vpack.c.bf16 %v1074, %v1073
      %v1090 = vpack.c.bf16 %v1076, %v1075
      %v1091 = vpack.c.bf16 %v1078, %v1077
      %v1092 = vpack.c.bf16 %v1080, %v1079
      %v1093 = vpack.c.bf16 %v1082, %v1081
      %v1094 = vpack.c.bf16 %v1084, %v1083
      %v1095 = vpack.c.bf16 %v1086, %v1085
      %v1096 = vpack.c.bf16 %v1088, %v1087
      %v1097 = vld [vmem:[%s5] sm:$0xf]
      %v1098 = vld [vmem:[%s5 + $0x4] sm:$0xf]
      %v1101 = vunpack.c.l.b16 %v1097
      %v1102 = vunpack.c.l.b16 %v1098
      %v1103 = vpack.c.b16 %v1102, %v1101
      %v1106 = vsel %vm738, %v1089, 0
      %v1109 = vsel %vm738, %v1090, 0
      %v1112 = vsel %vm738, %v1091, 0
      %v1115 = vsel %vm738, %v1092, 0
      %v1118 = vsel %vm738, %v1093, 0
      %v1121 = vsel %vm738, %v1094, 0
      %v1124 = vsel %vm738, %v1095, 0
      %v1127 = vsel %vm738, %v1096, 0
      %1129 = vmatprep.subr.bf16.mxu0 0
      %1130 = vmatpush1.bf16.msra.mxu0 0
      %1131 = vmatprep.subr.bf16.mxu0 0
      %1132 = vmatpush1.bf16.msra.mxu0 0
      %1133 = vmatprep.subr.bf16.mxu0 0
      %1134 = vmatpush1.bf16.msra.mxu0 0
      %1135 = vmatprep.subr.bf16.mxu0 0
      %1136 = vmatpush1.bf16.msra.mxu0 0
      %1137 = vmatprep.subr.bf16.mxu0 0
      %1138 = vmatpush1.bf16.msra.mxu0 0
      %1139 = vmatprep.subr.bf16.mxu0 0
      %1140 = vmatpush1.bf16.msra.mxu0 0
      %1141 = vmatprep.subr.bf16.mxu0 0
      %1142 = vmatpush1.bf16.msra.mxu0 0
      %1143 = vmatprep.subr.bf16.mxu0 0
      %1144 = vmatpush1.bf16.msra.mxu0 %v1103
      %1145 = vmatprep.subr.bf16.mxu0 0
      %1146 = vmatpush2.bf16.msra.mxu0 0
      %1147 = vmatprep.subr.bf16.mxu0 0
      %1148 = vmatpush2.bf16.msra.mxu0 0
      %1149 = vmatprep.subr.bf16.mxu0 0
      %1150 = vmatpush2.bf16.msra.mxu0 0
      %1151 = vmatprep.subr.bf16.mxu0 0
      %1152 = vmatpush2.bf16.msra.mxu0 0
      %1153 = vmatprep.subr.bf16.mxu0 0
      %1154 = vmatpush2.bf16.msra.mxu0 0
      %1155 = vmatprep.subr.bf16.mxu0 0
      %1156 = vmatpush2.bf16.msra.mxu0 0
      %1157 = vmatprep.subr.bf16.mxu0 0
      %1158 = vmatpush2.bf16.msra.mxu0 0
      %1159 = vmatprep.subr.bf16.mxu0 0
      %1160 = vmatpush2.bf16.msra.mxu0 0
      %1161 = vmatprep.mubr.bf16.mxu0 0
      %1162 = vmatmul.mubr.bf16.gmra.mxu0 %v1106
      %v1163 = vpop.f32.mrf.mxu0
      %v1164 = vadd.f32 0.0, %v1163
      %v1165 = vpop.f32.mrf.mxu0
      %v1166 = vpop.f32.mrf.mxu0
      %v1167 = vadd.f32 0.0, %v1166
      %v1168 = vpop.f32.mrf.mxu0
      %1169 = vmatprep.mubr.bf16.mxu0 0
      %1170 = vmatmul.mubr.bf16.gmra.mxu0 %v1109
      %v1171 = vpop.f32.mrf.mxu0
      %v1172 = vadd.f32 0.0, %v1171
      %v1173 = vpop.f32.mrf.mxu0
      %v1174 = vpop.f32.mrf.mxu0
      %v1175 = vadd.f32 0.0, %v1174
      %v1176 = vpop.f32.mrf.mxu0
      %1177 = vmatprep.mubr.bf16.mxu0 0
      %1178 = vmatmul.mubr.bf16.gmra.mxu0 %v1112
      %v1179 = vpop.f32.mrf.mxu0
      %v1180 = vadd.f32 0.0, %v1179
      %v1181 = vpop.f32.mrf.mxu0
      %v1182 = vpop.f32.mrf.mxu0
      %v1183 = vadd.f32 0.0, %v1182
      %v1184 = vpop.f32.mrf.mxu0
      %1185 = vmatprep.mubr.bf16.mxu0 0
      %1186 = vmatmul.mubr.bf16.gmra.mxu0 %v1115
      %v1187 = vpop.f32.mrf.mxu0
      %v1188 = vadd.f32 0.0, %v1187
      %v1189 = vpop.f32.mrf.mxu0
      %v1190 = vpop.f32.mrf.mxu0
      %v1191 = vadd.f32 0.0, %v1190
      %v1192 = vpop.f32.mrf.mxu0
      %1193 = vmatprep.mubr.bf16.mxu0 0
      %1194 = vmatmul.mubr.bf16.gmra.mxu0 %v1118
      %v1195 = vpop.f32.mrf.mxu0
      %v1196 = vadd.f32 0.0, %v1195
      %v1197 = vpop.f32.mrf.mxu0
      %v1198 = vpop.f32.mrf.mxu0
      %v1199 = vadd.f32 0.0, %v1198
      %v1200 = vpop.f32.mrf.mxu0
      %1201 = vmatprep.mubr.bf16.mxu0 0
      %1202 = vmatmul.mubr.bf16.gmra.mxu0 %v1121
      %v1203 = vpop.f32.mrf.mxu0
      %v1204 = vadd.f32 0.0, %v1203
      %v1205 = vpop.f32.mrf.mxu0
      %v1206 = vpop.f32.mrf.mxu0
      %v1207 = vadd.f32 0.0, %v1206
      %v1208 = vpop.f32.mrf.mxu0
      %1209 = vmatprep.mubr.bf16.mxu0 0
      %1210 = vmatmul.mubr.bf16.gmra.mxu0 %v1124
      %v1211 = vpop.f32.mrf.mxu0
      %v1212 = vadd.f32 0.0, %v1211
      %v1213 = vpop.f32.mrf.mxu0
      %v1214 = vpop.f32.mrf.mxu0
      %v1215 = vadd.f32 0.0, %v1214
      %v1216 = vpop.f32.mrf.mxu0
      %1217 = vmatprep.mubr.bf16.mxu0 0
      %1218 = vmatmul.mubr.bf16.gmra.mxu0 %v1127
      %v1219 = vpop.f32.mrf.mxu0
      %v1220 = vadd.f32 0.0, %v1219
      %v1221 = vpop.f32.mrf.mxu0
      %v1222 = vpop.f32.mrf.mxu0
      %v1223 = vadd.f32 0.0, %v1222
      %v1224 = vpop.f32.mrf.mxu0
      %1225 = vdwg.mxu0
      %v1226 = vld [vmem:[%s6] sm:$0x1]
      %v1227 = vunpack.c.l.bf16 %v1226
      %1229 = vset.pattern.permute.xlu0 0
      %1230 = vperm.xlu0 %1229, %v1164
      %v1231 = vpop.permute.xlu0 %1230
      %1234 = vset.pattern.permute.xlu0 0
      %1235 = vperm.xlu0 %1234, %v1167
      %v1236 = vpop.permute.xlu0 %1235
      %1239 = vset.pattern.permute.xlu0 0
      %1240 = vperm.xlu0 %1239, %v1172
      %v1241 = vpop.permute.xlu0 %1240
      %1244 = vset.pattern.permute.xlu0 0
      %1245 = vperm.xlu0 %1244, %v1175
      %v1246 = vpop.permute.xlu0 %1245
      %1249 = vset.pattern.permute.xlu0 0
      %1250 = vperm.xlu0 %1249, %v1180
      %v1251 = vpop.permute.xlu0 %1250
      %1254 = vset.pattern.permute.xlu0 0
      %1255 = vperm.xlu0 %1254, %v1183
      %v1256 = vpop.permute.xlu0 %1255
      %1259 = vset.pattern.permute.xlu0 0
      %1260 = vperm.xlu0 %1259, %v1188
      %v1261 = vpop.permute.xlu0 %1260
      %1264 = vset.pattern.permute.xlu0 0
      %1265 = vperm.xlu0 %1264, %v1191
      %v1266 = vpop.permute.xlu0 %1265
      %1269 = vset.pattern.permute.xlu0 0
      %1270 = vperm.xlu0 %1269, %v1196
      %v1271 = vpop.permute.xlu0 %1270
      %1274 = vset.pattern.permute.xlu0 0
      %1275 = vperm.xlu0 %1274, %v1199
      %v1276 = vpop.permute.xlu0 %1275
      %1279 = vset.pattern.permute.xlu0 0
      %1280 = vperm.xlu0 %1279, %v1204
      %v1281 = vpop.permute.xlu0 %1280
      %1284 = vset.pattern.permute.xlu0 0
      %1285 = vperm.xlu0 %1284, %v1207
      %v1286 = vpop.permute.xlu0 %1285
      %1289 = vset.pattern.permute.xlu0 0
      %1290 = vperm.xlu0 %1289, %v1212
      %v1291 = vpop.permute.xlu0 %1290
      %1294 = vset.pattern.permute.xlu0 0
      %1295 = vperm.xlu0 %1294, %v1215
      %v1296 = vpop.permute.xlu0 %1295
      %1299 = vset.pattern.permute.xlu0 0
      %1300 = vperm.xlu0 %1299, %v1220
      %v1301 = vpop.permute.xlu0 %1300
      %1304 = vset.pattern.permute.xlu0 0
      %1305 = vperm.xlu0 %1304, %v1223
      %v1306 = vpop.permute.xlu0 %1305
      %v1308 = vlaneseq
      %v1309 = vshrl.u32 %v1308, 7
      %v1310 = vsub.s32 0, %v1309
      %v1311 = vrot.slane %v1227, %v1310
      %v1312 = vmul.f32 %v1231, %v1311
      %v1313 = vmul.f32 %v1236, %v1311
      %v1314 = vmul.f32 %v1241, %v1311
      %v1315 = vmul.f32 %v1246, %v1311
      %v1316 = vmul.f32 %v1251, %v1311
      %v1317 = vmul.f32 %v1256, %v1311
      %v1318 = vmul.f32 %v1261, %v1311
      %v1319 = vmul.f32 %v1266, %v1311
      %v1320 = vmul.f32 %v1271, %v1311
      %v1321 = vmul.f32 %v1276, %v1311
      %v1322 = vmul.f32 %v1281, %v1311
      %v1323 = vmul.f32 %v1286, %v1311
      %v1324 = vmul.f32 %v1291, %v1311
      %v1325 = vmul.f32 %v1296, %v1311
      %v1326 = vmul.f32 %v1301, %v1311
      %v1327 = vmul.f32 %v1306, %v1311
      %v1328 = vld [vmem:[%s7] sm:$0x1]
      %v1330 = vlaneseq
      %v1331 = vshrl.u32 %v1330, 7
      %v1332 = vsub.s32 0, %v1331
      %v1333 = vrot.slane %v1328, %v1332
      %v1335 = vadd.f32 %v1312, %v1333
      %v1336 = vadd.f32 %v1313, %v1333
      %v1337 = vadd.f32 %v1314, %v1333
      %v1338 = vadd.f32 %v1315, %v1333
      %v1339 = vadd.f32 %v1316, %v1333
      %v1340 = vadd.f32 %v1317, %v1333
      %v1341 = vadd.f32 %v1318, %v1333
      %v1342 = vadd.f32 %v1319, %v1333
      %v1343 = vadd.f32 %v1320, %v1333
      %v1344 = vadd.f32 %v1321, %v1333
      %v1345 = vadd.f32 %v1322, %v1333
      %v1346 = vadd.f32 %v1323, %v1333
      %v1347 = vadd.f32 %v1324, %v1333
      %v1348 = vadd.f32 %v1325, %v1333
      %v1349 = vadd.f32 %v1326, %v1333
      %v1350 = vadd.f32 %v1327, %v1333
      %v1351 = vmax.f32 %v1335, 0.0
      %v1352 = vmax.f32 %v1336, 0.0
      %v1353 = vmax.f32 %v1337, 0.0
      %v1354 = vmax.f32 %v1338, 0.0
      %v1355 = vmax.f32 %v1339, 0.0
      %v1356 = vmax.f32 %v1340, 0.0
      %v1357 = vmax.f32 %v1341, 0.0
      %v1358 = vmax.f32 %v1342, 0.0
      %v1359 = vmax.f32 %v1343, 0.0
      %v1360 = vmax.f32 %v1344, 0.0
      %v1361 = vmax.f32 %v1345, 0.0
      %v1362 = vmax.f32 %v1346, 0.0
      %v1363 = vmax.f32 %v1347, 0.0
      %v1364 = vmax.f32 %v1348, 0.0
      %v1365 = vmax.f32 %v1349, 0.0
      %v1366 = vmax.f32 %v1350, 0.0
      %v1367 = vand.u32 2147483647, %v1335
      %v1368 = vand.u32 2147483647, %v1336
      %v1369 = vand.u32 2147483647, %v1337
      %v1370 = vand.u32 2147483647, %v1338
      %v1371 = vand.u32 2147483647, %v1339
      %v1372 = vand.u32 2147483647, %v1340
      %v1373 = vand.u32 2147483647, %v1341
      %v1374 = vand.u32 2147483647, %v1342
      %v1375 = vand.u32 2147483647, %v1343
      %v1376 = vand.u32 2147483647, %v1344
      %v1377 = vand.u32 2147483647, %v1345
      %v1378 = vand.u32 2147483647, %v1346
      %v1379 = vand.u32 2147483647, %v1347
      %v1380 = vand.u32 2147483647, %v1348
      %v1381 = vand.u32 2147483647, %v1349
      %v1382 = vand.u32 2147483647, %v1350
      %v1383 = vsub.f32 0.0, %v1367
      %v1384 = vsub.f32 0.0, %v1368
      %v1385 = vsub.f32 0.0, %v1369
      %v1386 = vsub.f32 0.0, %v1370
      %v1387 = vsub.f32 0.0, %v1371
      %v1388 = vsub.f32 0.0, %v1372
      %v1389 = vsub.f32 0.0, %v1373
      %v1390 = vsub.f32 0.0, %v1374
      %v1391 = vsub.f32 0.0, %v1375
      %v1392 = vsub.f32 0.0, %v1376
      %v1393 = vsub.f32 0.0, %v1377
      %v1394 = vsub.f32 0.0, %v1378
      %v1395 = vsub.f32 0.0, %v1379
      %v1396 = vsub.f32 0.0, %v1380
      %v1397 = vsub.f32 0.0, %v1381
      %v1398 = vsub.f32 0.0, %v1382
      %v1399 = vmul.f32 %v1383, 1.442695
      %v1400 = vpow.pop %v1399
      %v1401 = vmul.f32 %v1384, 1.442695
      %v1402 = vpow.pop %v1401
      %v1403 = vmul.f32 %v1385, 1.442695
      %v1404 = vpow.pop %v1403
      %v1405 = vmul.f32 %v1386, 1.442695
      %v1406 = vpow.pop %v1405
      %v1407 = vmul.f32 %v1387, 1.442695
      %v1408 = vpow.pop %v1407
      %v1409 = vmul.f32 %v1388, 1.442695
      %v1410 = vpow.pop %v1409
      %v1411 = vmul.f32 %v1389, 1.442695
      %v1412 = vpow.pop %v1411
      %v1413 = vmul.f32 %v1390, 1.442695
      %v1414 = vpow.pop %v1413
      %v1415 = vmul.f32 %v1391, 1.442695
      %v1416 = vpow.pop %v1415
      %v1417 = vmul.f32 %v1392, 1.442695
      %v1418 = vpow.pop %v1417
      %v1419 = vmul.f32 %v1393, 1.442695
      %v1420 = vpow.pop %v1419
      %v1421 = vmul.f32 %v1394, 1.442695
      %v1422 = vpow.pop %v1421
      %v1423 = vmul.f32 %v1395, 1.442695
      %v1424 = vpow.pop %v1423
      %v1425 = vmul.f32 %v1396, 1.442695
      %v1426 = vpow.pop %v1425
      %v1427 = vmul.f32 %v1397, 1.442695
      %v1428 = vpow.pop %v1427
      %v1429 = vmul.f32 %v1398, 1.442695
      %v1430 = vpow.pop %v1429
      %v1431 = vadd.f32 %v1400, 1.0
      %v1432 = vadd.f32 %v1402, 1.0
      %v1433 = vadd.f32 %v1404, 1.0
      %v1434 = vadd.f32 %v1406, 1.0
      %v1435 = vadd.f32 %v1408, 1.0
      %v1436 = vadd.f32 %v1410, 1.0
      %v1437 = vadd.f32 %v1412, 1.0
      %v1438 = vadd.f32 %v1414, 1.0
      %v1439 = vadd.f32 %v1416, 1.0
      %v1440 = vadd.f32 %v1418, 1.0
      %v1441 = vadd.f32 %v1420, 1.0
      %v1442 = vadd.f32 %v1422, 1.0
      %v1443 = vadd.f32 %v1424, 1.0
      %v1444 = vadd.f32 %v1426, 1.0
      %v1445 = vadd.f32 %v1428, 1.0
      %v1446 = vadd.f32 %v1430, 1.0
      %v1447 = vlog2.pop %v1431
      %v1448 = vmul.f32 %v1447, 0.6931472
      %v1449 = vlog2.pop %v1432
      %v1450 = vmul.f32 %v1449, 0.6931472
      %v1451 = vlog2.pop %v1433
      %v1452 = vmul.f32 %v1451, 0.6931472
      %v1453 = vlog2.pop %v1434
      %v1454 = vmul.f32 %v1453, 0.6931472
      %v1455 = vlog2.pop %v1435
      %v1456 = vmul.f32 %v1455, 0.6931472
      %v1457 = vlog2.pop %v1436
      %v1458 = vmul.f32 %v1457, 0.6931472
      %v1459 = vlog2.pop %v1437
      %v1460 = vmul.f32 %v1459, 0.6931472
      %v1461 = vlog2.pop %v1438
      %v1462 = vmul.f32 %v1461, 0.6931472
      %v1463 = vlog2.pop %v1439
      %v1464 = vmul.f32 %v1463, 0.6931472
      %v1465 = vlog2.pop %v1440
      %v1466 = vmul.f32 %v1465, 0.6931472
      %v1467 = vlog2.pop %v1441
      %v1468 = vmul.f32 %v1467, 0.6931472
      %v1469 = vlog2.pop %v1442
      %v1470 = vmul.f32 %v1469, 0.6931472
      %v1471 = vlog2.pop %v1443
      %v1472 = vmul.f32 %v1471, 0.6931472
      %v1473 = vlog2.pop %v1444
      %v1474 = vmul.f32 %v1473, 0.6931472
      %v1475 = vlog2.pop %v1445
      %v1476 = vmul.f32 %v1475, 0.6931472
      %v1477 = vlog2.pop %v1446
      %v1478 = vmul.f32 %v1477, 0.6931472
      %v1479 = vadd.f32 %v1351, %v1448
      %v1480 = vadd.f32 %v1352, %v1450
      %v1481 = vadd.f32 %v1353, %v1452
      %v1482 = vadd.f32 %v1354, %v1454
      %v1483 = vadd.f32 %v1355, %v1456
      %v1484 = vadd.f32 %v1356, %v1458
      %v1485 = vadd.f32 %v1357, %v1460
      %v1486 = vadd.f32 %v1358, %v1462
      %v1487 = vadd.f32 %v1359, %v1464
      %v1488 = vadd.f32 %v1360, %v1466
      %v1489 = vadd.f32 %v1361, %v1468
      %v1490 = vadd.f32 %v1362, %v1470
      %v1491 = vadd.f32 %v1363, %v1472
      %v1492 = vadd.f32 %v1364, %v1474
      %v1493 = vadd.f32 %v1365, %v1476
      %v1494 = vadd.f32 %v1366, %v1478
      %1495 = vst.msk [vmem:[#allocation3] sm:$0xff] %vm738, %v1479
      %1496 = vst.msk [vmem:[#allocation3 + $0x8] sm:$0xff] %vm738, %v1480
      %1497 = vst.msk [vmem:[#allocation3 + $0x10] sm:$0xff] %vm738, %v1481
      %1498 = vst.msk [vmem:[#allocation3 + $0x18] sm:$0xff] %vm738, %v1482
      %1499 = vst.msk [vmem:[#allocation3 + $0x20] sm:$0xff] %vm738, %v1483
      %1500 = vst.msk [vmem:[#allocation3 + $0x28] sm:$0xff] %vm738, %v1484
      %1501 = vst.msk [vmem:[#allocation3 + $0x30] sm:$0xff] %vm738, %v1485
      %1502 = vst.msk [vmem:[#allocation3 + $0x38] sm:$0xff] %vm738, %v1486
      %1503 = vst.msk [vmem:[#allocation3 + $0x40] sm:$0xff] %vm738, %v1487
      %1504 = vst.msk [vmem:[#allocation3 + $0x48] sm:$0xff] %vm738, %v1488
      %1505 = vst.msk [vmem:[#allocation3 + $0x50] sm:$0xff] %vm738, %v1489
      %1506 = vst.msk [vmem:[#allocation3 + $0x58] sm:$0xff] %vm738, %v1490
      %1507 = vst.msk [vmem:[#allocation3 + $0x60] sm:$0xff] %vm738, %v1491
      %1508 = vst.msk [vmem:[#allocation3 + $0x68] sm:$0xff] %vm738, %v1492
      %1509 = vst.msk [vmem:[#allocation3 + $0x70] sm:$0xff] %vm738, %v1493
      %1510 = vst.msk [vmem:[#allocation3 + $0x78] sm:$0xff] %vm738, %v1494
      %v1511 = vmul.f32 %v1479, %v1073
      %v1512 = vmul.f32 %v1480, %v1074
      %v1513 = vmul.f32 %v1481, %v1075
      %v1514 = vmul.f32 %v1482, %v1076
      %v1515 = vmul.f32 %v1483, %v1077
      %v1516 = vmul.f32 %v1484, %v1078
      %v1517 = vmul.f32 %v1485, %v1079
      %v1518 = vmul.f32 %v1486, %v1080
      %v1519 = vmul.f32 %v1487, %v1081
      %v1520 = vmul.f32 %v1488, %v1082
      %v1521 = vmul.f32 %v1489, %v1083
      %v1522 = vmul.f32 %v1490, %v1084
      %v1523 = vmul.f32 %v1491, %v1085
      %v1524 = vmul.f32 %v1492, %v1086
      %v1525 = vmul.f32 %v1493, %v1087
      %v1526 = vmul.f32 %v1494, %v1088
      %1527 = vst.msk [vmem:[#allocation4] sm:$0xff] %vm738, %v1511
      %1528 = vst.msk [vmem:[#allocation4 + $0x8] sm:$0xff] %vm738, %v1512
      %1529 = vst.msk [vmem:[#allocation4 + $0x10] sm:$0xff] %vm738, %v1513
      %1530 = vst.msk [vmem:[#allocation4 + $0x18] sm:$0xff] %vm738, %v1514
      %1531 = vst.msk [vmem:[#allocation4 + $0x20] sm:$0xff] %vm738, %v1515
      %1532 = vst.msk [vmem:[#allocation4 + $0x28] sm:$0xff] %vm738, %v1516
      %1533 = vst.msk [vmem:[#allocation4 + $0x30] sm:$0xff] %vm738, %v1517
      %1534 = vst.msk [vmem:[#allocation4 + $0x38] sm:$0xff] %vm738, %v1518
      %1535 = vst.msk [vmem:[#allocation4 + $0x40] sm:$0xff] %vm738, %v1519
      %1536 = vst.msk [vmem:[#allocation4 + $0x48] sm:$0xff] %vm738, %v1520
      %1537 = vst.msk [vmem:[#allocation4 + $0x50] sm:$0xff] %vm738, %v1521
      %1538 = vst.msk [vmem:[#allocation4 + $0x58] sm:$0xff] %vm738, %v1522
      %1539 = vst.msk [vmem:[#allocation4 + $0x60] sm:$0xff] %vm738, %v1523
      %1540 = vst.msk [vmem:[#allocation4 + $0x68] sm:$0xff] %vm738, %v1524
      %1541 = vst.msk [vmem:[#allocation4 + $0x70] sm:$0xff] %vm738, %v1525
      %1542 = vst.msk [vmem:[#allocation4 + $0x78] sm:$0xff] %vm738, %v1526
      %1543 = vrot.lane.b32.xlu0 %v1164, 127
      %v1544 = vpop.permute.xlu0 %1543
      %1545 = vrot.lane.b32.xlu0 %v1167, 127
      %v1546 = vpop.permute.xlu0 %1545
      %1547 = vrot.lane.b32.xlu0 %v1172, 127
      %v1548 = vpop.permute.xlu0 %1547
      %1549 = vrot.lane.b32.xlu0 %v1175, 127
      %v1550 = vpop.permute.xlu0 %1549
      %1551 = vrot.lane.b32.xlu0 %v1180, 127
      %v1552 = vpop.permute.xlu0 %1551
      %1553 = vrot.lane.b32.xlu0 %v1183, 127
      %v1554 = vpop.permute.xlu0 %1553
      %1555 = vrot.lane.b32.xlu0 %v1188, 127
      %v1556 = vpop.permute.xlu0 %1555
      %1557 = vrot.lane.b32.xlu0 %v1191, 127
      %v1558 = vpop.permute.xlu0 %1557
      %1559 = vrot.lane.b32.xlu0 %v1196, 127
      %v1560 = vpop.permute.xlu0 %1559
      %1561 = vrot.lane.b32.xlu0 %v1199, 127
      %v1562 = vpop.permute.xlu0 %1561
      %1563 = vrot.lane.b32.xlu0 %v1204, 127
      %v1564 = vpop.permute.xlu0 %1563
      %1565 = vrot.lane.b32.xlu0 %v1207, 127
      %v1566 = vpop.permute.xlu0 %1565
      %1567 = vrot.lane.b32.xlu0 %v1212, 127
      %v1568 = vpop.permute.xlu0 %1567
      %1569 = vrot.lane.b32.xlu0 %v1215, 127
      %v1570 = vpop.permute.xlu0 %1569
      %1571 = vrot.lane.b32.xlu0 %v1220, 127
      %v1572 = vpop.permute.xlu0 %1571
      %1573 = vrot.lane.b32.xlu0 %v1223, 127
      %v1574 = vpop.permute.xlu0 %1573
      %1591 = vst.msk [vmem:[#allocation5] sm:$0xff] %vm738, %v1544
      %1592 = vst.msk [vmem:[#allocation5 + $0x8] sm:$0xff] %vm738, %v1546
      %1593 = vst.msk [vmem:[#allocation5 + $0x10] sm:$0xff] %vm738, %v1548
      %1594 = vst.msk [vmem:[#allocation5 + $0x18] sm:$0xff] %vm738, %v1550
      %1595 = vst.msk [vmem:[#allocation5 + $0x20] sm:$0xff] %vm738, %v1552
      %1596 = vst.msk [vmem:[#allocation5 + $0x28] sm:$0xff] %vm738, %v1554
      %1597 = vst.msk [vmem:[#allocation5 + $0x30] sm:$0xff] %vm738, %v1556
      %1598 = vst.msk [vmem:[#allocation5 + $0x38] sm:$0xff] %vm738, %v1558
      %1599 = vst.msk [vmem:[#allocation5 + $0x40] sm:$0xff] %vm738, %v1560
      %1600 = vst.msk [vmem:[#allocation5 + $0x48] sm:$0xff] %vm738, %v1562
      %1601 = vst.msk [vmem:[#allocation5 + $0x50] sm:$0xff] %vm738, %v1564
      %1602 = vst.msk [vmem:[#allocation5 + $0x58] sm:$0xff] %vm738, %v1566
      %1603 = vst.msk [vmem:[#allocation5 + $0x60] sm:$0xff] %vm738, %v1568
      %1604 = vst.msk [vmem:[#allocation5 + $0x68] sm:$0xff] %vm738, %v1570
      %1605 = vst.msk [vmem:[#allocation5 + $0x70] sm:$0xff] %vm738, %v1572
      %1606 = vst.msk [vmem:[#allocation5 + $0x78] sm:$0xff] %vm738, %v1574
      %1607 = vrot.lane.b32.xlu0 %v1164, 111
      %v1608 = vpop.permute.xlu0 %1607
      %1609 = vrot.lane.b32.xlu0 %v1167, 111
      %v1610 = vpop.permute.xlu0 %1609
      %1611 = vrot.lane.b32.xlu0 %v1172, 111
      %v1612 = vpop.permute.xlu0 %1611
      %1613 = vrot.lane.b32.xlu0 %v1175, 111
      %v1614 = vpop.permute.xlu0 %1613
      %1615 = vrot.lane.b32.xlu0 %v1180, 111
      %v1616 = vpop.permute.xlu0 %1615
      %1617 = vrot.lane.b32.xlu0 %v1183, 111
      %v1618 = vpop.permute.xlu0 %1617
      %1619 = vrot.lane.b32.xlu0 %v1188, 111
      %v1620 = vpop.permute.xlu0 %1619
      %1621 = vrot.lane.b32.xlu0 %v1191, 111
      %v1622 = vpop.permute.xlu0 %1621
      %1623 = vrot.lane.b32.xlu0 %v1196, 111
      %v1624 = vpop.permute.xlu0 %1623
      %1625 = vrot.lane.b32.xlu0 %v1199, 111
      %v1626 = vpop.permute.xlu0 %1625
      %1627 = vrot.lane.b32.xlu0 %v1204, 111
      %v1628 = vpop.permute.xlu0 %1627
      %1629 = vrot.lane.b32.xlu0 %v1207, 111
      %v1630 = vpop.permute.xlu0 %1629
      %1631 = vrot.lane.b32.xlu0 %v1212, 111
      %v1632 = vpop.permute.xlu0 %1631
      %1633 = vrot.lane.b32.xlu0 %v1215, 111
      %v1634 = vpop.permute.xlu0 %1633
      %1635 = vrot.lane.b32.xlu0 %v1220, 111
      %v1636 = vpop.permute.xlu0 %1635
      %1637 = vrot.lane.b32.xlu0 %v1223, 111
      %v1638 = vpop.permute.xlu0 %1637
      %1655 = vst.msk [vmem:[#allocation6] sm:$0xff] %vm738, %v1608
      %1656 = vst.msk [vmem:[#allocation6 + $0x8] sm:$0xff] %vm738, %v1610
      %1657 = vst.msk [vmem:[#allocation6 + $0x10] sm:$0xff] %vm738, %v1612
      %1658 = vst.msk [vmem:[#allocation6 + $0x18] sm:$0xff] %vm738, %v1614
      %1659 = vst.msk [vmem:[#allocation6 + $0x20] sm:$0xff] %vm738, %v1616
      %1660 = vst.msk [vmem:[#allocation6 + $0x28] sm:$0xff] %vm738, %v1618
      %1661 = vst.msk [vmem:[#allocation6 + $0x30] sm:$0xff] %vm738, %v1620
      %1662 = vst.msk [vmem:[#allocation6 + $0x38] sm:$0xff] %vm738, %v1622
      %1663 = vst.msk [vmem:[#allocation6 + $0x40] sm:$0xff] %vm738, %v1624
      %1664 = vst.msk [vmem:[#allocation6 + $0x48] sm:$0xff] %vm738, %v1626
      %1665 = vst.msk [vmem:[#allocation6 + $0x50] sm:$0xff] %vm738, %v1628
      %1666 = vst.msk [vmem:[#allocation6 + $0x58] sm:$0xff] %vm738, %v1630
      %1667 = vst.msk [vmem:[#allocation6 + $0x60] sm:$0xff] %vm738, %v1632
      %1668 = vst.msk [vmem:[#allocation6 + $0x68] sm:$0xff] %vm738, %v1634
      %1669 = vst.msk [vmem:[#allocation6 + $0x70] sm:$0xff] %vm738, %v1636
      %1670 = vst.msk [vmem:[#allocation6 + $0x78] sm:$0xff] %vm738, %v1638
      %v1671 = vld [vmem:[%s9] sm:$0x1]
      %v1673 = vlaneseq
      %v1674 = vshrl.u32 %v1673, 7
      %v1675 = vsub.s32 0, %v1674
      %v1676 = vrot.slane %v1671, %v1675
      %v1678 = vmul.f32 %v1073, %v1676
      %v1679 = vmul.f32 %v1074, %v1676
      %v1680 = vmul.f32 %v1075, %v1676
      %v1681 = vmul.f32 %v1076, %v1676
      %v1682 = vmul.f32 %v1077, %v1676
      %v1683 = vmul.f32 %v1078, %v1676
      %v1684 = vmul.f32 %v1079, %v1676
      %v1685 = vmul.f32 %v1080, %v1676
      %v1686 = vmul.f32 %v1081, %v1676
      %v1687 = vmul.f32 %v1082, %v1676
      %v1688 = vmul.f32 %v1083, %v1676
      %v1689 = vmul.f32 %v1084, %v1676
      %v1690 = vmul.f32 %v1085, %v1676
      %v1691 = vmul.f32 %v1086, %v1676
      %v1692 = vmul.f32 %v1087, %v1676
      %v1693 = vmul.f32 %v1088, %v1676
      %1694 = vst.msk [vmem:[#allocation7] sm:$0xff] %vm738, %v1678
      %1695 = vst.msk [vmem:[#allocation7 + $0x8] sm:$0xff] %vm738, %v1679
      %1696 = vst.msk [vmem:[#allocation7 + $0x10] sm:$0xff] %vm738, %v1680
      %1697 = vst.msk [vmem:[#allocation7 + $0x18] sm:$0xff] %vm738, %v1681
      %1698 = vst.msk [vmem:[#allocation7 + $0x20] sm:$0xff] %vm738, %v1682
      %1699 = vst.msk [vmem:[#allocation7 + $0x28] sm:$0xff] %vm738, %v1683
      %1700 = vst.msk [vmem:[#allocation7 + $0x30] sm:$0xff] %vm738, %v1684
      %1701 = vst.msk [vmem:[#allocation7 + $0x38] sm:$0xff] %vm738, %v1685
      %1702 = vst.msk [vmem:[#allocation7 + $0x40] sm:$0xff] %vm738, %v1686
      %1703 = vst.msk [vmem:[#allocation7 + $0x48] sm:$0xff] %vm738, %v1687
      %1704 = vst.msk [vmem:[#allocation7 + $0x50] sm:$0xff] %vm738, %v1688
      %1705 = vst.msk [vmem:[#allocation7 + $0x58] sm:$0xff] %vm738, %v1689
      %1706 = vst.msk [vmem:[#allocation7 + $0x60] sm:$0xff] %vm738, %v1690
      %1707 = vst.msk [vmem:[#allocation7 + $0x68] sm:$0xff] %vm738, %v1691
      %1708 = vst.msk [vmem:[#allocation7 + $0x70] sm:$0xff] %vm738, %v1692
      %1709 = vst.msk [vmem:[#allocation7 + $0x78] sm:$0xff] %vm738, %v1693
      %v1710 = vld [vmem:[%s8] sm:$0xff]
      %v1711 = vld [vmem:[%s8 + $0x8] sm:$0xff]
      %v1712 = vld [vmem:[#allocation8] sm:$0xff]
      %v1713 = vld [vmem:[#allocation8 + $0x8] sm:$0xff]
      loop: start=0, step=1, limit=16
      $region69: #{mamba_layers_forward.2} parent=63 // loop_pre_header
        _
      $region70: #{mamba_layers_forward.2} parent=63 // loop_header
        %s1715 = sphi 0, %s1719
        %p1716 = scmp.ge.s32.totalorder %s1715, 16
        %v1720 = vphi %v1712, %v2258
        %v1721 = vphi %v1713, %v2259
      $region71: #{mamba_layers_forward.2} parent=63 // loop_header_branch
        %1718 = sbr.rel (%p1716) target = $region75
      $region72: #{mamba_layers_forward.2} parent=63 // loop_body
        %s1722 = smul.u32 %s1715, 8
        %s1723 = scalar_lea.vmem [#allocation3], %s1722
        %v1724 = vld [vmem:[%s1723] sm:$0xff]
        %s1725 = scalar_lea.vmem [#allocation4], %s1722
        %v1726 = vld [vmem:[%s1725] sm:$0xff]
        %s1727 = scalar_lea.vmem [#allocation5], %s1722
        %v1728 = vld [vmem:[%s1727] sm:$0xff]
        %s1729 = scalar_lea.vmem [#allocation6], %s1722
        %v1730 = vld [vmem:[%s1729] sm:$0xff]
        %v1732 = vcombine.high %v1724, %v1724
        %v1734 = vunpack.c.l.s4 1966171168
        %v1735 = vunpack.c.0.s8 %v1734
        %v1736 = vlaneseq
        %v1737 = vshrl.u32 %v1736, 7
        %v1738 = vsub.s32 %v1735, %v1737
        %v1739 = vrot.slane %v1724, %v1738
        %v1741 = vunpack.c.l.s4 1966171168
        %v1742 = vunpack.c.0.s8 %v1741
        %v1743 = vlaneseq
        %v1744 = vshrl.u32 %v1743, 7
        %v1745 = vsub.s32 %v1742, %v1744
        %v1746 = vrot.slane %v1732, %v1745
        %v1747 = vcombine.high %v1739, %v1739
        %v1748 = vcombine.high %v1746, %v1746
        %v1750 = vunpack.c.l.s4 1966171168
        %v1751 = vunpack.c.0.s8 %v1750
        %v1752 = vlaneseq
        %v1753 = vshrl.u32 %v1752, 7
        %v1754 = vsub.s32 %v1751, %v1753
        %v1755 = vrot.slane %v1739, %v1754
        %v1757 = vunpack.c.l.s4 1966171168
        %v1758 = vunpack.c.0.s8 %v1757
        %v1759 = vlaneseq
        %v1760 = vshrl.u32 %v1759, 7
        %v1761 = vsub.s32 %v1758, %v1760
        %v1762 = vrot.slane %v1746, %v1761
        %v1764 = vunpack.c.l.s4 1966171168
        %v1765 = vunpack.c.0.s8 %v1764
        %v1766 = vlaneseq
        %v1767 = vshrl.u32 %v1766, 7
        %v1768 = vsub.s32 %v1765, %v1767
        %v1769 = vrot.slane %v1747, %v1768
        %v1771 = vunpack.c.l.s4 1966171168
        %v1772 = vunpack.c.0.s8 %v1771
        %v1773 = vlaneseq
        %v1774 = vshrl.u32 %v1773, 7
        %v1775 = vsub.s32 %v1772, %v1774
        %v1776 = vrot.slane %v1748, %v1775
        %v1777 = vcombine.high %v1755, %v1755
        %v1778 = vcombine.high %v1762, %v1762
        %v1779 = vcombine.high %v1769, %v1769
        %v1780 = vcombine.high %v1776, %v1776
        %v1781 = vlaneseq
        %v1782 = vshrl.u32 %v1781, 7
        %v1783 = vsub.s32 0, %v1782
        %v1784 = vrot.slane %v1755, %v1783
        %v1785 = vlaneseq
        %v1786 = vshrl.u32 %v1785, 7
        %v1787 = vsub.s32 0, %v1786
        %v1788 = vrot.slane %v1769, %v1787
        %v1789 = vlaneseq
        %v1790 = vshrl.u32 %v1789, 7
        %v1791 = vsub.s32 0, %v1790
        %v1792 = vrot.slane %v1777, %v1791
        %v1793 = vlaneseq
        %v1794 = vshrl.u32 %v1793, 7
        %v1795 = vsub.s32 0, %v1794
        %v1796 = vrot.slane %v1779, %v1795
        %v1797 = vlaneseq
        %v1798 = vshrl.u32 %v1797, 7
        %v1799 = vsub.s32 0, %v1798
        %v1800 = vrot.slane %v1762, %v1799
        %v1801 = vlaneseq
        %v1802 = vshrl.u32 %v1801, 7
        %v1803 = vsub.s32 0, %v1802
        %v1804 = vrot.slane %v1776, %v1803
        %v1805 = vlaneseq
        %v1806 = vshrl.u32 %v1805, 7
        %v1807 = vsub.s32 0, %v1806
        %v1808 = vrot.slane %v1778, %v1807
        %v1809 = vlaneseq
        %v1810 = vshrl.u32 %v1809, 7
        %v1811 = vsub.s32 0, %v1810
        %v1812 = vrot.slane %v1780, %v1811
        %v1821 = vmul.f32 %v1784, %v1710
        %v1822 = vmul.f32 %v1784, %v1711
        %v1823 = vmul.f32 %v1788, %v1710
        %v1824 = vmul.f32 %v1788, %v1711
        %v1825 = vmul.f32 %v1792, %v1710
        %v1826 = vmul.f32 %v1792, %v1711
        %v1827 = vmul.f32 %v1796, %v1710
        %v1828 = vmul.f32 %v1796, %v1711
        %v1829 = vmul.f32 %v1800, %v1710
        %v1830 = vmul.f32 %v1800, %v1711
        %v1831 = vmul.f32 %v1804, %v1710
        %v1832 = vmul.f32 %v1804, %v1711
        %v1833 = vmul.f32 %v1808, %v1710
        %v1834 = vmul.f32 %v1808, %v1711
        %v1835 = vmul.f32 %v1812, %v1710
        %v1836 = vmul.f32 %v1812, %v1711
        %v1837 = vmul.f32 %v1821, 1.442695
        %v1838 = vpow.pop %v1837
        %v1839 = vmul.f32 %v1822, 1.442695
        %v1840 = vpow.pop %v1839
        %v1841 = vmul.f32 %v1823, 1.442695
        %v1842 = vpow.pop %v1841
        %v1843 = vmul.f32 %v1824, 1.442695
        %v1844 = vpow.pop %v1843
        %v1845 = vmul.f32 %v1825, 1.442695
        %v1846 = vpow.pop %v1845
        %v1847 = vmul.f32 %v1826, 1.442695
        %v1848 = vpow.pop %v1847
        %v1849 = vmul.f32 %v1827, 1.442695
        %v1850 = vpow.pop %v1849
        %v1851 = vmul.f32 %v1828, 1.442695
        %v1852 = vpow.pop %v1851
        %v1853 = vmul.f32 %v1829, 1.442695
        %v1854 = vpow.pop %v1853
        %v1855 = vmul.f32 %v1830, 1.442695
        %v1856 = vpow.pop %v1855
        %v1857 = vmul.f32 %v1831, 1.442695
        %v1858 = vpow.pop %v1857
        %v1859 = vmul.f32 %v1832, 1.442695
        %v1860 = vpow.pop %v1859
        %v1861 = vmul.f32 %v1833, 1.442695
        %v1862 = vpow.pop %v1861
        %v1863 = vmul.f32 %v1834, 1.442695
        %v1864 = vpow.pop %v1863
        %v1865 = vmul.f32 %v1835, 1.442695
        %v1866 = vpow.pop %v1865
        %v1867 = vmul.f32 %v1836, 1.442695
        %v1868 = vpow.pop %v1867
        %v1870 = vcombine.high %v1726, %v1726
        %v1872 = vunpack.c.l.s4 1966171168
        %v1873 = vunpack.c.0.s8 %v1872
        %v1874 = vlaneseq
        %v1875 = vshrl.u32 %v1874, 7
        %v1876 = vsub.s32 %v1873, %v1875
        %v1877 = vrot.slane %v1726, %v1876
        %v1879 = vunpack.c.l.s4 1966171168
        %v1880 = vunpack.c.0.s8 %v1879
        %v1881 = vlaneseq
        %v1882 = vshrl.u32 %v1881, 7
        %v1883 = vsub.s32 %v1880, %v1882
        %v1884 = vrot.slane %v1870, %v1883
        %v1885 = vcombine.high %v1877, %v1877
        %v1886 = vcombine.high %v1884, %v1884
        %v1888 = vunpack.c.l.s4 1966171168
        %v1889 = vunpack.c.0.s8 %v1888
        %v1890 = vlaneseq
        %v1891 = vshrl.u32 %v1890, 7
        %v1892 = vsub.s32 %v1889, %v1891
        %v1893 = vrot.slane %v1877, %v1892
        %v1895 = vunpack.c.l.s4 1966171168
        %v1896 = vunpack.c.0.s8 %v1895
        %v1897 = vlaneseq
        %v1898 = vshrl.u32 %v1897, 7
        %v1899 = vsub.s32 %v1896, %v1898
        %v1900 = vrot.slane %v1884, %v1899
        %v1902 = vunpack.c.l.s4 1966171168
        %v1903 = vunpack.c.0.s8 %v1902
        %v1904 = vlaneseq
        %v1905 = vshrl.u32 %v1904, 7
        %v1906 = vsub.s32 %v1903, %v1905
        %v1907 = vrot.slane %v1885, %v1906
        %v1909 = vunpack.c.l.s4 1966171168
        %v1910 = vunpack.c.0.s8 %v1909
        %v1911 = vlaneseq
        %v1912 = vshrl.u32 %v1911, 7
        %v1913 = vsub.s32 %v1910, %v1912
        %v1914 = vrot.slane %v1886, %v1913
        %v1915 = vcombine.high %v1893, %v1893
        %v1916 = vcombine.high %v1900, %v1900
        %v1917 = vcombine.high %v1907, %v1907
        %v1918 = vcombine.high %v1914, %v1914
        %v1919 = vlaneseq
        %v1920 = vshrl.u32 %v1919, 7
        %v1921 = vsub.s32 0, %v1920
        %v1922 = vrot.slane %v1728, %v1921
        %1924 = vbcast.lane.b32.xlu0 %v1922, 256
        %v1925 = vpop.permute.xlu0 %1924
        %s1927 = sor.u32 256, 8
        %1928 = vbcast.lane.b32.xlu0 %v1922, %s1927
        %v1929 = vpop.permute.xlu0 %1928
        %v1930 = vlaneseq
        %v1931 = vshrl.u32 %v1930, 7
        %v1932 = vsub.s32 1, %v1931
        %v1933 = vrot.slane %v1728, %v1932
        %1935 = vbcast.lane.b32.xlu0 %v1933, 256
        %v1936 = vpop.permute.xlu0 %1935
        %s1938 = sor.u32 256, 8
        %1939 = vbcast.lane.b32.xlu0 %v1933, %s1938
        %v1940 = vpop.permute.xlu0 %1939
        %v1941 = vlaneseq
        %v1942 = vshrl.u32 %v1941, 7
        %v1943 = vsub.s32 2, %v1942
        %v1944 = vrot.slane %v1728, %v1943
        %1946 = vbcast.lane.b32.xlu0 %v1944, 256
        %v1947 = vpop.permute.xlu0 %1946
        %s1949 = sor.u32 256, 8
        %1950 = vbcast.lane.b32.xlu0 %v1944, %s1949
        %v1951 = vpop.permute.xlu0 %1950
        %v1952 = vlaneseq
        %v1953 = vshrl.u32 %v1952, 7
        %v1954 = vsub.s32 3, %v1953
        %v1955 = vrot.slane %v1728, %v1954
        %1957 = vbcast.lane.b32.xlu0 %v1955, 256
        %v1958 = vpop.permute.xlu0 %1957
        %s1960 = sor.u32 256, 8
        %1961 = vbcast.lane.b32.xlu0 %v1955, %s1960
        %v1962 = vpop.permute.xlu0 %1961
        %v1963 = vlaneseq
        %v1964 = vshrl.u32 %v1963, 7
        %v1965 = vsub.s32 4, %v1964
        %v1966 = vrot.slane %v1728, %v1965
        %1968 = vbcast.lane.b32.xlu0 %v1966, 256
        %v1969 = vpop.permute.xlu0 %1968
        %s1971 = sor.u32 256, 8
        %1972 = vbcast.lane.b32.xlu0 %v1966, %s1971
        %v1973 = vpop.permute.xlu0 %1972
        %v1974 = vlaneseq
        %v1975 = vshrl.u32 %v1974, 7
        %v1976 = vsub.s32 5, %v1975
        %v1977 = vrot.slane %v1728, %v1976
        %1979 = vbcast.lane.b32.xlu0 %v1977, 256
        %v1980 = vpop.permute.xlu0 %1979
        %s1982 = sor.u32 256, 8
        %1983 = vbcast.lane.b32.xlu0 %v1977, %s1982
        %v1984 = vpop.permute.xlu0 %1983
        %v1985 = vlaneseq
        %v1986 = vshrl.u32 %v1985, 7
        %v1987 = vsub.s32 6, %v1986
        %v1988 = vrot.slane %v1728, %v1987
        %1990 = vbcast.lane.b32.xlu0 %v1988, 256
        %v1991 = vpop.permute.xlu0 %1990
        %s1993 = sor.u32 256, 8
        %1994 = vbcast.lane.b32.xlu0 %v1988, %s1993
        %v1995 = vpop.permute.xlu0 %1994
        %v1996 = vlaneseq
        %v1997 = vshrl.u32 %v1996, 7
        %v1998 = vsub.s32 7, %v1997
        %v1999 = vrot.slane %v1728, %v1998
        %2001 = vbcast.lane.b32.xlu0 %v1999, 256
        %v2002 = vpop.permute.xlu0 %2001
        %s2004 = sor.u32 256, 8
        %2005 = vbcast.lane.b32.xlu0 %v1999, %s2004
        %v2006 = vpop.permute.xlu0 %2005
        %v2007 = vlaneseq
        %v2008 = vshrl.u32 %v2007, 7
        %v2009 = vsub.s32 0, %v2008
        %v2010 = vrot.slane %v1893, %v2009
        %v2011 = vlaneseq
        %v2012 = vshrl.u32 %v2011, 7
        %v2013 = vsub.s32 0, %v2012
        %v2014 = vrot.slane %v1907, %v2013
        %v2015 = vlaneseq
        %v2016 = vshrl.u32 %v2015, 7
        %v2017 = vsub.s32 0, %v2016
        %v2018 = vrot.slane %v1915, %v2017
        %v2019 = vlaneseq
        %v2020 = vshrl.u32 %v2019, 7
        %v2021 = vsub.s32 0, %v2020
        %v2022 = vrot.slane %v1917, %v2021
        %v2023 = vlaneseq
        %v2024 = vshrl.u32 %v2023, 7
        %v2025 = vsub.s32 0, %v2024
        %v2026 = vrot.slane %v1900, %v2025
        %v2027 = vlaneseq
        %v2028 = vshrl.u32 %v2027, 7
        %v2029 = vsub.s32 0, %v2028
        %v2030 = vrot.slane %v1914, %v2029
        %v2031 = vlaneseq
        %v2032 = vshrl.u32 %v2031, 7
        %v2033 = vsub.s32 0, %v2032
        %v2034 = vrot.slane %v1916, %v2033
        %v2035 = vlaneseq
        %v2036 = vshrl.u32 %v2035, 7
        %v2037 = vsub.s32 0, %v2036
        %v2038 = vrot.slane %v1918, %v2037
        %v2047 = vmul.f32 %v2010, %v1925
        %v2048 = vmul.f32 %v2010, %v1929
        %v2049 = vmul.f32 %v2014, %v1936
        %v2050 = vmul.f32 %v2014, %v1940
        %v2051 = vmul.f32 %v2018, %v1947
        %v2052 = vmul.f32 %v2018, %v1951
        %v2053 = vmul.f32 %v2022, %v1958
        %v2054 = vmul.f32 %v2022, %v1962
        %v2055 = vmul.f32 %v2026, %v1969
        %v2056 = vmul.f32 %v2026, %v1973
        %v2057 = vmul.f32 %v2030, %v1980
        %v2058 = vmul.f32 %v2030, %v1984
        %v2059 = vmul.f32 %v2034, %v1991
        %v2060 = vmul.f32 %v2034, %v1995
        %v2061 = vmul.f32 %v2038, %v2002
        %v2062 = vmul.f32 %v2038, %v2006
        %v2063 = vlaneseq
        %v2064 = vshrl.u32 %v2063, 7
        %v2065 = vsub.s32 0, %v2064
        %v2066 = vrot.slane %v1730, %v2065
        %2068 = vbcast.lane.b32.xlu0 %v2066, 256
        %v2069 = vpop.permute.xlu0 %2068
        %s2071 = sor.u32 256, 8
        %2072 = vbcast.lane.b32.xlu0 %v2066, %s2071
        %v2073 = vpop.permute.xlu0 %2072
        %v2074 = vlaneseq
        %v2075 = vshrl.u32 %v2074, 7
        %v2076 = vsub.s32 1, %v2075
        %v2077 = vrot.slane %v1730, %v2076
        %2079 = vbcast.lane.b32.xlu0 %v2077, 256
        %v2080 = vpop.permute.xlu0 %2079
        %s2082 = sor.u32 256, 8
        %2083 = vbcast.lane.b32.xlu0 %v2077, %s2082
        %v2084 = vpop.permute.xlu0 %2083
        %v2085 = vlaneseq
        %v2086 = vshrl.u32 %v2085, 7
        %v2087 = vsub.s32 2, %v2086
        %v2088 = vrot.slane %v1730, %v2087
        %2090 = vbcast.lane.b32.xlu0 %v2088, 256
        %v2091 = vpop.permute.xlu0 %2090
        %s2093 = sor.u32 256, 8
        %2094 = vbcast.lane.b32.xlu0 %v2088, %s2093
        %v2095 = vpop.permute.xlu0 %2094
        %v2096 = vlaneseq
        %v2097 = vshrl.u32 %v2096, 7
        %v2098 = vsub.s32 3, %v2097
        %v2099 = vrot.slane %v1730, %v2098
        %2101 = vbcast.lane.b32.xlu0 %v2099, 256
        %v2102 = vpop.permute.xlu0 %2101
        %s2104 = sor.u32 256, 8
        %2105 = vbcast.lane.b32.xlu0 %v2099, %s2104
        %v2106 = vpop.permute.xlu0 %2105
        %v2107 = vlaneseq
        %v2108 = vshrl.u32 %v2107, 7
        %v2109 = vsub.s32 4, %v2108
        %v2110 = vrot.slane %v1730, %v2109
        %2112 = vbcast.lane.b32.xlu0 %v2110, 256
        %v2113 = vpop.permute.xlu0 %2112
        %s2115 = sor.u32 256, 8
        %2116 = vbcast.lane.b32.xlu0 %v2110, %s2115
        %v2117 = vpop.permute.xlu0 %2116
        %v2118 = vlaneseq
        %v2119 = vshrl.u32 %v2118, 7
        %v2120 = vsub.s32 5, %v2119
        %v2121 = vrot.slane %v1730, %v2120
        %2123 = vbcast.lane.b32.xlu0 %v2121, 256
        %v2124 = vpop.permute.xlu0 %2123
        %s2126 = sor.u32 256, 8
        %2127 = vbcast.lane.b32.xlu0 %v2121, %s2126
        %v2128 = vpop.permute.xlu0 %2127
        %v2129 = vlaneseq
        %v2130 = vshrl.u32 %v2129, 7
        %v2131 = vsub.s32 6, %v2130
        %v2132 = vrot.slane %v1730, %v2131
        %2134 = vbcast.lane.b32.xlu0 %v2132, 256
        %v2135 = vpop.permute.xlu0 %2134
        %s2137 = sor.u32 256, 8
        %2138 = vbcast.lane.b32.xlu0 %v2132, %s2137
        %v2139 = vpop.permute.xlu0 %2138
        %v2140 = vlaneseq
        %v2141 = vshrl.u32 %v2140, 7
        %v2142 = vsub.s32 7, %v2141
        %v2143 = vrot.slane %v1730, %v2142
        %2145 = vbcast.lane.b32.xlu0 %v2143, 256
        %v2146 = vpop.permute.xlu0 %2145
        %s2148 = sor.u32 256, 8
        %2149 = vbcast.lane.b32.xlu0 %v2143, %s2148
        %v2150 = vpop.permute.xlu0 %2149
        %v2151 = vmul.f32 %v1838, %v1720
        %v2152 = vmul.f32 %v1840, %v1721
        %v2153 = vadd.f32 %v2151, %v2047
        %v2154 = vadd.f32 %v2152, %v2048
        %v2155 = vmul.f32 %v2153, %v2069
        %v2156 = vmul.f32 %v2154, %v2073
        %v2157 = vsel %vm738, %v2155, 0.0
        %v2158 = vsel %vm738, %v2156, 0.0
        %v2159 = vadd.f32 %v2157, %v2158
        %v2160 = vrot.slane %v2159, 4
        %v2161 = vadd.f32 %v2159, %v2160
        %v2162 = vrot.slane %v2161, 2
        %v2163 = vadd.f32 %v2161, %v2162
        %v2164 = vrot.slane %v2163, 1
        %v2165 = vadd.f32 %v2163, %v2164
        %v2166 = vmul.f32 %v1842, %v2153
        %v2167 = vmul.f32 %v1844, %v2154
        %v2168 = vadd.f32 %v2166, %v2049
        %v2169 = vadd.f32 %v2167, %v2050
        %v2170 = vmul.f32 %v2168, %v2080
        %v2171 = vmul.f32 %v2169, %v2084
        %v2172 = vsel %vm738, %v2170, 0.0
        %v2173 = vsel %vm738, %v2171, 0.0
        %v2174 = vadd.f32 %v2172, %v2173
        %v2175 = vrot.slane %v2174, 4
        %v2176 = vadd.f32 %v2174, %v2175
        %v2177 = vrot.slane %v2176, 2
        %v2178 = vadd.f32 %v2176, %v2177
        %v2179 = vrot.slane %v2178, 1
        %v2180 = vadd.f32 %v2178, %v2179
        %v2181 = vmul.f32 %v1846, %v2168
        %v2182 = vmul.f32 %v1848, %v2169
        %v2183 = vadd.f32 %v2181, %v2051
        %v2184 = vadd.f32 %v2182, %v2052
        %v2185 = vmul.f32 %v2183, %v2091
        %v2186 = vmul.f32 %v2184, %v2095
        %v2187 = vsel %vm738, %v2185, 0.0
        %v2188 = vsel %vm738, %v2186, 0.0
        %v2189 = vadd.f32 %v2187, %v2188
        %v2190 = vrot.slane %v2189, 4
        %v2191 = vadd.f32 %v2189, %v2190
        %v2192 = vrot.slane %v2191, 2
        %v2193 = vadd.f32 %v2191, %v2192
        %v2194 = vrot.slane %v2193, 1
        %v2195 = vadd.f32 %v2193, %v2194
        %v2196 = vmul.f32 %v1850, %v2183
        %v2197 = vmul.f32 %v1852, %v2184
        %v2198 = vadd.f32 %v2196, %v2053
        %v2199 = vadd.f32 %v2197, %v2054
        %v2200 = vmul.f32 %v2198, %v2102
        %v2201 = vmul.f32 %v2199, %v2106
        %v2202 = vsel %vm738, %v2200, 0.0
        %v2203 = vsel %vm738, %v2201, 0.0
        %v2204 = vadd.f32 %v2202, %v2203
        %v2205 = vrot.slane %v2204, 4
        %v2206 = vadd.f32 %v2204, %v2205
        %v2207 = vrot.slane %v2206, 2
        %v2208 = vadd.f32 %v2206, %v2207
        %v2209 = vrot.slane %v2208, 1
        %v2210 = vadd.f32 %v2208, %v2209
        %v2211 = vmul.f32 %v1854, %v2198
        %v2212 = vmul.f32 %v1856, %v2199
        %v2213 = vadd.f32 %v2211, %v2055
        %v2214 = vadd.f32 %v2212, %v2056
        %v2215 = vmul.f32 %v2213, %v2113
        %v2216 = vmul.f32 %v2214, %v2117
        %v2217 = vsel %vm738, %v2215, 0.0
        %v2218 = vsel %vm738, %v2216, 0.0
        %v2219 = vadd.f32 %v2217, %v2218
        %v2220 = vrot.slane %v2219, 4
        %v2221 = vadd.f32 %v2219, %v2220
        %v2222 = vrot.slane %v2221, 2
        %v2223 = vadd.f32 %v2221, %v2222
        %v2224 = vrot.slane %v2223, 1
        %v2225 = vadd.f32 %v2223, %v2224
        %v2226 = vmul.f32 %v1858, %v2213
        %v2227 = vmul.f32 %v1860, %v2214
        %v2228 = vadd.f32 %v2226, %v2057
        %v2229 = vadd.f32 %v2227, %v2058
        %v2230 = vmul.f32 %v2228, %v2124
        %v2231 = vmul.f32 %v2229, %v2128
        %v2232 = vsel %vm738, %v2230, 0.0
        %v2233 = vsel %vm738, %v2231, 0.0
        %v2234 = vadd.f32 %v2232, %v2233
        %v2235 = vrot.slane %v2234, 4
        %v2236 = vadd.f32 %v2234, %v2235
        %v2237 = vrot.slane %v2236, 2
        %v2238 = vadd.f32 %v2236, %v2237
        %v2239 = vrot.slane %v2238, 1
        %v2240 = vadd.f32 %v2238, %v2239
        %v2241 = vmul.f32 %v1862, %v2228
        %v2242 = vmul.f32 %v1864, %v2229
        %v2243 = vadd.f32 %v2241, %v2059
        %v2244 = vadd.f32 %v2242, %v2060
        %v2245 = vmul.f32 %v2243, %v2135
        %v2246 = vmul.f32 %v2244, %v2139
        %v2247 = vsel %vm738, %v2245, 0.0
        %v2248 = vsel %vm738, %v2246, 0.0
        %v2249 = vadd.f32 %v2247, %v2248
        %v2250 = vrot.slane %v2249, 4
        %v2251 = vadd.f32 %v2249, %v2250
        %v2252 = vrot.slane %v2251, 2
        %v2253 = vadd.f32 %v2251, %v2252
        %v2254 = vrot.slane %v2253, 1
        %v2255 = vadd.f32 %v2253, %v2254
        %v2256 = vmul.f32 %v1866, %v2243
        %v2257 = vmul.f32 %v1868, %v2244
        %v2258 = vadd.f32 %v2256, %v2061
        %v2259 = vadd.f32 %v2257, %v2062
        %v2260 = vmul.f32 %v2258, %v2146
        %v2261 = vmul.f32 %v2259, %v2150
        %v2262 = vsel %vm738, %v2260, 0.0
        %v2263 = vsel %vm738, %v2261, 0.0
        %v2264 = vadd.f32 %v2262, %v2263
        %v2265 = vrot.slane %v2264, 4
        %v2266 = vadd.f32 %v2264, %v2265
        %v2267 = vrot.slane %v2266, 2
        %v2268 = vadd.f32 %v2266, %v2267
        %v2269 = vrot.slane %v2268, 1
        %v2270 = vadd.f32 %v2268, %v2269
        %vm2271 = vcmask 1040384
        %v2272 = vsel %vm2271, %v2165, %v2180
        %vm2273 = vcmask 1041408
        %v2274 = vsel %vm2273, %v2272, %v2195
        %vm2275 = vcmask 1042432
        %v2276 = vsel %vm2275, %v2274, %v2210
        %v2277 = vsel %vm637, %v2276, %v2225
        %vm2278 = vcmask 1044480
        %v2279 = vsel %vm2278, %v2277, %v2240
        %vm2280 = vcmask 1045504
        %v2281 = vsel %vm2280, %v2279, %v2255
        %vm2282 = vcmask 1046528
        %v2283 = vsel %vm2282, %v2281, %v2270
        %s2284 = scalar_lea.vmem [#allocation7], %s1722
        %v2285 = vld [vmem:[%s2284] sm:$0xff]
        %v2286 = vadd.f32 %v2285, %v2283
        %2287 = vst.msk [vmem:[%s2284] sm:$0xff] %vm738, %v2286
      $region73: #{mamba_layers_forward.2} parent=63 // loop_footer
        %s1719 = sadd.s32 1, %s1715
      $region74: #{mamba_layers_forward.2} parent=63 // loop_footer_branch
        %1714 = sbr.rel target = $region70
      $region75: #{mamba_layers_forward.2} parent=63 // loop_exit
        _
      %2288 = vst.msk [vmem:[#allocation8] sm:$0xff] %vm738, %v1720
      %2289 = vst.msk [vmem:[#allocation8 + $0x8] sm:$0xff] %vm738, %v1721
      %v2290 = vld [vmem:[#allocation7] sm:$0xff]
      %v2291 = vld [vmem:[#allocation7 + $0x8] sm:$0xff]
      %v2292 = vld [vmem:[#allocation7 + $0x10] sm:$0xff]
      %v2293 = vld [vmem:[#allocation7 + $0x18] sm:$0xff]
      %v2294 = vld [vmem:[#allocation7 + $0x20] sm:$0xff]
      %v2295 = vld [vmem:[#allocation7 + $0x28] sm:$0xff]
      %v2296 = vld [vmem:[#allocation7 + $0x30] sm:$0xff]
      %v2297 = vld [vmem:[#allocation7 + $0x38] sm:$0xff]
      %v2298 = vld [vmem:[#allocation7 + $0x40] sm:$0xff]
      %v2299 = vld [vmem:[#allocation7 + $0x48] sm:$0xff]
      %v2300 = vld [vmem:[#allocation7 + $0x50] sm:$0xff]
      %v2301 = vld [vmem:[#allocation7 + $0x58] sm:$0xff]
      %v2302 = vld [vmem:[#allocation7 + $0x60] sm:$0xff]
      %v2303 = vld [vmem:[#allocation7 + $0x68] sm:$0xff]
      %v2304 = vld [vmem:[#allocation7 + $0x70] sm:$0xff]
      %v2305 = vld [vmem:[#allocation7 + $0x78] sm:$0xff]
      %v2306 = vsub.f32 0.0, %v676
      %v2307 = vsub.f32 0.0, %v679
      %v2308 = vsub.f32 0.0, %v684
      %v2309 = vsub.f32 0.0, %v687
      %v2310 = vsub.f32 0.0, %v692
      %v2311 = vsub.f32 0.0, %v695
      %v2312 = vsub.f32 0.0, %v700
      %v2313 = vsub.f32 0.0, %v703
      %v2314 = vsub.f32 0.0, %v708
      %v2315 = vsub.f32 0.0, %v711
      %v2316 = vsub.f32 0.0, %v716
      %v2317 = vsub.f32 0.0, %v719
      %v2318 = vsub.f32 0.0, %v724
      %v2319 = vsub.f32 0.0, %v727
      %v2320 = vsub.f32 0.0, %v732
      %v2321 = vsub.f32 0.0, %v735
      %v2322 = vmin.f32 %v2306, 60.0
      %v2323 = vmin.f32 %v2307, 60.0
      %v2324 = vmin.f32 %v2308, 60.0
      %v2325 = vmin.f32 %v2309, 60.0
      %v2326 = vmin.f32 %v2310, 60.0
      %v2327 = vmin.f32 %v2311, 60.0
      %v2328 = vmin.f32 %v2312, 60.0
      %v2329 = vmin.f32 %v2313, 60.0
      %v2330 = vmin.f32 %v2314, 60.0
      %v2331 = vmin.f32 %v2315, 60.0
      %v2332 = vmin.f32 %v2316, 60.0
      %v2333 = vmin.f32 %v2317, 60.0
      %v2334 = vmin.f32 %v2318, 60.0
      %v2335 = vmin.f32 %v2319, 60.0
      %v2336 = vmin.f32 %v2320, 60.0
      %v2337 = vmin.f32 %v2321, 60.0
      %v2338 = vmul.f32 %v2322, 1.442695
      %v2339 = vpow.pop %v2338
      %v2340 = vmul.f32 %v2323, 1.442695
      %v2341 = vpow.pop %v2340
      %v2342 = vmul.f32 %v2324, 1.442695
      %v2343 = vpow.pop %v2342
      %v2344 = vmul.f32 %v2325, 1.442695
      %v2345 = vpow.pop %v2344
      %v2346 = vmul.f32 %v2326, 1.442695
      %v2347 = vpow.pop %v2346
      %v2348 = vmul.f32 %v2327, 1.442695
      %v2349 = vpow.pop %v2348
      %v2350 = vmul.f32 %v2328, 1.442695
      %v2351 = vpow.pop %v2350
      %v2352 = vmul.f32 %v2329, 1.442695
      %v2353 = vpow.pop %v2352
      %v2354 = vmul.f32 %v2330, 1.442695
      %v2355 = vpow.pop %v2354
      %v2356 = vmul.f32 %v2331, 1.442695
      %v2357 = vpow.pop %v2356
      %v2358 = vmul.f32 %v2332, 1.442695
      %v2359 = vpow.pop %v2358
      %v2360 = vmul.f32 %v2333, 1.442695
      %v2361 = vpow.pop %v2360
      %v2362 = vmul.f32 %v2334, 1.442695
      %v2363 = vpow.pop %v2362
      %v2364 = vmul.f32 %v2335, 1.442695
      %v2365 = vpow.pop %v2364
      %v2366 = vmul.f32 %v2336, 1.442695
      %v2367 = vpow.pop %v2366
      %v2368 = vmul.f32 %v2337, 1.442695
      %v2369 = vpow.pop %v2368
      %v2370 = vadd.f32 %v2339, 1.0
      %v2371 = vadd.f32 %v2341, 1.0
      %v2372 = vadd.f32 %v2343, 1.0
      %v2373 = vadd.f32 %v2345, 1.0
      %v2374 = vadd.f32 %v2347, 1.0
      %v2375 = vadd.f32 %v2349, 1.0
      %v2376 = vadd.f32 %v2351, 1.0
      %v2377 = vadd.f32 %v2353, 1.0
      %v2378 = vadd.f32 %v2355, 1.0
      %v2379 = vadd.f32 %v2357, 1.0
      %v2380 = vadd.f32 %v2359, 1.0
      %v2381 = vadd.f32 %v2361, 1.0
      %v2382 = vadd.f32 %v2363, 1.0
      %v2383 = vadd.f32 %v2365, 1.0
      %v2384 = vadd.f32 %v2367, 1.0
      %v2385 = vadd.f32 %v2369, 1.0
      %v2386 = vrcp.pop %v2370
      %v2387 = vrcp.pop %v2371
      %v2388 = vrcp.pop %v2372
      %v2389 = vrcp.pop %v2373
      %v2390 = vrcp.pop %v2374
      %v2391 = vrcp.pop %v2375
      %v2392 = vrcp.pop %v2376
      %v2393 = vrcp.pop %v2377
      %v2394 = vrcp.pop %v2378
      %v2395 = vrcp.pop %v2379
      %v2396 = vrcp.pop %v2380
      %v2397 = vrcp.pop %v2381
      %v2398 = vrcp.pop %v2382
      %v2399 = vrcp.pop %v2383
      %v2400 = vrcp.pop %v2384
      %v2401 = vrcp.pop %v2385
      %v2402 = vmul.f32 %v676, %v2386
      %v2403 = vmul.f32 %v679, %v2387
      %v2404 = vmul.f32 %v684, %v2388
      %v2405 = vmul.f32 %v687, %v2389
      %v2406 = vmul.f32 %v692, %v2390
      %v2407 = vmul.f32 %v695, %v2391
      %v2408 = vmul.f32 %v700, %v2392
      %v2409 = vmul.f32 %v703, %v2393
      %v2410 = vmul.f32 %v708, %v2394
      %v2411 = vmul.f32 %v711, %v2395
      %v2412 = vmul.f32 %v716, %v2396
      %v2413 = vmul.f32 %v719, %v2397
      %v2414 = vmul.f32 %v724, %v2398
      %v2415 = vmul.f32 %v727, %v2399
      %v2416 = vmul.f32 %v732, %v2400
      %v2417 = vmul.f32 %v735, %v2401
      %2434 = vrot.lane.b32.xlu0 %v2402, 112
      %v2435 = vpop.permute.xlu0 %2434
      %2436 = vrot.lane.b32.xlu0 %v2403, 112
      %v2437 = vpop.permute.xlu0 %2436
      %2438 = vrot.lane.b32.xlu0 %v2404, 112
      %v2439 = vpop.permute.xlu0 %2438
      %2440 = vrot.lane.b32.xlu0 %v2405, 112
      %v2441 = vpop.permute.xlu0 %2440
      %2442 = vrot.lane.b32.xlu0 %v2406, 112
      %v2443 = vpop.permute.xlu0 %2442
      %2444 = vrot.lane.b32.xlu0 %v2407, 112
      %v2445 = vpop.permute.xlu0 %2444
      %2446 = vrot.lane.b32.xlu0 %v2408, 112
      %v2447 = vpop.permute.xlu0 %2446
      %2448 = vrot.lane.b32.xlu0 %v2409, 112
      %v2449 = vpop.permute.xlu0 %2448
      %2450 = vrot.lane.b32.xlu0 %v2410, 112
      %v2451 = vpop.permute.xlu0 %2450
      %2452 = vrot.lane.b32.xlu0 %v2411, 112
      %v2453 = vpop.permute.xlu0 %2452
      %2454 = vrot.lane.b32.xlu0 %v2412, 112
      %v2455 = vpop.permute.xlu0 %2454
      %2456 = vrot.lane.b32.xlu0 %v2413, 112
      %v2457 = vpop.permute.xlu0 %2456
      %2458 = vrot.lane.b32.xlu0 %v2414, 112
      %v2459 = vpop.permute.xlu0 %2458
      %2460 = vrot.lane.b32.xlu0 %v2415, 112
      %v2461 = vpop.permute.xlu0 %2460
      %2462 = vrot.lane.b32.xlu0 %v2416, 112
      %v2463 = vpop.permute.xlu0 %2462
      %2464 = vrot.lane.b32.xlu0 %v2417, 112
      %v2465 = vpop.permute.xlu0 %2464
      %v2482 = vmul.f32 %v2290, %v2435
      %v2483 = vmul.f32 %v2291, %v2437
      %v2484 = vmul.f32 %v2292, %v2439
      %v2485 = vmul.f32 %v2293, %v2441
      %v2486 = vmul.f32 %v2294, %v2443
      %v2487 = vmul.f32 %v2295, %v2445
      %v2488 = vmul.f32 %v2296, %v2447
      %v2489 = vmul.f32 %v2297, %v2449
      %v2490 = vmul.f32 %v2298, %v2451
      %v2491 = vmul.f32 %v2299, %v2453
      %v2492 = vmul.f32 %v2300, %v2455
      %v2493 = vmul.f32 %v2301, %v2457
      %v2494 = vmul.f32 %v2302, %v2459
      %v2495 = vmul.f32 %v2303, %v2461
      %v2496 = vmul.f32 %v2304, %v2463
      %v2497 = vmul.f32 %v2305, %v2465
      %v2498 = vpack.c.bf16 %v2483, %v2482
      %v2499 = vpack.c.bf16 %v2485, %v2484
      %v2500 = vpack.c.bf16 %v2487, %v2486
      %v2501 = vpack.c.bf16 %v2489, %v2488
      %v2502 = vpack.c.bf16 %v2491, %v2490
      %v2503 = vpack.c.bf16 %v2493, %v2492
      %v2504 = vpack.c.bf16 %v2495, %v2494
      %v2505 = vpack.c.bf16 %v2497, %v2496
      %v2506 = vld [vmem:[%s10] sm:$0xf]
      %v2507 = vld [vmem:[%s10 + $0x4] sm:$0xf]
      %v2510 = vunpack.c.l.b16 %v2506
      %v2511 = vunpack.c.l.b16 %v2507
      %v2512 = vpack.c.b16 %v2511, %v2510
      %v2515 = vsel %vm738, %v2498, 0
      %v2518 = vsel %vm738, %v2499, 0
      %v2521 = vsel %vm738, %v2500, 0
      %v2524 = vsel %vm738, %v2501, 0
      %v2527 = vsel %vm738, %v2502, 0
      %v2530 = vsel %vm738, %v2503, 0
      %v2533 = vsel %vm738, %v2504, 0
      %v2536 = vsel %vm738, %v2505, 0
      %2538 = vmatprep.subr.bf16.mxu0 0
      %2539 = vmatpush1.bf16.msra.mxu0 0
      %2540 = vmatprep.subr.bf16.mxu0 0
      %2541 = vmatpush1.bf16.msra.mxu0 0
      %2542 = vmatprep.subr.bf16.mxu0 0
      %2543 = vmatpush1.bf16.msra.mxu0 0
      %2544 = vmatprep.subr.bf16.mxu0 0
      %2545 = vmatpush1.bf16.msra.mxu0 0
      %2546 = vmatprep.subr.bf16.mxu0 0
      %2547 = vmatpush1.bf16.msra.mxu0 0
      %2548 = vmatprep.subr.bf16.mxu0 0
      %2549 = vmatpush1.bf16.msra.mxu0 0
      %2550 = vmatprep.subr.bf16.mxu0 0
      %2551 = vmatpush1.bf16.msra.mxu0 0
      %2552 = vmatprep.subr.bf16.mxu0 0
      %2553 = vmatpush1.bf16.msra.mxu0 %v2512
      %2554 = vmatprep.subr.bf16.mxu0 0
      %2555 = vmatpush2.bf16.msra.mxu0 0
      %2556 = vmatprep.subr.bf16.mxu0 0
      %2557 = vmatpush2.bf16.msra.mxu0 0
      %2558 = vmatprep.subr.bf16.mxu0 0
      %2559 = vmatpush2.bf16.msra.mxu0 0
      %2560 = vmatprep.subr.bf16.mxu0 0
      %2561 = vmatpush2.bf16.msra.mxu0 0
      %2562 = vmatprep.subr.bf16.mxu0 0
      %2563 = vmatpush2.bf16.msra.mxu0 0
      %2564 = vmatprep.subr.bf16.mxu0 0
      %2565 = vmatpush2.bf16.msra.mxu0 0
      %2566 = vmatprep.subr.bf16.mxu0 0
      %2567 = vmatpush2.bf16.msra.mxu0 0
      %2568 = vmatprep.subr.bf16.mxu0 0
      %2569 = vmatpush2.bf16.msra.mxu0 0
      %2570 = vmatprep.mubr.bf16.mxu0 0
      %2571 = vmatmul.mubr.bf16.gmra.mxu0 %v2515
      %v2572 = vpop.f32.mrf.mxu0
      %v2573 = vadd.f32 0.0, %v2572
      %v2574 = vpop.f32.mrf.mxu0
      %v2575 = vpop.f32.mrf.mxu0
      %v2576 = vadd.f32 0.0, %v2575
      %v2577 = vpop.f32.mrf.mxu0
      %2578 = vmatprep.mubr.bf16.mxu0 0
      %2579 = vmatmul.mubr.bf16.gmra.mxu0 %v2518
      %v2580 = vpop.f32.mrf.mxu0
      %v2581 = vadd.f32 0.0, %v2580
      %v2582 = vpop.f32.mrf.mxu0
      %v2583 = vpop.f32.mrf.mxu0
      %v2584 = vadd.f32 0.0, %v2583
      %v2585 = vpop.f32.mrf.mxu0
      %2586 = vmatprep.mubr.bf16.mxu0 0
      %2587 = vmatmul.mubr.bf16.gmra.mxu0 %v2521
      %v2588 = vpop.f32.mrf.mxu0
      %v2589 = vadd.f32 0.0, %v2588
      %v2590 = vpop.f32.mrf.mxu0
      %v2591 = vpop.f32.mrf.mxu0
      %v2592 = vadd.f32 0.0, %v2591
      %v2593 = vpop.f32.mrf.mxu0
      %2594 = vmatprep.mubr.bf16.mxu0 0
      %2595 = vmatmul.mubr.bf16.gmra.mxu0 %v2524
      %v2596 = vpop.f32.mrf.mxu0
      %v2597 = vadd.f32 0.0, %v2596
      %v2598 = vpop.f32.mrf.mxu0
      %v2599 = vpop.f32.mrf.mxu0
      %v2600 = vadd.f32 0.0, %v2599
      %v2601 = vpop.f32.mrf.mxu0
      %2602 = vmatprep.mubr.bf16.mxu0 0
      %2603 = vmatmul.mubr.bf16.gmra.mxu0 %v2527
      %v2604 = vpop.f32.mrf.mxu0
      %v2605 = vadd.f32 0.0, %v2604
      %v2606 = vpop.f32.mrf.mxu0
      %v2607 = vpop.f32.mrf.mxu0
      %v2608 = vadd.f32 0.0, %v2607
      %v2609 = vpop.f32.mrf.mxu0
      %2610 = vmatprep.mubr.bf16.mxu0 0
      %2611 = vmatmul.mubr.bf16.gmra.mxu0 %v2530
      %v2612 = vpop.f32.mrf.mxu0
      %v2613 = vadd.f32 0.0, %v2612
      %v2614 = vpop.f32.mrf.mxu0
      %v2615 = vpop.f32.mrf.mxu0
      %v2616 = vadd.f32 0.0, %v2615
      %v2617 = vpop.f32.mrf.mxu0
      %2618 = vmatprep.mubr.bf16.mxu0 0
      %2619 = vmatmul.mubr.bf16.gmra.mxu0 %v2533
      %v2620 = vpop.f32.mrf.mxu0
      %v2621 = vadd.f32 0.0, %v2620
      %v2622 = vpop.f32.mrf.mxu0
      %v2623 = vpop.f32.mrf.mxu0
      %v2624 = vadd.f32 0.0, %v2623
      %v2625 = vpop.f32.mrf.mxu0
      %2626 = vmatprep.mubr.bf16.mxu0 0
      %2627 = vmatmul.mubr.bf16.gmra.mxu0 %v2536
      %v2628 = vpop.f32.mrf.mxu0
      %v2629 = vadd.f32 0.0, %v2628
      %v2630 = vpop.f32.mrf.mxu0
      %v2631 = vpop.f32.mrf.mxu0
      %v2632 = vadd.f32 0.0, %v2631
      %v2633 = vpop.f32.mrf.mxu0
      %2634 = vdwg.mxu0
      %v2635 = vadd.f32 %v435, %v2573
      %v2636 = vadd.f32 %v436, %v2576
      %v2637 = vadd.f32 %v437, %v2581
      %v2638 = vadd.f32 %v438, %v2584
      %v2639 = vadd.f32 %v439, %v2589
      %v2640 = vadd.f32 %v440, %v2592
      %v2641 = vadd.f32 %v441, %v2597
      %v2642 = vadd.f32 %v442, %v2600
      %v2643 = vadd.f32 %v443, %v2605
      %v2644 = vadd.f32 %v444, %v2608
      %v2645 = vadd.f32 %v445, %v2613
      %v2646 = vadd.f32 %v446, %v2616
      %v2647 = vadd.f32 %v447, %v2621
      %v2648 = vadd.f32 %v448, %v2624
      %v2649 = vadd.f32 %v449, %v2629
      %v2650 = vadd.f32 %v450, %v2632
      %2651 = vst.msk [vmem:[%s424] sm:$0xff] %vm467, %v2635
      %2652 = vst.msk [vmem:[%s424 + $0x8] sm:$0xff] %vm467, %v2636
      %2653 = vst.msk [vmem:[%s424 + $0x10] sm:$0xff] %vm467, %v2637
      %2654 = vst.msk [vmem:[%s424 + $0x18] sm:$0xff] %vm467, %v2638
      %2655 = vst.msk [vmem:[%s424 + $0x20] sm:$0xff] %vm467, %v2639
      %2656 = vst.msk [vmem:[%s424 + $0x28] sm:$0xff] %vm467, %v2640
      %2657 = vst.msk [vmem:[%s424 + $0x30] sm:$0xff] %vm467, %v2641
      %2658 = vst.msk [vmem:[%s424 + $0x38] sm:$0xff] %vm467, %v2642
      %2659 = vst.msk [vmem:[%s424 + $0x40] sm:$0xff] %vm467, %v2643
      %2660 = vst.msk [vmem:[%s424 + $0x48] sm:$0xff] %vm467, %v2644
      %2661 = vst.msk [vmem:[%s424 + $0x50] sm:$0xff] %vm467, %v2645
      %2662 = vst.msk [vmem:[%s424 + $0x58] sm:$0xff] %vm467, %v2646
      %2663 = vst.msk [vmem:[%s424 + $0x60] sm:$0xff] %vm467, %v2647
      %2664 = vst.msk [vmem:[%s424 + $0x68] sm:$0xff] %vm467, %v2648
      %2665 = vst.msk [vmem:[%s424 + $0x70] sm:$0xff] %vm467, %v2649
      %2666 = vst.msk [vmem:[%s424 + $0x78] sm:$0xff] %vm467, %v2650
      %s2667 = smul.u32 16, %s27
      %p2668 = scmp.lt.s32.totalorder %s26, 1
      %s2669 = scalar_select %p2668, %s26, 1
      %p2670 = scmp.lt.s32.totalorder %s2667, 31
      %s2671 = scalar_select %p2670, %s2667, 31
      %s2672 = smul.addr %s2669, 32
      %s2673 = sadd.s32 %s2671, %s2672
      %s2674 = smul.addr %s2673, 8
      %s2675 = scalar_lea.vmem %s11, %s2674
      // Predicated region
      $region76: #{mamba_layers_forward.2} parent=63 // pred_check
        %p2676 = pneg %p292
      $region77: #{mamba_layers_forward.2} parent=63 // pred_check_branch
        %2678 = sbr.rel (%p2676) target = $region79
      $region78: #{mamba_layers_forward.2} parent=63 // pred_region
        %s2679 = smul.u32 16, %s27
      $region79: #{mamba_layers_forward.2} parent=63 // pred_fallthru
        _
    $region64: #{mamba_layers_forward.2} parent=5 // pred_fallthru
      _
    %p2680 = scmp.le.s32.totalorder 2, %s17
    // Predicated region
    $region80: #{mamba_layers_forward.2} parent=5 // pred_check
      %p2681 = pneg %p2680
    $region81: #{mamba_layers_forward.2} parent=5 // pred_check_branch
      %2683 = sbr.rel (%p2681) target = $region83
    $region82: #{mamba_layers_forward.2} parent=5 // pred_region
      %s2684 = ssub.s32 %s17, 2
      // Predicated region
      $region84: #{mamba_layers_forward.2} parent=82 // pred_check
        %p2685 = pneg %p298
      $region85: #{mamba_layers_forward.2} parent=82 // pred_check_branch
        %2687 = sbr.rel (%p2685) target = $region87
      $region86: #{mamba_layers_forward.2} parent=82 // pred_region
        %s2688 = smul.u32 16, %s29
        %p2689 = scmp.lt.s32.totalorder %s28, 1
        %s2690 = scalar_select %p2689, %s28, 1
        %p2691 = scmp.lt.s32.totalorder %s2688, 31
        %s2692 = scalar_select %p2691, %s2688, 31
        %s2693 = smul.addr %s2690, 32
        %s2694 = sadd.s32 %s2692, %s2693
        %s2695 = smul.addr %s2694, 8
        %s2696 = scalar_lea.vmem %s11, %s2695
      $region87: #{mamba_layers_forward.2} parent=82 // pred_fallthru
        _
    $region83: #{mamba_layers_forward.2} parent=5 // pred_fallthru
      _
  $region6: #{mamba_layers_forward.2} parent=0 // loop_footer
    %s21 = sadd.s32 1, %s17
  $region7: #{mamba_layers_forward.2} parent=0 // loop_footer_branch
    %16 = sbr.rel target = $region3
  $region8: #{mamba_layers_forward.2} parent=0 // loop_exit
    _

</llo_original>
